<compile_context>
chip_gen: v6e
topology: v6e:2x2x1
jax: 0.10.0
libtpu: 0.0.40
codegen_flags: <defaults>
</compile_context>

<pallas_src>
import functools

import jax
import jax.numpy as jnp
from jax.experimental import pallas as pl
from jax.experimental.pallas import tpu as pltpu


# ----------------------------- Pallas kernel --------------------------------


def _make_kernel(Bb, T, D, F, K, H, num_layers):
    BT = Bb * T
    KD = K * D
    H4 = 4 * H

    def kernel(x_ref, conv_ref, lstm_ref, fc_ref, out_ref):
        # x_ref    : (2, Bb*T, K*D)  slab 0 = even seq positions, 1 = odd,
        #                            rows ordered t-major within the block.
        # conv_ref : (K*D + 1, F)    rows [0:KD] weight, row KD bias.
        # lstm_ref : (F + (2L-1)H + L, 4H) packed weights + summed biases,
        #                            g-gate columns pre-scaled x2.
        # fc_ref   : (H + 1, 1)      rows [0:H] weight, row H bias.
        # out_ref  : (Bb, 1)

        # ---- Conv1d('same') as ONE (2*Bb*T, K*D) @ (K*D, F) matmul + bias ---
        x_all = x_ref[...].reshape(2 * BT, KD)          # leading-dim merge
        conv = jnp.dot(x_all, conv_ref[0:KD, :],
                       preferred_element_type=jnp.float32) + conv_ref[KD:KD + 1, :]
        conv = jnp.maximum(conv, 0.0)                   # ReLU

        # ---- MaxPool1d(2,2): even/odd slabs are aligned contiguous halves --
        pooled = jnp.maximum(conv[:BT, :], conv[BT:, :])   # (T*Bb, F), t-major

        # ---- hoisted parameter loads (read once, reused by all T steps) ----
        w_ih0 = lstm_ref[0:F, :]
        w_hh0 = lstm_ref[F:F + H, :]
        deep = []
        for l in range(1, num_layers):
            base = F + (2 * l - 1) * H
            deep.append((lstm_ref[base:base + H, :],
                         lstm_ref[base + H:base + 2 * H, :]))
        bias_base = F + (2 * num_layers - 1) * H
        b = [lstm_ref[bias_base + l:bias_base + l + 1, :]
             for l in range(num_layers)]
        fc_w = fc_ref[0:H, :]
        fc_b = fc_ref[H:H + 1, :]

        def cell(z, c_prev):
            # ONE full-width sigmoid over (Bb, 4H); g recovered exactly as
            # tanh(zg) == 2*sigmoid(2*zg) - 1 (the x2 lives in the weights).
            s = jax.nn.sigmoid(z)
            i_g = s[:, 0 * H:1 * H]
            f_g = s[:, 1 * H:2 * H]
            g_g = 2.0 * s[:, 2 * H:3 * H] - 1.0
            o_g = s[:, 3 * H:4 * H]
            c_new = f_g * c_prev + i_g * g_g
            h_new = o_g * (2.0 * jax.nn.sigmoid(2.0 * c_new) - 1.0)  # tanh(c)
            return h_new, c_new

        def run_layer(gx, w_hh, keep_seq):
            # gx: (T, Bb, 4H), t-major -> gx[t] is a contiguous vreg read.
            # Serial chain per step: one (Bb,H)@(H,4H) MXU push + gate math.
            h = jnp.zeros((Bb, H), jnp.float32)
            c = jnp.zeros((Bb, H), jnp.float32)
            hs = []
            # Static unroll (T small): scheduler overlaps MXU pop / EUP / VPU
            # across adjacent steps.  Switch to lax.fori_loop(..., unroll=k)
            # only if T grows enough to hurt compile time / vreg pressure.
            for t in range(T):
                z = gx[t] + jnp.dot(h, w_hh, preferred_element_type=jnp.float32)
                h, c = cell(z, c)
                if keep_seq:
                    hs.append(h)
            return h, hs

        # ---- layer 0: input projection hoisted as one batched matmul -------
        gx = (jnp.dot(pooled, w_ih0, preferred_element_type=jnp.float32)
              + b[0]).reshape(T, Bb, H4)
        h_last, hs = run_layer(gx, w_hh0, keep_seq=(num_layers > 1))

        # ---- layers > 0: layer-by-layer with hoisted input projection ------
        for l in range(1, num_layers):
            h_seq = jnp.concatenate(hs, axis=0)          # (T*Bb, H), t-major
            w_ih_l, w_hh_l = deep[l - 1]
            gx = (jnp.dot(h_seq, w_ih_l, preferred_element_type=jnp.float32)
                  + b[l]).reshape(T, Bb, H4)
            h_last, hs = run_layer(gx, w_hh_l, keep_seq=(l < num_layers - 1))

        # ---- Linear(H, 1) on the last time step + Sigmoid -------------------
        logits = jnp.dot(h_last, fc_w, preferred_element_type=jnp.float32) + fc_b
        out_ref[...] = jax.nn.sigmoid(logits)            # (Bb, 1)

    return kernel


# ------------------------------- Wrapper -------------------------------------


@functools.partial(jax.jit, static_argnames=("num_layers", "batch_block"))
def cnn_lstm_sigmoid_forward(x, params, *, num_layers, batch_block=None):
    """x: (B, L, D) float32. Returns (B, 1) float32."""
    B, L, D = x.shape
    K, _, F = params["conv_w"].shape
    H = params["fc_w"].shape[0]
    assert L > 1 and L % 2 == 0, "script assumes even seq_len > 1 (maxpool applies)"
    T = L // 2
    KD = K * D

    # Pad batch up to a multiple of 8 (full sublane occupancy; padded rows are
    # discarded at the end).  Default block: two balanced grid steps when the
    # padded batch allows it (engages both v7x TensorCores via "parallel"),
    # otherwise one block.  For very large B, pass batch_block explicitly and
    # budget it against VMEM (halve for v7x's 64 MiB vs v6e's 128 MiB).
    B_pad = ((max(B, 8) + 7) // 8) * 8
    if batch_block is None:
        Bb = B_pad // 2 if (B_pad >= 16 and B_pad % 16 == 0) else B_pad
    else:
        Bb = batch_block
    assert B_pad % Bb == 0 and Bb % 8 == 0
    nblk = B_pad // Bb

    x = jnp.pad(x, ((0, B_pad - B), (0, 0), (0, 0)))

    # ---- plain-JAX glue (cheap, one-time) ----
    # PyTorch 'same' padding: left = (K-1)//2, right = K-1-left.
    left = (K - 1) // 2
    right = (K - 1) - left
    x_padded = jnp.pad(x, ((0, 0), (left, right), (0, 0)))
    # Tap-stack so the conv is a single matmul against (K*D, F).
    x_taps = jnp.concatenate([x_padded[:, k:k + L, :] for k in range(K)], axis=-1)

    # Even/odd sequence positions as two slabs, rows reordered T-MAJOR within
    # each batch block -> in-kernel maxpool is a max of two aligned contiguous
    # halves and gx[t] is a leading-axis read (no per-step sublane shuffle).
    def slab(xe):   # (B_pad, T, K*D) -> (B_pad*T, K*D), rows ordered (blk, t, b)
        return (xe.reshape(nblk, Bb, T, KD)
                  .transpose(0, 2, 1, 3)
                  .reshape(B_pad * T, KD))

    x_eo = jnp.stack([slab(x_taps[:, 0::2, :]), slab(x_taps[:, 1::2, :])], axis=0)

    # Fold x2 into the g-gate columns (one full-width sigmoid per cell),
    # pre-sum the two LSTM biases, and pack all parameters into 3 slabs.
    gsc = jnp.ones((1, 4 * H), jnp.float32).at[:, 2 * H:3 * H].set(2.0)

    conv_slab = jnp.concatenate([params["conv_w"].reshape(KD, F),
                                 params["conv_b"]], axis=0)          # (KD+1, F)
    lstm_rows = [params["w_ih_0"] * gsc, params["w_hh_0"] * gsc]
    for l in range(1, num_layers):
        lstm_rows += [params[f"w_ih_{l}"] * gsc, params[f"w_hh_{l}"] * gsc]
    lstm_rows += [(params[f"b_ih_{l}"] + params[f"b_hh_{l}"]) * gsc
                  for l in range(num_layers)]
    lstm_slab = jnp.concatenate(lstm_rows, axis=0)   # (F+(2L-1)H+L, 4H)
    fc_slab = jnp.concatenate([params["fc_w"], params["fc_b"]], axis=0)  # (H+1, 1)

    kernel = _make_kernel(Bb, T, D, F, K, H, num_layers)

    in_specs = [
        pl.BlockSpec((2, Bb * T, KD), lambda i: (0, i, 0)),
        pl.BlockSpec(conv_slab.shape, lambda i: (0, 0)),
        pl.BlockSpec(lstm_slab.shape, lambda i: (0, 0)),
        pl.BlockSpec(fc_slab.shape, lambda i: (0, 0)),
    ]
    out_specs = pl.BlockSpec((Bb, 1), lambda i: (i, 0))

    out = pl.pallas_call(
        kernel,
        out_shape=jax.ShapeDtypeStruct((B_pad, 1), jnp.float32),
        grid=(nblk,),
        in_specs=in_specs,
        out_specs=out_specs,
        compiler_params=pltpu.CompilerParams(
            dimension_semantics=("parallel",)),
    )(x_eo, conv_slab, lstm_slab, fc_slab)
    return out[:B]


# -------------------------- Parameter construction ---------------------------


def init_params(key, input_dim, hidden_dim, num_layers, num_filters, kernel_size):
    """Deterministic init mirroring PyTorch layer shapes (weights pre-transposed
    so the kernel computes x @ W without in-kernel transposes)."""
    D, H, F, K = input_dim, hidden_dim, num_filters, kernel_size
    params = {}
    keys = iter(jax.random.split(key, 64))

    def unif(k, shape, bound):
        return jax.random.uniform(k, shape, jnp.float32, -bound, bound)

    cb = 1.0 / jnp.sqrt(D * K)
    # torch Conv1d weight is (F, D, K); stored here as (K, D, F).
    params["conv_w"] = unif(next(keys), (K, D, F), cb)
    params["conv_b"] = unif(next(keys), (1, F), cb)

    lb = 1.0 / jnp.sqrt(H)
    for l in range(num_layers):
        in_size = F if l == 0 else H
        # torch weight_ih is (4H, in_size); stored transposed as (in_size, 4H).
        params[f"w_ih_{l}"] = unif(next(keys), (in_size, 4 * H), lb)
        params[f"w_hh_{l}"] = unif(next(keys), (H, 4 * H), lb)
        params[f"b_ih_{l}"] = unif(next(keys), (1, 4 * H), lb)
        params[f"b_hh_{l}"] = unif(next(keys), (1, 4 * H), lb)

    fb = 1.0 / jnp.sqrt(H)
    # torch Linear weight is (1, H); stored transposed as (H, 1).
    params["fc_w"] = unif(next(keys), (H, 1), fb)
    params["fc_b"] = unif(next(keys), (1, 1), fb)
    return params


# ------------------------- Pure-JAX reference check --------------------------


def reference_forward(x, params, num_layers):
    B, L, D = x.shape
    K, _, F = params["conv_w"].shape
    H = params["fc_w"].shape[0]
    left = (K - 1) // 2
    x_pad = jnp.pad(x, ((0, 0), (left, (K - 1) - left), (0, 0)))
    y = jnp.zeros((B, L, F), jnp.float32)
    for k in range(K):
        y = y + jnp.einsum("bld,df->blf", x_pad[:, k:k + L, :], params["conv_w"][k])
    y = jax.nn.relu(y + params["conv_b"][None])
    T = L // 2
    y = jnp.max(y.reshape(B, T, 2, F), axis=2)
    h = [jnp.zeros((B, H)) for _ in range(num_layers)]
    c = [jnp.zeros((B, H)) for _ in range(num_layers)]
    for t in range(T):
        inp = y[:, t, :]
        for l in range(num_layers):
            g = (inp @ params[f"w_ih_{l}"] + h[l] @ params[f"w_hh_{l}"]
                 + params[f"b_ih_{l}"] + params[f"b_hh_{l}"])
            i_g = jax.nn.sigmoid(g[:, :H]); f_g = jax.nn.sigmoid(g[:, H:2 * H])
            g_g = jnp.tanh(g[:, 2 * H:3 * H]); o_g = jax.nn.sigmoid(g[:, 3 * H:])
            c[l] = f_g * c[l] + i_g * g_g
            h[l] = o_g * jnp.tanh(c[l])
            inp = h[l]
    return jax.nn.sigmoid(h[-1] @ params["fc_w"] + params["fc_b"])


# ----------------------------------- Main ------------------------------------

if __name__ == "__main__":
    # Small shapes consistent with the module.
    B, L = 2, 16              # batch, sequence length
    input_dim = 4
    hidden_dim = 32
    num_layers = 2
    num_filters = 8
    kernel_size = 3

    key = jax.random.PRNGKey(0)
    kx, kp = jax.random.split(key)
    x = jax.random.normal(kx, (B, L, input_dim), jnp.float32)
    params = init_params(kp, input_dim, hidden_dim, num_layers,
                         num_filters, kernel_size)

    out = cnn_lstm_sigmoid_forward(x, params, num_layers=num_layers)
    out = jax.block_until_ready(out)
    assert out.shape == (B, 1), out.shape

    ref = reference_forward(x, params, num_layers)
    assert jnp.allclose(out, ref, atol=1e-5, rtol=1e-5), (out, ref)

    print("KERNEL_OK")
</pallas_src>

<mosaic_0001>
module attributes {stable_mosaic.version = 11 : i64} {
  func.func @kernel(%arg0: i32, %arg1: memref<2x64x12xf32, #tpu.memory_space<vmem>>, %arg2: memref<13x8xf32, #tpu.memory_space<vmem>>, %arg3: memref<106x128xf32, #tpu.memory_space<vmem>>, %arg4: memref<33x1xf32, #tpu.memory_space<vmem>>, %arg5: memref<8x1xf32, #tpu.memory_space<vmem>>) attributes {dimension_semantics = [#tpu.dimension_semantics<parallel>], iteration_bounds = array<i64: 1>, scalar_prefetch = 0 : i64, scratch_operands = 0 : i64, tpu.core_type = #tpu.core_type<tc>, window_params = [{transform_indices = @transform_0, window_bounds = array<i64: 2, 64, 12>}, {pipeline_mode = #tpu.pipeline_mode<synchronous>, transform_indices = @transform_1, window_bounds = array<i64: 13, 8>}, {pipeline_mode = #tpu.pipeline_mode<synchronous>, transform_indices = @transform_2, window_bounds = array<i64: 106, 128>}, {pipeline_mode = #tpu.pipeline_mode<synchronous>, transform_indices = @transform_3, window_bounds = array<i64: 33, 1>}, {transform_indices = @transform_4, window_bounds = array<i64: 8, 1>}]} {
    %c0 = arith.constant 0 : index
    %c0_0 = arith.constant 0 : index
    %c0_1 = arith.constant 0 : index
    %0 = vector.load %arg1[%c0, %c0_0, %c0_1] : memref<2x64x12xf32, #tpu.memory_space<vmem>>, vector<2x64x12xf32>
    %1 = vector.shape_cast %0 : vector<2x64x12xf32> to vector<128x12xf32>
    %c0_2 = arith.constant 0 : index
    %c0_3 = arith.constant 0 : index
    %2 = vector.load %arg2[%c0_2, %c0_3] : memref<13x8xf32, #tpu.memory_space<vmem>>, vector<12x8xf32>
    %cst = arith.constant dense<0.000000e+00> : vector<128x8xf32>
    %3 = tpu.matmul %1, %2, %cst {dimension_numbers = #tpu.dot_dimension_numbers<[1], [0], [0], [1], [0, 0, 1, 1], [], []>} : vector<128x12xf32>, vector<12x8xf32>, vector<128x8xf32> -> vector<128x8xf32>
    %c12 = arith.constant 12 : index
    %c0_4 = arith.constant 0 : index
    %4 = vector.load %arg2[%c12, %c0_4] : memref<13x8xf32, #tpu.memory_space<vmem>>, vector<1x8xf32>
    %5 = vector.broadcast %4 : vector<1x8xf32> to vector<128x8xf32>
    %6 = arith.addf %3, %5 : vector<128x8xf32>
    %cst_5 = arith.constant 0.000000e+00 : f32
    %7 = vector.broadcast %cst_5 : f32 to vector<128x8xf32>
    %8 = arith.maximumf %6, %7 : vector<128x8xf32>
    %9 = vector.extract_strided_slice %8 {offsets = [0, 0], sizes = [64, 8], strides = [1, 1]} : vector<128x8xf32> to vector<64x8xf32>
    %10 = vector.extract_strided_slice %8 {offsets = [64, 0], sizes = [64, 8], strides = [1, 1]} : vector<128x8xf32> to vector<64x8xf32>
    %11 = arith.maximumf %9, %10 : vector<64x8xf32>
    %c0_6 = arith.constant 0 : index
    %c0_7 = arith.constant 0 : index
    %12 = vector.load %arg3[%c0_6, %c0_7] : memref<106x128xf32, #tpu.memory_space<vmem>>, vector<8x128xf32>
    %c8 = arith.constant 8 : index
    %c0_8 = arith.constant 0 : index
    %13 = vector.load %arg3[%c8, %c0_8] : memref<106x128xf32, #tpu.memory_space<vmem>>, vector<32x128xf32>
    %c40 = arith.constant 40 : index
    %c0_9 = arith.constant 0 : index
    %14 = vector.load %arg3[%c40, %c0_9] : memref<106x128xf32, #tpu.memory_space<vmem>>, vector<32x128xf32>
    %c72 = arith.constant 72 : index
    %c0_10 = arith.constant 0 : index
    %15 = vector.load %arg3[%c72, %c0_10] : memref<106x128xf32, #tpu.memory_space<vmem>>, vector<32x128xf32>
    %c104 = arith.constant 104 : index
    %c0_11 = arith.constant 0 : index
    %16 = vector.load %arg3[%c104, %c0_11] : memref<106x128xf32, #tpu.memory_space<vmem>>, vector<1x128xf32>
    %c105 = arith.constant 105 : index
    %c0_12 = arith.constant 0 : index
    %17 = vector.load %arg3[%c105, %c0_12] : memref<106x128xf32, #tpu.memory_space<vmem>>, vector<1x128xf32>
    %c0_13 = arith.constant 0 : index
    %c0_14 = arith.constant 0 : index
    %18 = vector.load %arg4[%c0_13, %c0_14] : memref<33x1xf32, #tpu.memory_space<vmem>>, vector<32x1xf32>
    %c32 = arith.constant 32 : index
    %c0_15 = arith.constant 0 : index
    %19 = vector.load %arg4[%c32, %c0_15] : memref<33x1xf32, #tpu.memory_space<vmem>>, vector<1x1xf32>
    %cst_16 = arith.constant dense<0.000000e+00> : vector<64x128xf32>
    %20 = tpu.matmul %11, %12, %cst_16 {dimension_numbers = #tpu.dot_dimension_numbers<[1], [0], [0], [1], [0, 0, 1, 1], [], []>} : vector<64x8xf32>, vector<8x128xf32>, vector<64x128xf32> -> vector<64x128xf32>
    %21 = vector.broadcast %16 : vector<1x128xf32> to vector<64x128xf32>
    %22 = arith.addf %20, %21 : vector<64x128xf32>
    %23 = vector.shape_cast %22 : vector<64x128xf32> to vector<8x8x128xf32>
    %cst_17 = arith.constant 0.000000e+00 : f32
    %24 = vector.broadcast %cst_17 : f32 to vector<8x32xf32>
    %cst_18 = arith.constant 0.000000e+00 : f32
    %25 = vector.broadcast %cst_18 : f32 to vector<8x32xf32>
    %26 = vector.extract_strided_slice %23 {offsets = [0, 0, 0], sizes = [1, 8, 128], strides = [1, 1, 1]} : vector<8x8x128xf32> to vector<1x8x128xf32>
    %27 = vector.shape_cast %26 : vector<1x8x128xf32> to vector<8x128xf32>
    %cst_19 = arith.constant dense<0.000000e+00> : vector<8x128xf32>
    %28 = tpu.matmul %24, %13, %cst_19 {dimension_numbers = #tpu.dot_dimension_numbers<[1], [0], [0], [1], [0, 0, 1, 1], [], []>} : vector<8x32xf32>, vector<32x128xf32>, vector<8x128xf32> -> vector<8x128xf32>
    %29 = arith.addf %27, %28 : vector<8x128xf32>
    %30 = arith.negf %29 : vector<8x128xf32>
    %31 = math.exp %30 : vector<8x128xf32>
    %cst_20 = arith.constant 1.000000e+00 : f32
    %32 = vector.broadcast %cst_20 : f32 to vector<8x128xf32>
    %33 = arith.addf %32, %31 : vector<8x128xf32>
    %34 = arith.divf %32, %33 : vector<8x128xf32>
    %35 = vector.extract_strided_slice %34 {offsets = [0, 0], sizes = [8, 32], strides = [1, 1]} : vector<8x128xf32> to vector<8x32xf32>
    %36 = vector.extract_strided_slice %34 {offsets = [0, 32], sizes = [8, 32], strides = [1, 1]} : vector<8x128xf32> to vector<8x32xf32>
    %37 = vector.extract_strided_slice %34 {offsets = [0, 64], sizes = [8, 32], strides = [1, 1]} : vector<8x128xf32> to vector<8x32xf32>
    %cst_21 = arith.constant 2.000000e+00 : f32
    %38 = vector.broadcast %cst_21 : f32 to vector<8x32xf32>
    %39 = arith.mulf %38, %37 : vector<8x32xf32>
    %cst_22 = arith.constant 1.000000e+00 : f32
    %40 = vector.broadcast %cst_22 : f32 to vector<8x32xf32>
    %41 = arith.subf %39, %40 : vector<8x32xf32>
    %42 = vector.extract_strided_slice %34 {offsets = [0, 96], sizes = [8, 32], strides = [1, 1]} : vector<8x128xf32> to vector<8x32xf32>
    %43 = arith.mulf %36, %25 : vector<8x32xf32>
    %44 = arith.mulf %35, %41 : vector<8x32xf32>
    %45 = arith.addf %43, %44 : vector<8x32xf32>
    %cst_23 = arith.constant 2.000000e+00 : f32
    %46 = vector.broadcast %cst_23 : f32 to vector<8x32xf32>
    %47 = arith.mulf %46, %45 : vector<8x32xf32>
    %48 = arith.negf %47 : vector<8x32xf32>
    %49 = math.exp %48 : vector<8x32xf32>
    %cst_24 = arith.constant 1.000000e+00 : f32
    %50 = vector.broadcast %cst_24 : f32 to vector<8x32xf32>
    %51 = arith.addf %50, %49 : vector<8x32xf32>
    %52 = arith.divf %50, %51 : vector<8x32xf32>
    %cst_25 = arith.constant 2.000000e+00 : f32
    %53 = vector.broadcast %cst_25 : f32 to vector<8x32xf32>
    %54 = arith.mulf %53, %52 : vector<8x32xf32>
    %cst_26 = arith.constant 1.000000e+00 : f32
    %55 = vector.broadcast %cst_26 : f32 to vector<8x32xf32>
    %56 = arith.subf %54, %55 : vector<8x32xf32>
    %57 = arith.mulf %42, %56 : vector<8x32xf32>
    %58 = vector.extract_strided_slice %23 {offsets = [1, 0, 0], sizes = [1, 8, 128], strides = [1, 1, 1]} : vector<8x8x128xf32> to vector<1x8x128xf32>
    %59 = vector.shape_cast %58 : vector<1x8x128xf32> to vector<8x128xf32>
    %cst_27 = arith.constant dense<0.000000e+00> : vector<8x128xf32>
    %60 = tpu.matmul %57, %13, %cst_27 {dimension_numbers = #tpu.dot_dimension_numbers<[1], [0], [0], [1], [0, 0, 1, 1], [], []>} : vector<8x32xf32>, vector<32x128xf32>, vector<8x128xf32> -> vector<8x128xf32>
    %61 = arith.addf %59, %60 : vector<8x128xf32>
    %62 = arith.negf %61 : vector<8x128xf32>
    %63 = math.exp %62 : vector<8x128xf32>
    %cst_28 = arith.constant 1.000000e+00 : f32
    %64 = vector.broadcast %cst_28 : f32 to vector<8x128xf32>
    %65 = arith.addf %64, %63 : vector<8x128xf32>
    %66 = arith.divf %64, %65 : vector<8x128xf32>
    %67 = vector.extract_strided_slice %66 {offsets = [0, 0], sizes = [8, 32], strides = [1, 1]} : vector<8x128xf32> to vector<8x32xf32>
    %68 = vector.extract_strided_slice %66 {offsets = [0, 32], sizes = [8, 32], strides = [1, 1]} : vector<8x128xf32> to vector<8x32xf32>
    %69 = vector.extract_strided_slice %66 {offsets = [0, 64], sizes = [8, 32], strides = [1, 1]} : vector<8x128xf32> to vector<8x32xf32>
    %cst_29 = arith.constant 2.000000e+00 : f32
    %70 = vector.broadcast %cst_29 : f32 to vector<8x32xf32>
    %71 = arith.mulf %70, %69 : vector<8x32xf32>
    %cst_30 = arith.constant 1.000000e+00 : f32
    %72 = vector.broadcast %cst_30 : f32 to vector<8x32xf32>
    %73 = arith.subf %71, %72 : vector<8x32xf32>
    %74 = vector.extract_strided_slice %66 {offsets = [0, 96], sizes = [8, 32], strides = [1, 1]} : vector<8x128xf32> to vector<8x32xf32>
    %75 = arith.mulf %68, %45 : vector<8x32xf32>
    %76 = arith.mulf %67, %73 : vector<8x32xf32>
    %77 = arith.addf %75, %76 : vector<8x32xf32>
    %cst_31 = arith.constant 2.000000e+00 : f32
    %78 = vector.broadcast %cst_31 : f32 to vector<8x32xf32>
    %79 = arith.mulf %78, %77 : vector<8x32xf32>
    %80 = arith.negf %79 : vector<8x32xf32>
    %81 = math.exp %80 : vector<8x32xf32>
    %cst_32 = arith.constant 1.000000e+00 : f32
    %82 = vector.broadcast %cst_32 : f32 to vector<8x32xf32>
    %83 = arith.addf %82, %81 : vector<8x32xf32>
    %84 = arith.divf %82, %83 : vector<8x32xf32>
    %cst_33 = arith.constant 2.000000e+00 : f32
    %85 = vector.broadcast %cst_33 : f32 to vector<8x32xf32>
    %86 = arith.mulf %85, %84 : vector<8x32xf32>
    %cst_34 = arith.constant 1.000000e+00 : f32
    %87 = vector.broadcast %cst_34 : f32 to vector<8x32xf32>
    %88 = arith.subf %86, %87 : vector<8x32xf32>
    %89 = arith.mulf %74, %88 : vector<8x32xf32>
    %90 = vector.extract_strided_slice %23 {offsets = [2, 0, 0], sizes = [1, 8, 128], strides = [1, 1, 1]} : vector<8x8x128xf32> to vector<1x8x128xf32>
    %91 = vector.shape_cast %90 : vector<1x8x128xf32> to vector<8x128xf32>
    %cst_35 = arith.constant dense<0.000000e+00> : vector<8x128xf32>
    %92 = tpu.matmul %89, %13, %cst_35 {dimension_numbers = #tpu.dot_dimension_numbers<[1], [0], [0], [1], [0, 0, 1, 1], [], []>} : vector<8x32xf32>, vector<32x128xf32>, vector<8x128xf32> -> vector<8x128xf32>
    %93 = arith.addf %91, %92 : vector<8x128xf32>
    %94 = arith.negf %93 : vector<8x128xf32>
    %95 = math.exp %94 : vector<8x128xf32>
    %cst_36 = arith.constant 1.000000e+00 : f32
    %96 = vector.broadcast %cst_36 : f32 to vector<8x128xf32>
    %97 = arith.addf %96, %95 : vector<8x128xf32>
    %98 = arith.divf %96, %97 : vector<8x128xf32>
    %99 = vector.extract_strided_slice %98 {offsets = [0, 0], sizes = [8, 32], strides = [1, 1]} : vector<8x128xf32> to vector<8x32xf32>
    %100 = vector.extract_strided_slice %98 {offsets = [0, 32], sizes = [8, 32], strides = [1, 1]} : vector<8x128xf32> to vector<8x32xf32>
    %101 = vector.extract_strided_slice %98 {offsets = [0, 64], sizes = [8, 32], strides = [1, 1]} : vector<8x128xf32> to vector<8x32xf32>
    %cst_37 = arith.constant 2.000000e+00 : f32
    %102 = vector.broadcast %cst_37 : f32 to vector<8x32xf32>
    %103 = arith.mulf %102, %101 : vector<8x32xf32>
    %cst_38 = arith.constant 1.000000e+00 : f32
    %104 = vector.broadcast %cst_38 : f32 to vector<8x32xf32>
    %105 = arith.subf %103, %104 : vector<8x32xf32>
    %106 = vector.extract_strided_slice %98 {offsets = [0, 96], sizes = [8, 32], strides = [1, 1]} : vector<8x128xf32> to vector<8x32xf32>
    %107 = arith.mulf %100, %77 : vector<8x32xf32>
    %108 = arith.mulf %99, %105 : vector<8x32xf32>
    %109 = arith.addf %107, %108 : vector<8x32xf32>
    %cst_39 = arith.constant 2.000000e+00 : f32
    %110 = vector.broadcast %cst_39 : f32 to vector<8x32xf32>
    %111 = arith.mulf %110, %109 : vector<8x32xf32>
    %112 = arith.negf %111 : vector<8x32xf32>
    %113 = math.exp %112 : vector<8x32xf32>
    %cst_40 = arith.constant 1.000000e+00 : f32
    %114 = vector.broadcast %cst_40 : f32 to vector<8x32xf32>
    %115 = arith.addf %114, %113 : vector<8x32xf32>
    %116 = arith.divf %114, %115 : vector<8x32xf32>
    %cst_41 = arith.constant 2.000000e+00 : f32
    %117 = vector.broadcast %cst_41 : f32 to vector<8x32xf32>
    %118 = arith.mulf %117, %116 : vector<8x32xf32>
    %cst_42 = arith.constant 1.000000e+00 : f32
    %119 = vector.broadcast %cst_42 : f32 to vector<8x32xf32>
    %120 = arith.subf %118, %119 : vector<8x32xf32>
    %121 = arith.mulf %106, %120 : vector<8x32xf32>
    %122 = vector.extract_strided_slice %23 {offsets = [3, 0, 0], sizes = [1, 8, 128], strides = [1, 1, 1]} : vector<8x8x128xf32> to vector<1x8x128xf32>
    %123 = vector.shape_cast %122 : vector<1x8x128xf32> to vector<8x128xf32>
    %cst_43 = arith.constant dense<0.000000e+00> : vector<8x128xf32>
    %124 = tpu.matmul %121, %13, %cst_43 {dimension_numbers = #tpu.dot_dimension_numbers<[1], [0], [0], [1], [0, 0, 1, 1], [], []>} : vector<8x32xf32>, vector<32x128xf32>, vector<8x128xf32> -> vector<8x128xf32>
    %125 = arith.addf %123, %124 : vector<8x128xf32>
    %126 = arith.negf %125 : vector<8x128xf32>
    %127 = math.exp %126 : vector<8x128xf32>
    %cst_44 = arith.constant 1.000000e+00 : f32
    %128 = vector.broadcast %cst_44 : f32 to vector<8x128xf32>
    %129 = arith.addf %128, %127 : vector<8x128xf32>
    %130 = arith.divf %128, %129 : vector<8x128xf32>
    %131 = vector.extract_strided_slice %130 {offsets = [0, 0], sizes = [8, 32], strides = [1, 1]} : vector<8x128xf32> to vector<8x32xf32>
    %132 = vector.extract_strided_slice %130 {offsets = [0, 32], sizes = [8, 32], strides = [1, 1]} : vector<8x128xf32> to vector<8x32xf32>
    %133 = vector.extract_strided_slice %130 {offsets = [0, 64], sizes = [8, 32], strides = [1, 1]} : vector<8x128xf32> to vector<8x32xf32>
    %cst_45 = arith.constant 2.000000e+00 : f32
    %134 = vector.broadcast %cst_45 : f32 to vector<8x32xf32>
    %135 = arith.mulf %134, %133 : vector<8x32xf32>
    %cst_46 = arith.constant 1.000000e+00 : f32
    %136 = vector.broadcast %cst_46 : f32 to vector<8x32xf32>
    %137 = arith.subf %135, %136 : vector<8x32xf32>
    %138 = vector.extract_strided_slice %130 {offsets = [0, 96], sizes = [8, 32], strides = [1, 1]} : vector<8x128xf32> to vector<8x32xf32>
    %139 = arith.mulf %132, %109 : vector<8x32xf32>
    %140 = arith.mulf %131, %137 : vector<8x32xf32>
    %141 = arith.addf %139, %140 : vector<8x32xf32>
    %cst_47 = arith.constant 2.000000e+00 : f32
    %142 = vector.broadcast %cst_47 : f32 to vector<8x32xf32>
    %143 = arith.mulf %142, %141 : vector<8x32xf32>
    %144 = arith.negf %143 : vector<8x32xf32>
    %145 = math.exp %144 : vector<8x32xf32>
    %cst_48 = arith.constant 1.000000e+00 : f32
    %146 = vector.broadcast %cst_48 : f32 to vector<8x32xf32>
    %147 = arith.addf %146, %145 : vector<8x32xf32>
    %148 = arith.divf %146, %147 : vector<8x32xf32>
    %cst_49 = arith.constant 2.000000e+00 : f32
    %149 = vector.broadcast %cst_49 : f32 to vector<8x32xf32>
    %150 = arith.mulf %149, %148 : vector<8x32xf32>
    %cst_50 = arith.constant 1.000000e+00 : f32
    %151 = vector.broadcast %cst_50 : f32 to vector<8x32xf32>
    %152 = arith.subf %150, %151 : vector<8x32xf32>
    %153 = arith.mulf %138, %152 : vector<8x32xf32>
    %154 = vector.extract_strided_slice %23 {offsets = [4, 0, 0], sizes = [1, 8, 128], strides = [1, 1, 1]} : vector<8x8x128xf32> to vector<1x8x128xf32>
    %155 = vector.shape_cast %154 : vector<1x8x128xf32> to vector<8x128xf32>
    %cst_51 = arith.constant dense<0.000000e+00> : vector<8x128xf32>
    %156 = tpu.matmul %153, %13, %cst_51 {dimension_numbers = #tpu.dot_dimension_numbers<[1], [0], [0], [1], [0, 0, 1, 1], [], []>} : vector<8x32xf32>, vector<32x128xf32>, vector<8x128xf32> -> vector<8x128xf32>
    %157 = arith.addf %155, %156 : vector<8x128xf32>
    %158 = arith.negf %157 : vector<8x128xf32>
    %159 = math.exp %158 : vector<8x128xf32>
    %cst_52 = arith.constant 1.000000e+00 : f32
    %160 = vector.broadcast %cst_52 : f32 to vector<8x128xf32>
    %161 = arith.addf %160, %159 : vector<8x128xf32>
    %162 = arith.divf %160, %161 : vector<8x128xf32>
    %163 = vector.extract_strided_slice %162 {offsets = [0, 0], sizes = [8, 32], strides = [1, 1]} : vector<8x128xf32> to vector<8x32xf32>
    %164 = vector.extract_strided_slice %162 {offsets = [0, 32], sizes = [8, 32], strides = [1, 1]} : vector<8x128xf32> to vector<8x32xf32>
    %165 = vector.extract_strided_slice %162 {offsets = [0, 64], sizes = [8, 32], strides = [1, 1]} : vector<8x128xf32> to vector<8x32xf32>
    %cst_53 = arith.constant 2.000000e+00 : f32
    %166 = vector.broadcast %cst_53 : f32 to vector<8x32xf32>
    %167 = arith.mulf %166, %165 : vector<8x32xf32>
    %cst_54 = arith.constant 1.000000e+00 : f32
    %168 = vector.broadcast %cst_54 : f32 to vector<8x32xf32>
    %169 = arith.subf %167, %168 : vector<8x32xf32>
    %170 = vector.extract_strided_slice %162 {offsets = [0, 96], sizes = [8, 32], strides = [1, 1]} : vector<8x128xf32> to vector<8x32xf32>
    %171 = arith.mulf %164, %141 : vector<8x32xf32>
    %172 = arith.mulf %163, %169 : vector<8x32xf32>
    %173 = arith.addf %171, %172 : vector<8x32xf32>
    %cst_55 = arith.constant 2.000000e+00 : f32
    %174 = vector.broadcast %cst_55 : f32 to vector<8x32xf32>
    %175 = arith.mulf %174, %173 : vector<8x32xf32>
    %176 = arith.negf %175 : vector<8x32xf32>
    %177 = math.exp %176 : vector<8x32xf32>
    %cst_56 = arith.constant 1.000000e+00 : f32
    %178 = vector.broadcast %cst_56 : f32 to vector<8x32xf32>
    %179 = arith.addf %178, %177 : vector<8x32xf32>
    %180 = arith.divf %178, %179 : vector<8x32xf32>
    %cst_57 = arith.constant 2.000000e+00 : f32
    %181 = vector.broadcast %cst_57 : f32 to vector<8x32xf32>
    %182 = arith.mulf %181, %180 : vector<8x32xf32>
    %cst_58 = arith.constant 1.000000e+00 : f32
    %183 = vector.broadcast %cst_58 : f32 to vector<8x32xf32>
    %184 = arith.subf %182, %183 : vector<8x32xf32>
    %185 = arith.mulf %170, %184 : vector<8x32xf32>
    %186 = vector.extract_strided_slice %23 {offsets = [5, 0, 0], sizes = [1, 8, 128], strides = [1, 1, 1]} : vector<8x8x128xf32> to vector<1x8x128xf32>
    %187 = vector.shape_cast %186 : vector<1x8x128xf32> to vector<8x128xf32>
    %cst_59 = arith.constant dense<0.000000e+00> : vector<8x128xf32>
    %188 = tpu.matmul %185, %13, %cst_59 {dimension_numbers = #tpu.dot_dimension_numbers<[1], [0], [0], [1], [0, 0, 1, 1], [], []>} : vector<8x32xf32>, vector<32x128xf32>, vector<8x128xf32> -> vector<8x128xf32>
    %189 = arith.addf %187, %188 : vector<8x128xf32>
    %190 = arith.negf %189 : vector<8x128xf32>
    %191 = math.exp %190 : vector<8x128xf32>
    %cst_60 = arith.constant 1.000000e+00 : f32
    %192 = vector.broadcast %cst_60 : f32 to vector<8x128xf32>
    %193 = arith.addf %192, %191 : vector<8x128xf32>
    %194 = arith.divf %192, %193 : vector<8x128xf32>
    %195 = vector.extract_strided_slice %194 {offsets = [0, 0], sizes = [8, 32], strides = [1, 1]} : vector<8x128xf32> to vector<8x32xf32>
    %196 = vector.extract_strided_slice %194 {offsets = [0, 32], sizes = [8, 32], strides = [1, 1]} : vector<8x128xf32> to vector<8x32xf32>
    %197 = vector.extract_strided_slice %194 {offsets = [0, 64], sizes = [8, 32], strides = [1, 1]} : vector<8x128xf32> to vector<8x32xf32>
    %cst_61 = arith.constant 2.000000e+00 : f32
    %198 = vector.broadcast %cst_61 : f32 to vector<8x32xf32>
    %199 = arith.mulf %198, %197 : vector<8x32xf32>
    %cst_62 = arith.constant 1.000000e+00 : f32
    %200 = vector.broadcast %cst_62 : f32 to vector<8x32xf32>
    %201 = arith.subf %199, %200 : vector<8x32xf32>
    %202 = vector.extract_strided_slice %194 {offsets = [0, 96], sizes = [8, 32], strides = [1, 1]} : vector<8x128xf32> to vector<8x32xf32>
    %203 = arith.mulf %196, %173 : vector<8x32xf32>
    %204 = arith.mulf %195, %201 : vector<8x32xf32>
    %205 = arith.addf %203, %204 : vector<8x32xf32>
    %cst_63 = arith.constant 2.000000e+00 : f32
    %206 = vector.broadcast %cst_63 : f32 to vector<8x32xf32>
    %207 = arith.mulf %206, %205 : vector<8x32xf32>
    %208 = arith.negf %207 : vector<8x32xf32>
    %209 = math.exp %208 : vector<8x32xf32>
    %cst_64 = arith.constant 1.000000e+00 : f32
    %210 = vector.broadcast %cst_64 : f32 to vector<8x32xf32>
    %211 = arith.addf %210, %209 : vector<8x32xf32>
    %212 = arith.divf %210, %211 : vector<8x32xf32>
    %cst_65 = arith.constant 2.000000e+00 : f32
    %213 = vector.broadcast %cst_65 : f32 to vector<8x32xf32>
    %214 = arith.mulf %213, %212 : vector<8x32xf32>
    %cst_66 = arith.constant 1.000000e+00 : f32
    %215 = vector.broadcast %cst_66 : f32 to vector<8x32xf32>
    %216 = arith.subf %214, %215 : vector<8x32xf32>
    %217 = arith.mulf %202, %216 : vector<8x32xf32>
    %218 = vector.extract_strided_slice %23 {offsets = [6, 0, 0], sizes = [1, 8, 128], strides = [1, 1, 1]} : vector<8x8x128xf32> to vector<1x8x128xf32>
    %219 = vector.shape_cast %218 : vector<1x8x128xf32> to vector<8x128xf32>
    %cst_67 = arith.constant dense<0.000000e+00> : vector<8x128xf32>
    %220 = tpu.matmul %217, %13, %cst_67 {dimension_numbers = #tpu.dot_dimension_numbers<[1], [0], [0], [1], [0, 0, 1, 1], [], []>} : vector<8x32xf32>, vector<32x128xf32>, vector<8x128xf32> -> vector<8x128xf32>
    %221 = arith.addf %219, %220 : vector<8x128xf32>
    %222 = arith.negf %221 : vector<8x128xf32>
    %223 = math.exp %222 : vector<8x128xf32>
    %cst_68 = arith.constant 1.000000e+00 : f32
    %224 = vector.broadcast %cst_68 : f32 to vector<8x128xf32>
    %225 = arith.addf %224, %223 : vector<8x128xf32>
    %226 = arith.divf %224, %225 : vector<8x128xf32>
    %227 = vector.extract_strided_slice %226 {offsets = [0, 0], sizes = [8, 32], strides = [1, 1]} : vector<8x128xf32> to vector<8x32xf32>
    %228 = vector.extract_strided_slice %226 {offsets = [0, 32], sizes = [8, 32], strides = [1, 1]} : vector<8x128xf32> to vector<8x32xf32>
    %229 = vector.extract_strided_slice %226 {offsets = [0, 64], sizes = [8, 32], strides = [1, 1]} : vector<8x128xf32> to vector<8x32xf32>
    %cst_69 = arith.constant 2.000000e+00 : f32
    %230 = vector.broadcast %cst_69 : f32 to vector<8x32xf32>
    %231 = arith.mulf %230, %229 : vector<8x32xf32>
    %cst_70 = arith.constant 1.000000e+00 : f32
    %232 = vector.broadcast %cst_70 : f32 to vector<8x32xf32>
    %233 = arith.subf %231, %232 : vector<8x32xf32>
    %234 = vector.extract_strided_slice %226 {offsets = [0, 96], sizes = [8, 32], strides = [1, 1]} : vector<8x128xf32> to vector<8x32xf32>
    %235 = arith.mulf %228, %205 : vector<8x32xf32>
    %236 = arith.mulf %227, %233 : vector<8x32xf32>
    %237 = arith.addf %235, %236 : vector<8x32xf32>
    %cst_71 = arith.constant 2.000000e+00 : f32
    %238 = vector.broadcast %cst_71 : f32 to vector<8x32xf32>
    %239 = arith.mulf %238, %237 : vector<8x32xf32>
    %240 = arith.negf %239 : vector<8x32xf32>
    %241 = math.exp %240 : vector<8x32xf32>
    %cst_72 = arith.constant 1.000000e+00 : f32
    %242 = vector.broadcast %cst_72 : f32 to vector<8x32xf32>
    %243 = arith.addf %242, %241 : vector<8x32xf32>
    %244 = arith.divf %242, %243 : vector<8x32xf32>
    %cst_73 = arith.constant 2.000000e+00 : f32
    %245 = vector.broadcast %cst_73 : f32 to vector<8x32xf32>
    %246 = arith.mulf %245, %244 : vector<8x32xf32>
    %cst_74 = arith.constant 1.000000e+00 : f32
    %247 = vector.broadcast %cst_74 : f32 to vector<8x32xf32>
    %248 = arith.subf %246, %247 : vector<8x32xf32>
    %249 = arith.mulf %234, %248 : vector<8x32xf32>
    %250 = vector.extract_strided_slice %23 {offsets = [7, 0, 0], sizes = [1, 8, 128], strides = [1, 1, 1]} : vector<8x8x128xf32> to vector<1x8x128xf32>
    %251 = vector.shape_cast %250 : vector<1x8x128xf32> to vector<8x128xf32>
    %cst_75 = arith.constant dense<0.000000e+00> : vector<8x128xf32>
    %252 = tpu.matmul %249, %13, %cst_75 {dimension_numbers = #tpu.dot_dimension_numbers<[1], [0], [0], [1], [0, 0, 1, 1], [], []>} : vector<8x32xf32>, vector<32x128xf32>, vector<8x128xf32> -> vector<8x128xf32>
    %253 = arith.addf %251, %252 : vector<8x128xf32>
    %254 = arith.negf %253 : vector<8x128xf32>
    %255 = math.exp %254 : vector<8x128xf32>
    %cst_76 = arith.constant 1.000000e+00 : f32
    %256 = vector.broadcast %cst_76 : f32 to vector<8x128xf32>
    %257 = arith.addf %256, %255 : vector<8x128xf32>
    %258 = arith.divf %256, %257 : vector<8x128xf32>
    %259 = vector.extract_strided_slice %258 {offsets = [0, 0], sizes = [8, 32], strides = [1, 1]} : vector<8x128xf32> to vector<8x32xf32>
    %260 = vector.extract_strided_slice %258 {offsets = [0, 32], sizes = [8, 32], strides = [1, 1]} : vector<8x128xf32> to vector<8x32xf32>
    %261 = vector.extract_strided_slice %258 {offsets = [0, 64], sizes = [8, 32], strides = [1, 1]} : vector<8x128xf32> to vector<8x32xf32>
    %cst_77 = arith.constant 2.000000e+00 : f32
    %262 = vector.broadcast %cst_77 : f32 to vector<8x32xf32>
    %263 = arith.mulf %262, %261 : vector<8x32xf32>
    %cst_78 = arith.constant 1.000000e+00 : f32
    %264 = vector.broadcast %cst_78 : f32 to vector<8x32xf32>
    %265 = arith.subf %263, %264 : vector<8x32xf32>
    %266 = vector.extract_strided_slice %258 {offsets = [0, 96], sizes = [8, 32], strides = [1, 1]} : vector<8x128xf32> to vector<8x32xf32>
    %267 = arith.mulf %260, %237 : vector<8x32xf32>
    %268 = arith.mulf %259, %265 : vector<8x32xf32>
    %269 = arith.addf %267, %268 : vector<8x32xf32>
    %cst_79 = arith.constant 2.000000e+00 : f32
    %270 = vector.broadcast %cst_79 : f32 to vector<8x32xf32>
    %271 = arith.mulf %270, %269 : vector<8x32xf32>
    %272 = arith.negf %271 : vector<8x32xf32>
    %273 = math.exp %272 : vector<8x32xf32>
    %cst_80 = arith.constant 1.000000e+00 : f32
    %274 = vector.broadcast %cst_80 : f32 to vector<8x32xf32>
    %275 = arith.addf %274, %273 : vector<8x32xf32>
    %276 = arith.divf %274, %275 : vector<8x32xf32>
    %cst_81 = arith.constant 2.000000e+00 : f32
    %277 = vector.broadcast %cst_81 : f32 to vector<8x32xf32>
    %278 = arith.mulf %277, %276 : vector<8x32xf32>
    %cst_82 = arith.constant 1.000000e+00 : f32
    %279 = vector.broadcast %cst_82 : f32 to vector<8x32xf32>
    %280 = arith.subf %278, %279 : vector<8x32xf32>
    %281 = arith.mulf %266, %280 : vector<8x32xf32>
    %282 = tpu.concatenate %57, %89, %121, %153, %185, %217, %249, %281 in 0 : vector<8x32xf32>, vector<8x32xf32>, vector<8x32xf32>, vector<8x32xf32>, vector<8x32xf32>, vector<8x32xf32>, vector<8x32xf32>, vector<8x32xf32> -> vector<64x32xf32>
    %cst_83 = arith.constant dense<0.000000e+00> : vector<64x128xf32>
    %283 = tpu.matmul %282, %14, %cst_83 {dimension_numbers = #tpu.dot_dimension_numbers<[1], [0], [0], [1], [0, 0, 1, 1], [], []>} : vector<64x32xf32>, vector<32x128xf32>, vector<64x128xf32> -> vector<64x128xf32>
    %284 = vector.broadcast %17 : vector<1x128xf32> to vector<64x128xf32>
    %285 = arith.addf %283, %284 : vector<64x128xf32>
    %286 = vector.shape_cast %285 : vector<64x128xf32> to vector<8x8x128xf32>
    %cst_84 = arith.constant 0.000000e+00 : f32
    %287 = vector.broadcast %cst_84 : f32 to vector<8x32xf32>
    %cst_85 = arith.constant 0.000000e+00 : f32
    %288 = vector.broadcast %cst_85 : f32 to vector<8x32xf32>
    %289 = vector.extract_strided_slice %286 {offsets = [0, 0, 0], sizes = [1, 8, 128], strides = [1, 1, 1]} : vector<8x8x128xf32> to vector<1x8x128xf32>
    %290 = vector.shape_cast %289 : vector<1x8x128xf32> to vector<8x128xf32>
    %cst_86 = arith.constant dense<0.000000e+00> : vector<8x128xf32>
    %291 = tpu.matmul %287, %15, %cst_86 {dimension_numbers = #tpu.dot_dimension_numbers<[1], [0], [0], [1], [0, 0, 1, 1], [], []>} : vector<8x32xf32>, vector<32x128xf32>, vector<8x128xf32> -> vector<8x128xf32>
    %292 = arith.addf %290, %291 : vector<8x128xf32>
    %293 = arith.negf %292 : vector<8x128xf32>
    %294 = math.exp %293 : vector<8x128xf32>
    %cst_87 = arith.constant 1.000000e+00 : f32
    %295 = vector.broadcast %cst_87 : f32 to vector<8x128xf32>
    %296 = arith.addf %295, %294 : vector<8x128xf32>
    %297 = arith.divf %295, %296 : vector<8x128xf32>
    %298 = vector.extract_strided_slice %297 {offsets = [0, 0], sizes = [8, 32], strides = [1, 1]} : vector<8x128xf32> to vector<8x32xf32>
    %299 = vector.extract_strided_slice %297 {offsets = [0, 32], sizes = [8, 32], strides = [1, 1]} : vector<8x128xf32> to vector<8x32xf32>
    %300 = vector.extract_strided_slice %297 {offsets = [0, 64], sizes = [8, 32], strides = [1, 1]} : vector<8x128xf32> to vector<8x32xf32>
    %cst_88 = arith.constant 2.000000e+00 : f32
    %301 = vector.broadcast %cst_88 : f32 to vector<8x32xf32>
    %302 = arith.mulf %301, %300 : vector<8x32xf32>
    %cst_89 = arith.constant 1.000000e+00 : f32
    %303 = vector.broadcast %cst_89 : f32 to vector<8x32xf32>
    %304 = arith.subf %302, %303 : vector<8x32xf32>
    %305 = vector.extract_strided_slice %297 {offsets = [0, 96], sizes = [8, 32], strides = [1, 1]} : vector<8x128xf32> to vector<8x32xf32>
    %306 = arith.mulf %299, %288 : vector<8x32xf32>
    %307 = arith.mulf %298, %304 : vector<8x32xf32>
    %308 = arith.addf %306, %307 : vector<8x32xf32>
    %cst_90 = arith.constant 2.000000e+00 : f32
    %309 = vector.broadcast %cst_90 : f32 to vector<8x32xf32>
    %310 = arith.mulf %309, %308 : vector<8x32xf32>
    %311 = arith.negf %310 : vector<8x32xf32>
    %312 = math.exp %311 : vector<8x32xf32>
    %cst_91 = arith.constant 1.000000e+00 : f32
    %313 = vector.broadcast %cst_91 : f32 to vector<8x32xf32>
    %314 = arith.addf %313, %312 : vector<8x32xf32>
    %315 = arith.divf %313, %314 : vector<8x32xf32>
    %cst_92 = arith.constant 2.000000e+00 : f32
    %316 = vector.broadcast %cst_92 : f32 to vector<8x32xf32>
    %317 = arith.mulf %316, %315 : vector<8x32xf32>
    %cst_93 = arith.constant 1.000000e+00 : f32
    %318 = vector.broadcast %cst_93 : f32 to vector<8x32xf32>
    %319 = arith.subf %317, %318 : vector<8x32xf32>
    %320 = arith.mulf %305, %319 : vector<8x32xf32>
    %321 = vector.extract_strided_slice %286 {offsets = [1, 0, 0], sizes = [1, 8, 128], strides = [1, 1, 1]} : vector<8x8x128xf32> to vector<1x8x128xf32>
    %322 = vector.shape_cast %321 : vector<1x8x128xf32> to vector<8x128xf32>
    %cst_94 = arith.constant dense<0.000000e+00> : vector<8x128xf32>
    %323 = tpu.matmul %320, %15, %cst_94 {dimension_numbers = #tpu.dot_dimension_numbers<[1], [0], [0], [1], [0, 0, 1, 1], [], []>} : vector<8x32xf32>, vector<32x128xf32>, vector<8x128xf32> -> vector<8x128xf32>
    %324 = arith.addf %322, %323 : vector<8x128xf32>
    %325 = arith.negf %324 : vector<8x128xf32>
    %326 = math.exp %325 : vector<8x128xf32>
    %cst_95 = arith.constant 1.000000e+00 : f32
    %327 = vector.broadcast %cst_95 : f32 to vector<8x128xf32>
    %328 = arith.addf %327, %326 : vector<8x128xf32>
    %329 = arith.divf %327, %328 : vector<8x128xf32>
    %330 = vector.extract_strided_slice %329 {offsets = [0, 0], sizes = [8, 32], strides = [1, 1]} : vector<8x128xf32> to vector<8x32xf32>
    %331 = vector.extract_strided_slice %329 {offsets = [0, 32], sizes = [8, 32], strides = [1, 1]} : vector<8x128xf32> to vector<8x32xf32>
    %332 = vector.extract_strided_slice %329 {offsets = [0, 64], sizes = [8, 32], strides = [1, 1]} : vector<8x128xf32> to vector<8x32xf32>
    %cst_96 = arith.constant 2.000000e+00 : f32
    %333 = vector.broadcast %cst_96 : f32 to vector<8x32xf32>
    %334 = arith.mulf %333, %332 : vector<8x32xf32>
    %cst_97 = arith.constant 1.000000e+00 : f32
    %335 = vector.broadcast %cst_97 : f32 to vector<8x32xf32>
    %336 = arith.subf %334, %335 : vector<8x32xf32>
    %337 = vector.extract_strided_slice %329 {offsets = [0, 96], sizes = [8, 32], strides = [1, 1]} : vector<8x128xf32> to vector<8x32xf32>
    %338 = arith.mulf %331, %308 : vector<8x32xf32>
    %339 = arith.mulf %330, %336 : vector<8x32xf32>
    %340 = arith.addf %338, %339 : vector<8x32xf32>
    %cst_98 = arith.constant 2.000000e+00 : f32
    %341 = vector.broadcast %cst_98 : f32 to vector<8x32xf32>
    %342 = arith.mulf %341, %340 : vector<8x32xf32>
    %343 = arith.negf %342 : vector<8x32xf32>
    %344 = math.exp %343 : vector<8x32xf32>
    %cst_99 = arith.constant 1.000000e+00 : f32
    %345 = vector.broadcast %cst_99 : f32 to vector<8x32xf32>
    %346 = arith.addf %345, %344 : vector<8x32xf32>
    %347 = arith.divf %345, %346 : vector<8x32xf32>
    %cst_100 = arith.constant 2.000000e+00 : f32
    %348 = vector.broadcast %cst_100 : f32 to vector<8x32xf32>
    %349 = arith.mulf %348, %347 : vector<8x32xf32>
    %cst_101 = arith.constant 1.000000e+00 : f32
    %350 = vector.broadcast %cst_101 : f32 to vector<8x32xf32>
    %351 = arith.subf %349, %350 : vector<8x32xf32>
    %352 = arith.mulf %337, %351 : vector<8x32xf32>
    %353 = vector.extract_strided_slice %286 {offsets = [2, 0, 0], sizes = [1, 8, 128], strides = [1, 1, 1]} : vector<8x8x128xf32> to vector<1x8x128xf32>
    %354 = vector.shape_cast %353 : vector<1x8x128xf32> to vector<8x128xf32>
    %cst_102 = arith.constant dense<0.000000e+00> : vector<8x128xf32>
    %355 = tpu.matmul %352, %15, %cst_102 {dimension_numbers = #tpu.dot_dimension_numbers<[1], [0], [0], [1], [0, 0, 1, 1], [], []>} : vector<8x32xf32>, vector<32x128xf32>, vector<8x128xf32> -> vector<8x128xf32>
    %356 = arith.addf %354, %355 : vector<8x128xf32>
    %357 = arith.negf %356 : vector<8x128xf32>
    %358 = math.exp %357 : vector<8x128xf32>
    %cst_103 = arith.constant 1.000000e+00 : f32
    %359 = vector.broadcast %cst_103 : f32 to vector<8x128xf32>
    %360 = arith.addf %359, %358 : vector<8x128xf32>
    %361 = arith.divf %359, %360 : vector<8x128xf32>
    %362 = vector.extract_strided_slice %361 {offsets = [0, 0], sizes = [8, 32], strides = [1, 1]} : vector<8x128xf32> to vector<8x32xf32>
    %363 = vector.extract_strided_slice %361 {offsets = [0, 32], sizes = [8, 32], strides = [1, 1]} : vector<8x128xf32> to vector<8x32xf32>
    %364 = vector.extract_strided_slice %361 {offsets = [0, 64], sizes = [8, 32], strides = [1, 1]} : vector<8x128xf32> to vector<8x32xf32>
    %cst_104 = arith.constant 2.000000e+00 : f32
    %365 = vector.broadcast %cst_104 : f32 to vector<8x32xf32>
    %366 = arith.mulf %365, %364 : vector<8x32xf32>
    %cst_105 = arith.constant 1.000000e+00 : f32
    %367 = vector.broadcast %cst_105 : f32 to vector<8x32xf32>
    %368 = arith.subf %366, %367 : vector<8x32xf32>
    %369 = vector.extract_strided_slice %361 {offsets = [0, 96], sizes = [8, 32], strides = [1, 1]} : vector<8x128xf32> to vector<8x32xf32>
    %370 = arith.mulf %363, %340 : vector<8x32xf32>
    %371 = arith.mulf %362, %368 : vector<8x32xf32>
    %372 = arith.addf %370, %371 : vector<8x32xf32>
    %cst_106 = arith.constant 2.000000e+00 : f32
    %373 = vector.broadcast %cst_106 : f32 to vector<8x32xf32>
    %374 = arith.mulf %373, %372 : vector<8x32xf32>
    %375 = arith.negf %374 : vector<8x32xf32>
    %376 = math.exp %375 : vector<8x32xf32>
    %cst_107 = arith.constant 1.000000e+00 : f32
    %377 = vector.broadcast %cst_107 : f32 to vector<8x32xf32>
    %378 = arith.addf %377, %376 : vector<8x32xf32>
    %379 = arith.divf %377, %378 : vector<8x32xf32>
    %cst_108 = arith.constant 2.000000e+00 : f32
    %380 = vector.broadcast %cst_108 : f32 to vector<8x32xf32>
    %381 = arith.mulf %380, %379 : vector<8x32xf32>
    %cst_109 = arith.constant 1.000000e+00 : f32
    %382 = vector.broadcast %cst_109 : f32 to vector<8x32xf32>
    %383 = arith.subf %381, %382 : vector<8x32xf32>
    %384 = arith.mulf %369, %383 : vector<8x32xf32>
    %385 = vector.extract_strided_slice %286 {offsets = [3, 0, 0], sizes = [1, 8, 128], strides = [1, 1, 1]} : vector<8x8x128xf32> to vector<1x8x128xf32>
    %386 = vector.shape_cast %385 : vector<1x8x128xf32> to vector<8x128xf32>
    %cst_110 = arith.constant dense<0.000000e+00> : vector<8x128xf32>
    %387 = tpu.matmul %384, %15, %cst_110 {dimension_numbers = #tpu.dot_dimension_numbers<[1], [0], [0], [1], [0, 0, 1, 1], [], []>} : vector<8x32xf32>, vector<32x128xf32>, vector<8x128xf32> -> vector<8x128xf32>
    %388 = arith.addf %386, %387 : vector<8x128xf32>
    %389 = arith.negf %388 : vector<8x128xf32>
    %390 = math.exp %389 : vector<8x128xf32>
    %cst_111 = arith.constant 1.000000e+00 : f32
    %391 = vector.broadcast %cst_111 : f32 to vector<8x128xf32>
    %392 = arith.addf %391, %390 : vector<8x128xf32>
    %393 = arith.divf %391, %392 : vector<8x128xf32>
    %394 = vector.extract_strided_slice %393 {offsets = [0, 0], sizes = [8, 32], strides = [1, 1]} : vector<8x128xf32> to vector<8x32xf32>
    %395 = vector.extract_strided_slice %393 {offsets = [0, 32], sizes = [8, 32], strides = [1, 1]} : vector<8x128xf32> to vector<8x32xf32>
    %396 = vector.extract_strided_slice %393 {offsets = [0, 64], sizes = [8, 32], strides = [1, 1]} : vector<8x128xf32> to vector<8x32xf32>
    %cst_112 = arith.constant 2.000000e+00 : f32
    %397 = vector.broadcast %cst_112 : f32 to vector<8x32xf32>
    %398 = arith.mulf %397, %396 : vector<8x32xf32>
    %cst_113 = arith.constant 1.000000e+00 : f32
    %399 = vector.broadcast %cst_113 : f32 to vector<8x32xf32>
    %400 = arith.subf %398, %399 : vector<8x32xf32>
    %401 = vector.extract_strided_slice %393 {offsets = [0, 96], sizes = [8, 32], strides = [1, 1]} : vector<8x128xf32> to vector<8x32xf32>
    %402 = arith.mulf %395, %372 : vector<8x32xf32>
    %403 = arith.mulf %394, %400 : vector<8x32xf32>
    %404 = arith.addf %402, %403 : vector<8x32xf32>
    %cst_114 = arith.constant 2.000000e+00 : f32
    %405 = vector.broadcast %cst_114 : f32 to vector<8x32xf32>
    %406 = arith.mulf %405, %404 : vector<8x32xf32>
    %407 = arith.negf %406 : vector<8x32xf32>
    %408 = math.exp %407 : vector<8x32xf32>
    %cst_115 = arith.constant 1.000000e+00 : f32
    %409 = vector.broadcast %cst_115 : f32 to vector<8x32xf32>
    %410 = arith.addf %409, %408 : vector<8x32xf32>
    %411 = arith.divf %409, %410 : vector<8x32xf32>
    %cst_116 = arith.constant 2.000000e+00 : f32
    %412 = vector.broadcast %cst_116 : f32 to vector<8x32xf32>
    %413 = arith.mulf %412, %411 : vector<8x32xf32>
    %cst_117 = arith.constant 1.000000e+00 : f32
    %414 = vector.broadcast %cst_117 : f32 to vector<8x32xf32>
    %415 = arith.subf %413, %414 : vector<8x32xf32>
    %416 = arith.mulf %401, %415 : vector<8x32xf32>
    %417 = vector.extract_strided_slice %286 {offsets = [4, 0, 0], sizes = [1, 8, 128], strides = [1, 1, 1]} : vector<8x8x128xf32> to vector<1x8x128xf32>
    %418 = vector.shape_cast %417 : vector<1x8x128xf32> to vector<8x128xf32>
    %cst_118 = arith.constant dense<0.000000e+00> : vector<8x128xf32>
    %419 = tpu.matmul %416, %15, %cst_118 {dimension_numbers = #tpu.dot_dimension_numbers<[1], [0], [0], [1], [0, 0, 1, 1], [], []>} : vector<8x32xf32>, vector<32x128xf32>, vector<8x128xf32> -> vector<8x128xf32>
    %420 = arith.addf %418, %419 : vector<8x128xf32>
    %421 = arith.negf %420 : vector<8x128xf32>
    %422 = math.exp %421 : vector<8x128xf32>
    %cst_119 = arith.constant 1.000000e+00 : f32
    %423 = vector.broadcast %cst_119 : f32 to vector<8x128xf32>
    %424 = arith.addf %423, %422 : vector<8x128xf32>
    %425 = arith.divf %423, %424 : vector<8x128xf32>
    %426 = vector.extract_strided_slice %425 {offsets = [0, 0], sizes = [8, 32], strides = [1, 1]} : vector<8x128xf32> to vector<8x32xf32>
    %427 = vector.extract_strided_slice %425 {offsets = [0, 32], sizes = [8, 32], strides = [1, 1]} : vector<8x128xf32> to vector<8x32xf32>
    %428 = vector.extract_strided_slice %425 {offsets = [0, 64], sizes = [8, 32], strides = [1, 1]} : vector<8x128xf32> to vector<8x32xf32>
    %cst_120 = arith.constant 2.000000e+00 : f32
    %429 = vector.broadcast %cst_120 : f32 to vector<8x32xf32>
    %430 = arith.mulf %429, %428 : vector<8x32xf32>
    %cst_121 = arith.constant 1.000000e+00 : f32
    %431 = vector.broadcast %cst_121 : f32 to vector<8x32xf32>
    %432 = arith.subf %430, %431 : vector<8x32xf32>
    %433 = vector.extract_strided_slice %425 {offsets = [0, 96], sizes = [8, 32], strides = [1, 1]} : vector<8x128xf32> to vector<8x32xf32>
    %434 = arith.mulf %427, %404 : vector<8x32xf32>
    %435 = arith.mulf %426, %432 : vector<8x32xf32>
    %436 = arith.addf %434, %435 : vector<8x32xf32>
    %cst_122 = arith.constant 2.000000e+00 : f32
    %437 = vector.broadcast %cst_122 : f32 to vector<8x32xf32>
    %438 = arith.mulf %437, %436 : vector<8x32xf32>
    %439 = arith.negf %438 : vector<8x32xf32>
    %440 = math.exp %439 : vector<8x32xf32>
    %cst_123 = arith.constant 1.000000e+00 : f32
    %441 = vector.broadcast %cst_123 : f32 to vector<8x32xf32>
    %442 = arith.addf %441, %440 : vector<8x32xf32>
    %443 = arith.divf %441, %442 : vector<8x32xf32>
    %cst_124 = arith.constant 2.000000e+00 : f32
    %444 = vector.broadcast %cst_124 : f32 to vector<8x32xf32>
    %445 = arith.mulf %444, %443 : vector<8x32xf32>
    %cst_125 = arith.constant 1.000000e+00 : f32
    %446 = vector.broadcast %cst_125 : f32 to vector<8x32xf32>
    %447 = arith.subf %445, %446 : vector<8x32xf32>
    %448 = arith.mulf %433, %447 : vector<8x32xf32>
    %449 = vector.extract_strided_slice %286 {offsets = [5, 0, 0], sizes = [1, 8, 128], strides = [1, 1, 1]} : vector<8x8x128xf32> to vector<1x8x128xf32>
    %450 = vector.shape_cast %449 : vector<1x8x128xf32> to vector<8x128xf32>
    %cst_126 = arith.constant dense<0.000000e+00> : vector<8x128xf32>
    %451 = tpu.matmul %448, %15, %cst_126 {dimension_numbers = #tpu.dot_dimension_numbers<[1], [0], [0], [1], [0, 0, 1, 1], [], []>} : vector<8x32xf32>, vector<32x128xf32>, vector<8x128xf32> -> vector<8x128xf32>
    %452 = arith.addf %450, %451 : vector<8x128xf32>
    %453 = arith.negf %452 : vector<8x128xf32>
    %454 = math.exp %453 : vector<8x128xf32>
    %cst_127 = arith.constant 1.000000e+00 : f32
    %455 = vector.broadcast %cst_127 : f32 to vector<8x128xf32>
    %456 = arith.addf %455, %454 : vector<8x128xf32>
    %457 = arith.divf %455, %456 : vector<8x128xf32>
    %458 = vector.extract_strided_slice %457 {offsets = [0, 0], sizes = [8, 32], strides = [1, 1]} : vector<8x128xf32> to vector<8x32xf32>
    %459 = vector.extract_strided_slice %457 {offsets = [0, 32], sizes = [8, 32], strides = [1, 1]} : vector<8x128xf32> to vector<8x32xf32>
    %460 = vector.extract_strided_slice %457 {offsets = [0, 64], sizes = [8, 32], strides = [1, 1]} : vector<8x128xf32> to vector<8x32xf32>
    %cst_128 = arith.constant 2.000000e+00 : f32
    %461 = vector.broadcast %cst_128 : f32 to vector<8x32xf32>
    %462 = arith.mulf %461, %460 : vector<8x32xf32>
    %cst_129 = arith.constant 1.000000e+00 : f32
    %463 = vector.broadcast %cst_129 : f32 to vector<8x32xf32>
    %464 = arith.subf %462, %463 : vector<8x32xf32>
    %465 = vector.extract_strided_slice %457 {offsets = [0, 96], sizes = [8, 32], strides = [1, 1]} : vector<8x128xf32> to vector<8x32xf32>
    %466 = arith.mulf %459, %436 : vector<8x32xf32>
    %467 = arith.mulf %458, %464 : vector<8x32xf32>
    %468 = arith.addf %466, %467 : vector<8x32xf32>
    %cst_130 = arith.constant 2.000000e+00 : f32
    %469 = vector.broadcast %cst_130 : f32 to vector<8x32xf32>
    %470 = arith.mulf %469, %468 : vector<8x32xf32>
    %471 = arith.negf %470 : vector<8x32xf32>
    %472 = math.exp %471 : vector<8x32xf32>
    %cst_131 = arith.constant 1.000000e+00 : f32
    %473 = vector.broadcast %cst_131 : f32 to vector<8x32xf32>
    %474 = arith.addf %473, %472 : vector<8x32xf32>
    %475 = arith.divf %473, %474 : vector<8x32xf32>
    %cst_132 = arith.constant 2.000000e+00 : f32
    %476 = vector.broadcast %cst_132 : f32 to vector<8x32xf32>
    %477 = arith.mulf %476, %475 : vector<8x32xf32>
    %cst_133 = arith.constant 1.000000e+00 : f32
    %478 = vector.broadcast %cst_133 : f32 to vector<8x32xf32>
    %479 = arith.subf %477, %478 : vector<8x32xf32>
    %480 = arith.mulf %465, %479 : vector<8x32xf32>
    %481 = vector.extract_strided_slice %286 {offsets = [6, 0, 0], sizes = [1, 8, 128], strides = [1, 1, 1]} : vector<8x8x128xf32> to vector<1x8x128xf32>
    %482 = vector.shape_cast %481 : vector<1x8x128xf32> to vector<8x128xf32>
    %cst_134 = arith.constant dense<0.000000e+00> : vector<8x128xf32>
    %483 = tpu.matmul %480, %15, %cst_134 {dimension_numbers = #tpu.dot_dimension_numbers<[1], [0], [0], [1], [0, 0, 1, 1], [], []>} : vector<8x32xf32>, vector<32x128xf32>, vector<8x128xf32> -> vector<8x128xf32>
    %484 = arith.addf %482, %483 : vector<8x128xf32>
    %485 = arith.negf %484 : vector<8x128xf32>
    %486 = math.exp %485 : vector<8x128xf32>
    %cst_135 = arith.constant 1.000000e+00 : f32
    %487 = vector.broadcast %cst_135 : f32 to vector<8x128xf32>
    %488 = arith.addf %487, %486 : vector<8x128xf32>
    %489 = arith.divf %487, %488 : vector<8x128xf32>
    %490 = vector.extract_strided_slice %489 {offsets = [0, 0], sizes = [8, 32], strides = [1, 1]} : vector<8x128xf32> to vector<8x32xf32>
    %491 = vector.extract_strided_slice %489 {offsets = [0, 32], sizes = [8, 32], strides = [1, 1]} : vector<8x128xf32> to vector<8x32xf32>
    %492 = vector.extract_strided_slice %489 {offsets = [0, 64], sizes = [8, 32], strides = [1, 1]} : vector<8x128xf32> to vector<8x32xf32>
    %cst_136 = arith.constant 2.000000e+00 : f32
    %493 = vector.broadcast %cst_136 : f32 to vector<8x32xf32>
    %494 = arith.mulf %493, %492 : vector<8x32xf32>
    %cst_137 = arith.constant 1.000000e+00 : f32
    %495 = vector.broadcast %cst_137 : f32 to vector<8x32xf32>
    %496 = arith.subf %494, %495 : vector<8x32xf32>
    %497 = vector.extract_strided_slice %489 {offsets = [0, 96], sizes = [8, 32], strides = [1, 1]} : vector<8x128xf32> to vector<8x32xf32>
    %498 = arith.mulf %491, %468 : vector<8x32xf32>
    %499 = arith.mulf %490, %496 : vector<8x32xf32>
    %500 = arith.addf %498, %499 : vector<8x32xf32>
    %cst_138 = arith.constant 2.000000e+00 : f32
    %501 = vector.broadcast %cst_138 : f32 to vector<8x32xf32>
    %502 = arith.mulf %501, %500 : vector<8x32xf32>
    %503 = arith.negf %502 : vector<8x32xf32>
    %504 = math.exp %503 : vector<8x32xf32>
    %cst_139 = arith.constant 1.000000e+00 : f32
    %505 = vector.broadcast %cst_139 : f32 to vector<8x32xf32>
    %506 = arith.addf %505, %504 : vector<8x32xf32>
    %507 = arith.divf %505, %506 : vector<8x32xf32>
    %cst_140 = arith.constant 2.000000e+00 : f32
    %508 = vector.broadcast %cst_140 : f32 to vector<8x32xf32>
    %509 = arith.mulf %508, %507 : vector<8x32xf32>
    %cst_141 = arith.constant 1.000000e+00 : f32
    %510 = vector.broadcast %cst_141 : f32 to vector<8x32xf32>
    %511 = arith.subf %509, %510 : vector<8x32xf32>
    %512 = arith.mulf %497, %511 : vector<8x32xf32>
    %513 = vector.extract_strided_slice %286 {offsets = [7, 0, 0], sizes = [1, 8, 128], strides = [1, 1, 1]} : vector<8x8x128xf32> to vector<1x8x128xf32>
    %514 = vector.shape_cast %513 : vector<1x8x128xf32> to vector<8x128xf32>
    %cst_142 = arith.constant dense<0.000000e+00> : vector<8x128xf32>
    %515 = tpu.matmul %512, %15, %cst_142 {dimension_numbers = #tpu.dot_dimension_numbers<[1], [0], [0], [1], [0, 0, 1, 1], [], []>} : vector<8x32xf32>, vector<32x128xf32>, vector<8x128xf32> -> vector<8x128xf32>
    %516 = arith.addf %514, %515 : vector<8x128xf32>
    %517 = arith.negf %516 : vector<8x128xf32>
    %518 = math.exp %517 : vector<8x128xf32>
    %cst_143 = arith.constant 1.000000e+00 : f32
    %519 = vector.broadcast %cst_143 : f32 to vector<8x128xf32>
    %520 = arith.addf %519, %518 : vector<8x128xf32>
    %521 = arith.divf %519, %520 : vector<8x128xf32>
    %522 = vector.extract_strided_slice %521 {offsets = [0, 0], sizes = [8, 32], strides = [1, 1]} : vector<8x128xf32> to vector<8x32xf32>
    %523 = vector.extract_strided_slice %521 {offsets = [0, 32], sizes = [8, 32], strides = [1, 1]} : vector<8x128xf32> to vector<8x32xf32>
    %524 = vector.extract_strided_slice %521 {offsets = [0, 64], sizes = [8, 32], strides = [1, 1]} : vector<8x128xf32> to vector<8x32xf32>
    %cst_144 = arith.constant 2.000000e+00 : f32
    %525 = vector.broadcast %cst_144 : f32 to vector<8x32xf32>
    %526 = arith.mulf %525, %524 : vector<8x32xf32>
    %cst_145 = arith.constant 1.000000e+00 : f32
    %527 = vector.broadcast %cst_145 : f32 to vector<8x32xf32>
    %528 = arith.subf %526, %527 : vector<8x32xf32>
    %529 = vector.extract_strided_slice %521 {offsets = [0, 96], sizes = [8, 32], strides = [1, 1]} : vector<8x128xf32> to vector<8x32xf32>
    %530 = arith.mulf %523, %500 : vector<8x32xf32>
    %531 = arith.mulf %522, %528 : vector<8x32xf32>
    %532 = arith.addf %530, %531 : vector<8x32xf32>
    %cst_146 = arith.constant 2.000000e+00 : f32
    %533 = vector.broadcast %cst_146 : f32 to vector<8x32xf32>
    %534 = arith.mulf %533, %532 : vector<8x32xf32>
    %535 = arith.negf %534 : vector<8x32xf32>
    %536 = math.exp %535 : vector<8x32xf32>
    %cst_147 = arith.constant 1.000000e+00 : f32
    %537 = vector.broadcast %cst_147 : f32 to vector<8x32xf32>
    %538 = arith.addf %537, %536 : vector<8x32xf32>
    %539 = arith.divf %537, %538 : vector<8x32xf32>
    %cst_148 = arith.constant 2.000000e+00 : f32
    %540 = vector.broadcast %cst_148 : f32 to vector<8x32xf32>
    %541 = arith.mulf %540, %539 : vector<8x32xf32>
    %cst_149 = arith.constant 1.000000e+00 : f32
    %542 = vector.broadcast %cst_149 : f32 to vector<8x32xf32>
    %543 = arith.subf %541, %542 : vector<8x32xf32>
    %544 = arith.mulf %529, %543 : vector<8x32xf32>
    %cst_150 = arith.constant dense<0.000000e+00> : vector<8x1xf32>
    %545 = tpu.matmul %544, %18, %cst_150 {dimension_numbers = #tpu.dot_dimension_numbers<[1], [0], [0], [1], [0, 0, 1, 1], [], []>} : vector<8x32xf32>, vector<32x1xf32>, vector<8x1xf32> -> vector<8x1xf32>
    %546 = vector.broadcast %19 : vector<1x1xf32> to vector<8x1xf32>
    %547 = arith.addf %545, %546 : vector<8x1xf32>
    %548 = arith.negf %547 : vector<8x1xf32>
    %549 = math.exp %548 : vector<8x1xf32>
    %cst_151 = arith.constant 1.000000e+00 : f32
    %550 = vector.broadcast %cst_151 : f32 to vector<8x1xf32>
    %551 = arith.addf %550, %549 : vector<8x1xf32>
    %552 = arith.divf %550, %551 : vector<8x1xf32>
    %c0_152 = arith.constant 0 : index
    %c0_153 = arith.constant 0 : index
    %553 = vector.load %arg5[%c0_152, %c0_153] : memref<8x1xf32, #tpu.memory_space<vmem>>, vector<8x1xf32>
    tpu.vector_store %arg5[%c0_152, %c0_153], %552 {strides = array<i32>} : memref<8x1xf32, #tpu.memory_space<vmem>>, vector<8x1xf32>,
    return
  }
  func.func @transform_0(%arg0: i32) -> (i32, i32, i32) {
    %c0_i32 = arith.constant 0 : i32
    %c0_i32_0 = arith.constant 0 : i32
    %c0_i32_1 = arith.constant 0 : i32
    return %c0_i32, %arg0, %c0_i32_0 : i32, i32, i32
  }
  func.func @transform_1(%arg0: i32) -> (i32, i32) {
    %c0_i32 = arith.constant 0 : i32
    %c0_i32_0 = arith.constant 0 : i32
    %c0_i32_1 = arith.constant 0 : i32
    return %c0_i32, %c0_i32_0 : i32, i32
  }
  func.func @transform_2(%arg0: i32) -> (i32, i32) {
    %c0_i32 = arith.constant 0 : i32
    %c0_i32_0 = arith.constant 0 : i32
    %c0_i32_1 = arith.constant 0 : i32
    return %c0_i32, %c0_i32_0 : i32, i32
  }
  func.func @transform_3(%arg0: i32) -> (i32, i32) {
    %c0_i32 = arith.constant 0 : i32
    %c0_i32_0 = arith.constant 0 : i32
    %c0_i32_1 = arith.constant 0 : i32
    return %c0_i32, %c0_i32_0 : i32, i32
  }
  func.func @transform_4(%arg0: i32) -> (i32, i32) {
    %c0_i32 = arith.constant 0 : i32
    %c0_i32_0 = arith.constant 0 : i32
    return %arg0, %c0_i32 : i32, i32
  }
}

</mosaic_0001>

<llo_original>
// kernel: cnn_lstm_sigmoid_forward.1
$region0: #{cnn_lstm_sigmoid_forward.1}
  #allocation0 [shape = 'u32[]', space=smem, size = 0x4, offset = 0x4, fixed_abs, tag = 'smem constant byte address 0x4 - core index']
  #allocation1 [shape = 'u32[144,128]{1,0:T(1,128)}', space=vmem, size = 0x12000, scoped, tag = 'internal scratch']
  %s0 = inlined_call_operand.vmem [shape: f32[2,64,12], index: 0, kind: input, shape index: {}]
  %s1 = inlined_call_operand.vmem [shape: f32[13,8], index: 1, kind: input, shape index: {}]
  %s2 = inlined_call_operand.vmem [shape: f32[106,128], index: 2, kind: input, shape index: {}]
  %s3 = inlined_call_operand.vmem [shape: f32[33,1], index: 3, kind: input, shape index: {}]
  %s4 = inlined_call_operand.vmem [shape: f32[8,1], index: 4, kind: output, shape index: {}]
  %s5 = sld [smem:[#allocation0]]
  $region26: #{cnn_lstm_sigmoid_forward.1} parent=0
    _
  %s7 = ssub.s32 1, %s5
  %s8 = scalar_select 0, %s7, %s5
  // Predicated region
  $region2: #{cnn_lstm_sigmoid_forward.1} parent=0 // pred_check
    _
  $region3: #{cnn_lstm_sigmoid_forward.1} parent=0 // pred_check_branch
    %10 = sbr.rel (0) target = $region5
  $region4: #{cnn_lstm_sigmoid_forward.1} parent=0 // pred_region
    _
  $region5: #{cnn_lstm_sigmoid_forward.1} parent=0 // pred_fallthru
    _
  // Predicated region
  $region6: #{cnn_lstm_sigmoid_forward.1} parent=0 // pred_check
    _
  $region7: #{cnn_lstm_sigmoid_forward.1} parent=0 // pred_check_branch
    %12 = sbr.rel (0) target = $region9
  $region8: #{cnn_lstm_sigmoid_forward.1} parent=0 // pred_region
    _
  $region9: #{cnn_lstm_sigmoid_forward.1} parent=0 // pred_fallthru
    _
  // Predicated region
  $region10: #{cnn_lstm_sigmoid_forward.1} parent=0 // pred_check
    _
  $region11: #{cnn_lstm_sigmoid_forward.1} parent=0 // pred_check_branch
    %14 = sbr.rel (0) target = $region13
  $region12: #{cnn_lstm_sigmoid_forward.1} parent=0 // pred_region
    _
  $region13: #{cnn_lstm_sigmoid_forward.1} parent=0 // pred_fallthru
    _
  // Predicated region
  $region14: #{cnn_lstm_sigmoid_forward.1} parent=0 // pred_check
    _
  $region15: #{cnn_lstm_sigmoid_forward.1} parent=0 // pred_check_branch
    %16 = sbr.rel (0) target = $region17
  $region16: #{cnn_lstm_sigmoid_forward.1} parent=0 // pred_region
    _
  $region17: #{cnn_lstm_sigmoid_forward.1} parent=0 // pred_fallthru
    _
  %v17 = vld [vmem:[%s0] sm:$0xff]
  %v18 = vld [vmem:[%s0 + $0x8] sm:$0xff]
  %v19 = vld [vmem:[%s0 + $0x10] sm:$0xff]
  %v20 = vld [vmem:[%s0 + $0x18] sm:$0xff]
  %v21 = vld [vmem:[%s0 + $0x20] sm:$0xff]
  %v22 = vld [vmem:[%s0 + $0x28] sm:$0xff]
  %v23 = vld [vmem:[%s0 + $0x30] sm:$0xff]
  %v24 = vld [vmem:[%s0 + $0x38] sm:$0xff]
  %v25 = vld [vmem:[%s0 + $0x40] sm:$0xff]
  %v26 = vld [vmem:[%s0 + $0x48] sm:$0xff]
  %v27 = vld [vmem:[%s0 + $0x50] sm:$0xff]
  %v28 = vld [vmem:[%s0 + $0x58] sm:$0xff]
  %v29 = vld [vmem:[%s0 + $0x60] sm:$0xff]
  %v30 = vld [vmem:[%s0 + $0x68] sm:$0xff]
  %v31 = vld [vmem:[%s0 + $0x70] sm:$0xff]
  %v32 = vld [vmem:[%s0 + $0x78] sm:$0xff]
  %v33 = vld [vmem:[%s1] sm:$0xff]
  %v34 = vld [vmem:[%s1 + $0x8] sm:$0xf]
  %v35 = vld [vmem:[%s1 + $0xc] sm:$0x1]
  %v36 = vlaneseq
  %v37 = vshrl.u32 %v36, 7
  %v38 = vsub.s32 0, %v37
  %v39 = vrot.slane %v35, %v38
  %vm40 = vcmask 97280
  %v42 = vsel %vm40, %v17, 0
  %v45 = vsel %vm40, %v18, 0
  %v48 = vsel %vm40, %v19, 0
  %v51 = vsel %vm40, %v20, 0
  %v54 = vsel %vm40, %v21, 0
  %v57 = vsel %vm40, %v22, 0
  %v60 = vsel %vm40, %v23, 0
  %v63 = vsel %vm40, %v24, 0
  %v66 = vsel %vm40, %v25, 0
  %v69 = vsel %vm40, %v26, 0
  %v72 = vsel %vm40, %v27, 0
  %v75 = vsel %vm40, %v28, 0
  %v78 = vsel %vm40, %v29, 0
  %v81 = vsel %vm40, %v30, 0
  %v84 = vsel %vm40, %v31, 0
  %v87 = vsel %vm40, %v32, 0
  %vm89 = vcmask 1043456
  %v91 = vsel %vm89, %v34, 0
  %93 = vmatprep.subr.mxu0 0.0
  %94 = vmatpush1.msra.mxu0 0.0
  %95 = vmatprep.subr.mxu0 0.0
  %96 = vmatpush1.msra.mxu0 0.0
  %97 = vmatprep.subr.mxu0 0.0
  %98 = vmatpush1.msra.mxu0 0.0
  %99 = vmatprep.subr.mxu0 0.0
  %100 = vmatpush1.msra.mxu0 0.0
  %101 = vmatprep.subr.mxu0 0.0
  %102 = vmatpush1.msra.mxu0 0.0
  %103 = vmatprep.subr.mxu0 0.0
  %104 = vmatpush1.msra.mxu0 0.0
  %105 = vmatprep.subr.mxu0 0.0
  %106 = vmatpush1.msra.mxu0 0.0
  %107 = vmatprep.subr.mxu0 0.0
  %108 = vmatpush1.msra.mxu0 0.0
  %109 = vmatprep.subr.mxu0 0.0
  %110 = vmatpush1.msra.mxu0 0.0
  %111 = vmatprep.subr.mxu0 0.0
  %112 = vmatpush1.msra.mxu0 0.0
  %113 = vmatprep.subr.mxu0 0.0
  %114 = vmatpush1.msra.mxu0 0.0
  %115 = vmatprep.subr.mxu0 0.0
  %116 = vmatpush1.msra.mxu0 0.0
  %117 = vmatprep.subr.mxu0 0.0
  %118 = vmatpush1.msra.mxu0 0.0
  %119 = vmatprep.subr.mxu0 0.0
  %120 = vmatpush1.msra.mxu0 0.0
  %121 = vmatprep.subr.mxu0 0.0
  %122 = vmatpush1.msra.mxu0 %v91
  %123 = vmatprep.subr.mxu0 0.0
  %124 = vmatpush1.msra.mxu0 %v33
  %125 = vmatprep.subr.mxu0 0.0
  %126 = vmatpush2.msra.mxu0 0.0
  %127 = vmatprep.subr.mxu0 0.0
  %128 = vmatpush2.msra.mxu0 0.0
  %129 = vmatprep.subr.mxu0 0.0
  %130 = vmatpush2.msra.mxu0 0.0
  %131 = vmatprep.subr.mxu0 0.0
  %132 = vmatpush2.msra.mxu0 0.0
  %133 = vmatprep.subr.mxu0 0.0
  %134 = vmatpush2.msra.mxu0 0.0
  %135 = vmatprep.subr.mxu0 0.0
  %136 = vmatpush2.msra.mxu0 0.0
  %137 = vmatprep.subr.mxu0 0.0
  %138 = vmatpush2.msra.mxu0 0.0
  %139 = vmatprep.subr.mxu0 0.0
  %140 = vmatpush2.msra.mxu0 0.0
  %141 = vmatprep.subr.mxu0 0.0
  %142 = vmatpush2.msra.mxu0 0.0
  %143 = vmatprep.subr.mxu0 0.0
  %144 = vmatpush2.msra.mxu0 0.0
  %145 = vmatprep.subr.mxu0 0.0
  %146 = vmatpush2.msra.mxu0 0.0
  %147 = vmatprep.subr.mxu0 0.0
  %148 = vmatpush2.msra.mxu0 0.0
  %149 = vmatprep.subr.mxu0 0.0
  %150 = vmatpush2.msra.mxu0 0.0
  %151 = vmatprep.subr.mxu0 0.0
  %152 = vmatpush2.msra.mxu0 0.0
  %153 = vmatprep.subr.mxu0 0.0
  %154 = vmatpush2.msra.mxu0 0.0
  %155 = vmatprep.subr.mxu0 0.0
  %156 = vmatpush2.msra.mxu0 0.0
  %157 = vmatprep.mubr.f32.mxu0 0.0
  %158 = vmatmul.mubr.f32.gmra.mxu0 %v42
  %v159 = vpop.f32.mrf.mxu0
  %v160 = vadd.f32 %v39, %v159
  %v161 = vpop.f32.mrf.mxu0
  %162 = vmatprep.mubr.f32.mxu0 0.0
  %163 = vmatmul.mubr.f32.gmra.mxu0 %v45
  %v164 = vpop.f32.mrf.mxu0
  %v165 = vadd.f32 %v39, %v164
  %v166 = vpop.f32.mrf.mxu0
  %167 = vmatprep.mubr.f32.mxu0 0.0
  %168 = vmatmul.mubr.f32.gmra.mxu0 %v48
  %v169 = vpop.f32.mrf.mxu0
  %v170 = vadd.f32 %v39, %v169
  %v171 = vpop.f32.mrf.mxu0
  %172 = vmatprep.mubr.f32.mxu0 0.0
  %173 = vmatmul.mubr.f32.gmra.mxu0 %v51
  %v174 = vpop.f32.mrf.mxu0
  %v175 = vadd.f32 %v39, %v174
  %v176 = vpop.f32.mrf.mxu0
  %177 = vmatprep.mubr.f32.mxu0 0.0
  %178 = vmatmul.mubr.f32.gmra.mxu0 %v54
  %v179 = vpop.f32.mrf.mxu0
  %v180 = vadd.f32 %v39, %v179
  %v181 = vpop.f32.mrf.mxu0
  %182 = vmatprep.mubr.f32.mxu0 0.0
  %183 = vmatmul.mubr.f32.gmra.mxu0 %v57
  %v184 = vpop.f32.mrf.mxu0
  %v185 = vadd.f32 %v39, %v184
  %v186 = vpop.f32.mrf.mxu0
  %187 = vmatprep.mubr.f32.mxu0 0.0
  %188 = vmatmul.mubr.f32.gmra.mxu0 %v60
  %v189 = vpop.f32.mrf.mxu0
  %v190 = vadd.f32 %v39, %v189
  %v191 = vpop.f32.mrf.mxu0
  %192 = vmatprep.mubr.f32.mxu0 0.0
  %193 = vmatmul.mubr.f32.gmra.mxu0 %v63
  %v194 = vpop.f32.mrf.mxu0
  %v195 = vadd.f32 %v39, %v194
  %v196 = vpop.f32.mrf.mxu0
  %197 = vmatprep.mubr.f32.mxu0 0.0
  %198 = vmatmul.mubr.f32.gmra.mxu0 %v66
  %v199 = vpop.f32.mrf.mxu0
  %v200 = vadd.f32 %v39, %v199
  %v201 = vpop.f32.mrf.mxu0
  %202 = vmatprep.mubr.f32.mxu0 0.0
  %203 = vmatmul.mubr.f32.gmra.mxu0 %v69
  %v204 = vpop.f32.mrf.mxu0
  %v205 = vadd.f32 %v39, %v204
  %v206 = vpop.f32.mrf.mxu0
  %207 = vmatprep.mubr.f32.mxu0 0.0
  %208 = vmatmul.mubr.f32.gmra.mxu0 %v72
  %v209 = vpop.f32.mrf.mxu0
  %v210 = vadd.f32 %v39, %v209
  %v211 = vpop.f32.mrf.mxu0
  %212 = vmatprep.mubr.f32.mxu0 0.0
  %213 = vmatmul.mubr.f32.gmra.mxu0 %v75
  %v214 = vpop.f32.mrf.mxu0
  %v215 = vadd.f32 %v39, %v214
  %v216 = vpop.f32.mrf.mxu0
  %217 = vmatprep.mubr.f32.mxu0 0.0
  %218 = vmatmul.mubr.f32.gmra.mxu0 %v78
  %v219 = vpop.f32.mrf.mxu0
  %v220 = vadd.f32 %v39, %v219
  %v221 = vpop.f32.mrf.mxu0
  %222 = vmatprep.mubr.f32.mxu0 0.0
  %223 = vmatmul.mubr.f32.gmra.mxu0 %v81
  %v224 = vpop.f32.mrf.mxu0
  %v225 = vadd.f32 %v39, %v224
  %v226 = vpop.f32.mrf.mxu0
  %227 = vmatprep.mubr.f32.mxu0 0.0
  %228 = vmatmul.mubr.f32.gmra.mxu0 %v84
  %v229 = vpop.f32.mrf.mxu0
  %v230 = vadd.f32 %v39, %v229
  %v231 = vpop.f32.mrf.mxu0
  %232 = vmatprep.mubr.f32.mxu0 0.0
  %233 = vmatmul.mubr.f32.gmra.mxu0 %v87
  %v234 = vpop.f32.mrf.mxu0
  %v235 = vadd.f32 %v39, %v234
  %v236 = vpop.f32.mrf.mxu0
  %237 = vdwg.mxu0
  %v238 = vmax.f32 %v160, 0.0
  %v239 = vmax.f32 %v165, 0.0
  %v240 = vmax.f32 %v170, 0.0
  %v241 = vmax.f32 %v175, 0.0
  %v242 = vmax.f32 %v180, 0.0
  %v243 = vmax.f32 %v185, 0.0
  %v244 = vmax.f32 %v190, 0.0
  %v245 = vmax.f32 %v195, 0.0
  %v246 = vmax.f32 %v200, 0.0
  %v247 = vmax.f32 %v205, 0.0
  %v248 = vmax.f32 %v210, 0.0
  %v249 = vmax.f32 %v215, 0.0
  %v250 = vmax.f32 %v220, 0.0
  %v251 = vmax.f32 %v225, 0.0
  %v252 = vmax.f32 %v230, 0.0
  %v253 = vmax.f32 %v235, 0.0
  %v254 = vmax.f32 %v238, %v246
  %v255 = vmax.f32 %v239, %v247
  %v256 = vmax.f32 %v240, %v248
  %v257 = vmax.f32 %v241, %v249
  %v258 = vmax.f32 %v242, %v250
  %v259 = vmax.f32 %v243, %v251
  %v260 = vmax.f32 %v244, %v252
  %v261 = vmax.f32 %v245, %v253
  %v262 = vld [vmem:[%s2] sm:$0xff]
  %v263 = vld [vmem:[%s2 + $0x8] sm:$0xff]
  %v264 = vld [vmem:[%s2 + $0x10] sm:$0xff]
  %v265 = vld [vmem:[%s2 + $0x18] sm:$0xff]
  %v266 = vld [vmem:[%s2 + $0x20] sm:$0xff]
  %v267 = vld [vmem:[%s2 + $0x28] sm:$0xff]
  %v268 = vld [vmem:[%s2 + $0x30] sm:$0xff]
  %v269 = vld [vmem:[%s2 + $0x38] sm:$0xff]
  %v270 = vld [vmem:[%s2 + $0x40] sm:$0xff]
  %v271 = vld [vmem:[%s2 + $0x48] sm:$0xff]
  %v272 = vld [vmem:[%s2 + $0x50] sm:$0xff]
  %v273 = vld [vmem:[%s2 + $0x58] sm:$0xff]
  %v274 = vld [vmem:[%s2 + $0x60] sm:$0xff]
  %v275 = vld [vmem:[%s2 + $0x68] sm:$0x1]
  %v276 = vld [vmem:[%s2 + $0x69] sm:$0x1]
  %v277 = vld [vmem:[%s3] sm:$0xff]
  %v278 = vld [vmem:[%s3 + $0x8] sm:$0xff]
  %v279 = vld [vmem:[%s3 + $0x10] sm:$0xff]
  %v280 = vld [vmem:[%s3 + $0x18] sm:$0xff]
  %v281 = vld [vmem:[%s3 + $0x20] sm:$0x1]
  %v282 = vlaneseq
  %v283 = vshrl.u32 %v282, 7
  %v284 = vsub.s32 0, %v283
  %v285 = vrot.slane %v275, %v284
  %vm286 = vcmask 64512
  %v288 = vsel %vm286, %v254, 0
  %v291 = vsel %vm286, %v255, 0
  %v294 = vsel %vm286, %v256, 0
  %v297 = vsel %vm286, %v257, 0
  %v300 = vsel %vm286, %v258, 0
  %v303 = vsel %vm286, %v259, 0
  %v306 = vsel %vm286, %v260, 0
  %v309 = vsel %vm286, %v261, 0
  %311 = vmatprep.subr.mxu0 0.0
  %312 = vmatpush1.msra.mxu0 0.0
  %313 = vmatprep.subr.mxu0 0.0
  %314 = vmatpush1.msra.mxu0 0.0
  %315 = vmatprep.subr.mxu0 0.0
  %316 = vmatpush1.msra.mxu0 0.0
  %317 = vmatprep.subr.mxu0 0.0
  %318 = vmatpush1.msra.mxu0 0.0
  %319 = vmatprep.subr.mxu0 0.0
  %320 = vmatpush1.msra.mxu0 0.0
  %321 = vmatprep.subr.mxu0 0.0
  %322 = vmatpush1.msra.mxu0 0.0
  %323 = vmatprep.subr.mxu0 0.0
  %324 = vmatpush1.msra.mxu0 0.0
  %325 = vmatprep.subr.mxu0 0.0
  %326 = vmatpush1.msra.mxu0 0.0
  %327 = vmatprep.subr.mxu0 0.0
  %328 = vmatpush1.msra.mxu0 0.0
  %329 = vmatprep.subr.mxu0 0.0
  %330 = vmatpush1.msra.mxu0 0.0
  %331 = vmatprep.subr.mxu0 0.0
  %332 = vmatpush1.msra.mxu0 0.0
  %333 = vmatprep.subr.mxu0 0.0
  %334 = vmatpush1.msra.mxu0 0.0
  %335 = vmatprep.subr.mxu0 0.0
  %336 = vmatpush1.msra.mxu0 0.0
  %337 = vmatprep.subr.mxu0 0.0
  %338 = vmatpush1.msra.mxu0 0.0
  %339 = vmatprep.subr.mxu0 0.0
  %340 = vmatpush1.msra.mxu0 0.0
  %341 = vmatprep.subr.mxu0 0.0
  %342 = vmatpush1.msra.mxu0 %v262
  %343 = vmatprep.subr.mxu0 0.0
  %344 = vmatpush2.msra.mxu0 0.0
  %345 = vmatprep.subr.mxu0 0.0
  %346 = vmatpush2.msra.mxu0 0.0
  %347 = vmatprep.subr.mxu0 0.0
  %348 = vmatpush2.msra.mxu0 0.0
  %349 = vmatprep.subr.mxu0 0.0
  %350 = vmatpush2.msra.mxu0 0.0
  %351 = vmatprep.subr.mxu0 0.0
  %352 = vmatpush2.msra.mxu0 0.0
  %353 = vmatprep.subr.mxu0 0.0
  %354 = vmatpush2.msra.mxu0 0.0
  %355 = vmatprep.subr.mxu0 0.0
  %356 = vmatpush2.msra.mxu0 0.0
  %357 = vmatprep.subr.mxu0 0.0
  %358 = vmatpush2.msra.mxu0 0.0
  %359 = vmatprep.subr.mxu0 0.0
  %360 = vmatpush2.msra.mxu0 0.0
  %361 = vmatprep.subr.mxu0 0.0
  %362 = vmatpush2.msra.mxu0 0.0
  %363 = vmatprep.subr.mxu0 0.0
  %364 = vmatpush2.msra.mxu0 0.0
  %365 = vmatprep.subr.mxu0 0.0
  %366 = vmatpush2.msra.mxu0 0.0
  %367 = vmatprep.subr.mxu0 0.0
  %368 = vmatpush2.msra.mxu0 0.0
  %369 = vmatprep.subr.mxu0 0.0
  %370 = vmatpush2.msra.mxu0 0.0
  %371 = vmatprep.subr.mxu0 0.0
  %372 = vmatpush2.msra.mxu0 0.0
  %373 = vmatprep.subr.mxu0 0.0
  %374 = vmatpush2.msra.mxu0 0.0
  %375 = vmatprep.mubr.f32.mxu0 0.0
  %376 = vmatmul.mubr.f32.gmra.mxu0 %v288
  %v377 = vpop.f32.mrf.mxu0
  %v378 = vadd.f32 %v285, %v377
  %v379 = vpop.f32.mrf.mxu0
  %380 = vmatprep.mubr.f32.mxu0 0.0
  %381 = vmatmul.mubr.f32.gmra.mxu0 %v291
  %v382 = vpop.f32.mrf.mxu0
  %v383 = vadd.f32 %v285, %v382
  %v384 = vpop.f32.mrf.mxu0
  %385 = vmatprep.mubr.f32.mxu0 0.0
  %386 = vmatmul.mubr.f32.gmra.mxu0 %v294
  %v387 = vpop.f32.mrf.mxu0
  %v388 = vadd.f32 %v285, %v387
  %v389 = vpop.f32.mrf.mxu0
  %390 = vmatprep.mubr.f32.mxu0 0.0
  %391 = vmatmul.mubr.f32.gmra.mxu0 %v297
  %v392 = vpop.f32.mrf.mxu0
  %v393 = vadd.f32 %v285, %v392
  %v394 = vpop.f32.mrf.mxu0
  %395 = vmatprep.mubr.f32.mxu0 0.0
  %396 = vmatmul.mubr.f32.gmra.mxu0 %v300
  %v397 = vpop.f32.mrf.mxu0
  %v398 = vadd.f32 %v285, %v397
  %v399 = vpop.f32.mrf.mxu0
  %400 = vmatprep.mubr.f32.mxu0 0.0
  %401 = vmatmul.mubr.f32.gmra.mxu0 %v303
  %v402 = vpop.f32.mrf.mxu0
  %v403 = vadd.f32 %v285, %v402
  %v404 = vpop.f32.mrf.mxu0
  %405 = vmatprep.mubr.f32.mxu0 0.0
  %406 = vmatmul.mubr.f32.gmra.mxu0 %v306
  %v407 = vpop.f32.mrf.mxu0
  %v408 = vadd.f32 %v285, %v407
  %v409 = vpop.f32.mrf.mxu0
  %410 = vmatprep.mubr.f32.mxu0 0.0
  %411 = vmatmul.mubr.f32.gmra.mxu0 %v309
  %v412 = vpop.f32.mrf.mxu0
  %v413 = vadd.f32 %v285, %v412
  %v414 = vpop.f32.mrf.mxu0
  %415 = vdwg.mxu0
  %vm416 = vcmask 261120
  %v418 = vsel %vm416, 0.0, 0
  %420 = vmatprep.subr.mxu0 0.0
  %421 = vmatpush1.msra.mxu0 0.0
  %422 = vmatprep.subr.mxu0 0.0
  %423 = vmatpush1.msra.mxu0 0.0
  %424 = vmatprep.subr.mxu0 0.0
  %425 = vmatpush1.msra.mxu0 0.0
  %426 = vmatprep.subr.mxu0 0.0
  %427 = vmatpush1.msra.mxu0 0.0
  %428 = vmatprep.subr.mxu0 0.0
  %429 = vmatpush1.msra.mxu0 0.0
  %430 = vmatprep.subr.mxu0 0.0
  %431 = vmatpush1.msra.mxu0 0.0
  %432 = vmatprep.subr.mxu0 0.0
  %433 = vmatpush1.msra.mxu0 0.0
  %434 = vmatprep.subr.mxu0 0.0
  %435 = vmatpush1.msra.mxu0 0.0
  %436 = vmatprep.subr.mxu0 0.0
  %437 = vmatpush1.msra.mxu0 0.0
  %438 = vmatprep.subr.mxu0 0.0
  %439 = vmatpush1.msra.mxu0 0.0
  %440 = vmatprep.subr.mxu0 0.0
  %441 = vmatpush1.msra.mxu0 0.0
  %442 = vmatprep.subr.mxu0 0.0
  %443 = vmatpush1.msra.mxu0 0.0
  %444 = vmatprep.subr.mxu0 0.0
  %445 = vmatpush1.msra.mxu0 %v266
  %446 = vmatprep.subr.mxu0 0.0
  %447 = vmatpush1.msra.mxu0 %v265
  %448 = vmatprep.subr.mxu0 0.0
  %449 = vmatpush1.msra.mxu0 %v264
  %450 = vmatprep.subr.mxu0 0.0
  %451 = vmatpush1.msra.mxu0 %v263
  %452 = vmatprep.subr.mxu0 0.0
  %453 = vmatpush2.msra.mxu0 0.0
  %454 = vmatprep.subr.mxu0 0.0
  %455 = vmatpush2.msra.mxu0 0.0
  %456 = vmatprep.subr.mxu0 0.0
  %457 = vmatpush2.msra.mxu0 0.0
  %458 = vmatprep.subr.mxu0 0.0
  %459 = vmatpush2.msra.mxu0 0.0
  %460 = vmatprep.subr.mxu0 0.0
  %461 = vmatpush2.msra.mxu0 0.0
  %462 = vmatprep.subr.mxu0 0.0
  %463 = vmatpush2.msra.mxu0 0.0
  %464 = vmatprep.subr.mxu0 0.0
  %465 = vmatpush2.msra.mxu0 0.0
  %466 = vmatprep.subr.mxu0 0.0
  %467 = vmatpush2.msra.mxu0 0.0
  %468 = vmatprep.subr.mxu0 0.0
  %469 = vmatpush2.msra.mxu0 0.0
  %470 = vmatprep.subr.mxu0 0.0
  %471 = vmatpush2.msra.mxu0 0.0
  %472 = vmatprep.subr.mxu0 0.0
  %473 = vmatpush2.msra.mxu0 0.0
  %474 = vmatprep.subr.mxu0 0.0
  %475 = vmatpush2.msra.mxu0 0.0
  %476 = vmatprep.subr.mxu0 0.0
  %477 = vmatpush2.msra.mxu0 0.0
  %478 = vmatprep.subr.mxu0 0.0
  %479 = vmatpush2.msra.mxu0 0.0
  %480 = vmatprep.subr.mxu0 0.0
  %481 = vmatpush2.msra.mxu0 0.0
  %482 = vmatprep.subr.mxu0 0.0
  %483 = vmatpush2.msra.mxu0 0.0
  %484 = vmatprep.mubr.f32.mxu0 0.0
  %485 = vmatmul.mubr.f32.gmra.mxu0 %v418
  %v486 = vpop.f32.mrf.mxu0
  %v487 = vadd.f32 0.0, %v486
  %v488 = vpop.f32.mrf.mxu0
  %489 = vdwg.mxu0
  %v490 = vadd.f32 %v378, %v487
  %v491 = vxor.u32 %v490, 2147483648
  %v492 = vmul.f32 %v491, 1.442695
  %v493 = vpow.pop %v492
  %v494 = vadd.f32 %v493, 1.0
  %v495 = vrcp.pop %v494
  %v496 = vmul.f32 1.0, %v495
  %v497 = vmul.f32 %v496, 2.0
  %v498 = vsub.f32 %v497, 1.0
  %v499 = vmul.f32 %v496, 0.0
  %501 = vrot.lane.b32.xlu0 %v498, 64
  %v502 = vpop.permute.xlu0 %501
  %v504 = vmul.f32 %v496, %v502
  %506 = vrot.lane.b32.xlu0 %v504, 32
  %v507 = vpop.permute.xlu0 %506
  %v509 = vadd.f32 %v499, %v507
  %v510 = vmul.f32 %v509, 2.0
  %v511 = vxor.u32 %v510, 2147483648
  %v512 = vmul.f32 %v511, 1.442695
  %v513 = vpow.pop %v512
  %v514 = vadd.f32 %v513, 1.0
  %v515 = vrcp.pop %v514
  %v516 = vmul.f32 1.0, %v515
  %v517 = vmul.f32 %v516, 2.0
  %v518 = vsub.f32 %v517, 1.0
  %520 = vrot.lane.b32.xlu0 %v518, 64
  %v521 = vpop.permute.xlu0 %520
  %v523 = vmul.f32 %v496, %v521
  %525 = vrot.lane.b32.xlu0 %v523, 32
  %v526 = vpop.permute.xlu0 %525
  %v527 = vsel %vm416, %v526, 0
  %529 = vmatprep.subr.mxu0 0.0
  %530 = vmatpush1.msra.mxu0 0.0
  %531 = vmatprep.subr.mxu0 0.0
  %532 = vmatpush1.msra.mxu0 0.0
  %533 = vmatprep.subr.mxu0 0.0
  %534 = vmatpush1.msra.mxu0 0.0
  %535 = vmatprep.subr.mxu0 0.0
  %536 = vmatpush1.msra.mxu0 0.0
  %537 = vmatprep.subr.mxu0 0.0
  %538 = vmatpush1.msra.mxu0 0.0
  %539 = vmatprep.subr.mxu0 0.0
  %540 = vmatpush1.msra.mxu0 0.0
  %541 = vmatprep.subr.mxu0 0.0
  %542 = vmatpush1.msra.mxu0 0.0
  %543 = vmatprep.subr.mxu0 0.0
  %544 = vmatpush1.msra.mxu0 0.0
  %545 = vmatprep.subr.mxu0 0.0
  %546 = vmatpush1.msra.mxu0 0.0
  %547 = vmatprep.subr.mxu0 0.0
  %548 = vmatpush1.msra.mxu0 0.0
  %549 = vmatprep.subr.mxu0 0.0
  %550 = vmatpush1.msra.mxu0 0.0
  %551 = vmatprep.subr.mxu0 0.0
  %552 = vmatpush1.msra.mxu0 0.0
  %553 = vmatprep.subr.mxu0 0.0
  %554 = vmatpush1.msra.mxu0 %v266
  %555 = vmatprep.subr.mxu0 0.0
  %556 = vmatpush1.msra.mxu0 %v265
  %557 = vmatprep.subr.mxu0 0.0
  %558 = vmatpush1.msra.mxu0 %v264
  %559 = vmatprep.subr.mxu0 0.0
  %560 = vmatpush1.msra.mxu0 %v263
  %561 = vmatprep.subr.mxu0 0.0
  %562 = vmatpush2.msra.mxu0 0.0
  %563 = vmatprep.subr.mxu0 0.0
  %564 = vmatpush2.msra.mxu0 0.0
  %565 = vmatprep.subr.mxu0 0.0
  %566 = vmatpush2.msra.mxu0 0.0
  %567 = vmatprep.subr.mxu0 0.0
  %568 = vmatpush2.msra.mxu0 0.0
  %569 = vmatprep.subr.mxu0 0.0
  %570 = vmatpush2.msra.mxu0 0.0
  %571 = vmatprep.subr.mxu0 0.0
  %572 = vmatpush2.msra.mxu0 0.0
  %573 = vmatprep.subr.mxu0 0.0
  %574 = vmatpush2.msra.mxu0 0.0
  %575 = vmatprep.subr.mxu0 0.0
  %576 = vmatpush2.msra.mxu0 0.0
  %577 = vmatprep.subr.mxu0 0.0
  %578 = vmatpush2.msra.mxu0 0.0
  %579 = vmatprep.subr.mxu0 0.0
  %580 = vmatpush2.msra.mxu0 0.0
  %581 = vmatprep.subr.mxu0 0.0
  %582 = vmatpush2.msra.mxu0 0.0
  %583 = vmatprep.subr.mxu0 0.0
  %584 = vmatpush2.msra.mxu0 0.0
  %585 = vmatprep.subr.mxu0 0.0
  %586 = vmatpush2.msra.mxu0 0.0
  %587 = vmatprep.subr.mxu0 0.0
  %588 = vmatpush2.msra.mxu0 0.0
  %589 = vmatprep.subr.mxu0 0.0
  %590 = vmatpush2.msra.mxu0 0.0
  %591 = vmatprep.subr.mxu0 0.0
  %592 = vmatpush2.msra.mxu0 0.0
  %593 = vmatprep.mubr.f32.mxu0 0.0
  %594 = vmatmul.mubr.f32.gmra.mxu0 %v527
  %v595 = vpop.f32.mrf.mxu0
  %v596 = vadd.f32 0.0, %v595
  %v597 = vpop.f32.mrf.mxu0
  %598 = vdwg.mxu0
  %v599 = vadd.f32 %v383, %v596
  %v600 = vxor.u32 %v599, 2147483648
  %v601 = vmul.f32 %v600, 1.442695
  %v602 = vpow.pop %v601
  %v603 = vadd.f32 %v602, 1.0
  %v604 = vrcp.pop %v603
  %v605 = vmul.f32 1.0, %v604
  %v606 = vmul.f32 %v605, 2.0
  %v607 = vsub.f32 %v606, 1.0
  %v608 = vmul.f32 %v605, %v509
  %610 = vrot.lane.b32.xlu0 %v607, 64
  %v611 = vpop.permute.xlu0 %610
  %v613 = vmul.f32 %v605, %v611
  %615 = vrot.lane.b32.xlu0 %v613, 32
  %v616 = vpop.permute.xlu0 %615
  %v618 = vadd.f32 %v608, %v616
  %v619 = vmul.f32 %v618, 2.0
  %v620 = vxor.u32 %v619, 2147483648
  %v621 = vmul.f32 %v620, 1.442695
  %v622 = vpow.pop %v621
  %v623 = vadd.f32 %v622, 1.0
  %v624 = vrcp.pop %v623
  %v625 = vmul.f32 1.0, %v624
  %v626 = vmul.f32 %v625, 2.0
  %v627 = vsub.f32 %v626, 1.0
  %629 = vrot.lane.b32.xlu0 %v627, 64
  %v630 = vpop.permute.xlu0 %629
  %v632 = vmul.f32 %v605, %v630
  %634 = vrot.lane.b32.xlu0 %v632, 32
  %v635 = vpop.permute.xlu0 %634
  %v636 = vsel %vm416, %v635, 0
  %638 = vmatprep.subr.mxu0 0.0
  %639 = vmatpush1.msra.mxu0 0.0
  %640 = vmatprep.subr.mxu0 0.0
  %641 = vmatpush1.msra.mxu0 0.0
  %642 = vmatprep.subr.mxu0 0.0
  %643 = vmatpush1.msra.mxu0 0.0
  %644 = vmatprep.subr.mxu0 0.0
  %645 = vmatpush1.msra.mxu0 0.0
  %646 = vmatprep.subr.mxu0 0.0
  %647 = vmatpush1.msra.mxu0 0.0
  %648 = vmatprep.subr.mxu0 0.0
  %649 = vmatpush1.msra.mxu0 0.0
  %650 = vmatprep.subr.mxu0 0.0
  %651 = vmatpush1.msra.mxu0 0.0
  %652 = vmatprep.subr.mxu0 0.0
  %653 = vmatpush1.msra.mxu0 0.0
  %654 = vmatprep.subr.mxu0 0.0
  %655 = vmatpush1.msra.mxu0 0.0
  %656 = vmatprep.subr.mxu0 0.0
  %657 = vmatpush1.msra.mxu0 0.0
  %658 = vmatprep.subr.mxu0 0.0
  %659 = vmatpush1.msra.mxu0 0.0
  %660 = vmatprep.subr.mxu0 0.0
  %661 = vmatpush1.msra.mxu0 0.0
  %662 = vmatprep.subr.mxu0 0.0
  %663 = vmatpush1.msra.mxu0 %v266
  %664 = vmatprep.subr.mxu0 0.0
  %665 = vmatpush1.msra.mxu0 %v265
  %666 = vmatprep.subr.mxu0 0.0
  %667 = vmatpush1.msra.mxu0 %v264
  %668 = vmatprep.subr.mxu0 0.0
  %669 = vmatpush1.msra.mxu0 %v263
  %670 = vmatprep.subr.mxu0 0.0
  %671 = vmatpush2.msra.mxu0 0.0
  %672 = vmatprep.subr.mxu0 0.0
  %673 = vmatpush2.msra.mxu0 0.0
  %674 = vmatprep.subr.mxu0 0.0
  %675 = vmatpush2.msra.mxu0 0.0
  %676 = vmatprep.subr.mxu0 0.0
  %677 = vmatpush2.msra.mxu0 0.0
  %678 = vmatprep.subr.mxu0 0.0
  %679 = vmatpush2.msra.mxu0 0.0
  %680 = vmatprep.subr.mxu0 0.0
  %681 = vmatpush2.msra.mxu0 0.0
  %682 = vmatprep.subr.mxu0 0.0
  %683 = vmatpush2.msra.mxu0 0.0
  %684 = vmatprep.subr.mxu0 0.0
  %685 = vmatpush2.msra.mxu0 0.0
  %686 = vmatprep.subr.mxu0 0.0
  %687 = vmatpush2.msra.mxu0 0.0
  %688 = vmatprep.subr.mxu0 0.0
  %689 = vmatpush2.msra.mxu0 0.0
  %690 = vmatprep.subr.mxu0 0.0
  %691 = vmatpush2.msra.mxu0 0.0
  %692 = vmatprep.subr.mxu0 0.0
  %693 = vmatpush2.msra.mxu0 0.0
  %694 = vmatprep.subr.mxu0 0.0
  %695 = vmatpush2.msra.mxu0 0.0
  %696 = vmatprep.subr.mxu0 0.0
  %697 = vmatpush2.msra.mxu0 0.0
  %698 = vmatprep.subr.mxu0 0.0
  %699 = vmatpush2.msra.mxu0 0.0
  %700 = vmatprep.subr.mxu0 0.0
  %701 = vmatpush2.msra.mxu0 0.0
  %702 = vmatprep.mubr.f32.mxu0 0.0
  %703 = vmatmul.mubr.f32.gmra.mxu0 %v636
  %v704 = vpop.f32.mrf.mxu0
  %v705 = vadd.f32 0.0, %v704
  %v706 = vpop.f32.mrf.mxu0
  %707 = vdwg.mxu0
  %v708 = vadd.f32 %v388, %v705
  %v709 = vxor.u32 %v708, 2147483648
  %v710 = vmul.f32 %v709, 1.442695
  %v711 = vpow.pop %v710
  %v712 = vadd.f32 %v711, 1.0
  %v713 = vrcp.pop %v712
  %v714 = vmul.f32 1.0, %v713
  %v715 = vmul.f32 %v714, 2.0
  %v716 = vsub.f32 %v715, 1.0
  %v717 = vmul.f32 %v714, %v618
  %719 = vrot.lane.b32.xlu0 %v716, 64
  %v720 = vpop.permute.xlu0 %719
  %v722 = vmul.f32 %v714, %v720
  %724 = vrot.lane.b32.xlu0 %v722, 32
  %v725 = vpop.permute.xlu0 %724
  %v727 = vadd.f32 %v717, %v725
  %v728 = vmul.f32 %v727, 2.0
  %v729 = vxor.u32 %v728, 2147483648
  %v730 = vmul.f32 %v729, 1.442695
  %v731 = vpow.pop %v730
  %v732 = vadd.f32 %v731, 1.0
  %v733 = vrcp.pop %v732
  %v734 = vmul.f32 1.0, %v733
  %v735 = vmul.f32 %v734, 2.0
  %v736 = vsub.f32 %v735, 1.0
  %738 = vrot.lane.b32.xlu0 %v736, 64
  %v739 = vpop.permute.xlu0 %738
  %v741 = vmul.f32 %v714, %v739
  %743 = vrot.lane.b32.xlu0 %v741, 32
  %v744 = vpop.permute.xlu0 %743
  %v745 = vsel %vm416, %v744, 0
  %747 = vmatprep.subr.mxu0 0.0
  %748 = vmatpush1.msra.mxu0 0.0
  %749 = vmatprep.subr.mxu0 0.0
  %750 = vmatpush1.msra.mxu0 0.0
  %751 = vmatprep.subr.mxu0 0.0
  %752 = vmatpush1.msra.mxu0 0.0
  %753 = vmatprep.subr.mxu0 0.0
  %754 = vmatpush1.msra.mxu0 0.0
  %755 = vmatprep.subr.mxu0 0.0
  %756 = vmatpush1.msra.mxu0 0.0
  %757 = vmatprep.subr.mxu0 0.0
  %758 = vmatpush1.msra.mxu0 0.0
  %759 = vmatprep.subr.mxu0 0.0
  %760 = vmatpush1.msra.mxu0 0.0
  %761 = vmatprep.subr.mxu0 0.0
  %762 = vmatpush1.msra.mxu0 0.0
  %763 = vmatprep.subr.mxu0 0.0
  %764 = vmatpush1.msra.mxu0 0.0
  %765 = vmatprep.subr.mxu0 0.0
  %766 = vmatpush1.msra.mxu0 0.0
  %767 = vmatprep.subr.mxu0 0.0
  %768 = vmatpush1.msra.mxu0 0.0
  %769 = vmatprep.subr.mxu0 0.0
  %770 = vmatpush1.msra.mxu0 0.0
  %771 = vmatprep.subr.mxu0 0.0
  %772 = vmatpush1.msra.mxu0 %v266
  %773 = vmatprep.subr.mxu0 0.0
  %774 = vmatpush1.msra.mxu0 %v265
  %775 = vmatprep.subr.mxu0 0.0
  %776 = vmatpush1.msra.mxu0 %v264
  %777 = vmatprep.subr.mxu0 0.0
  %778 = vmatpush1.msra.mxu0 %v263
  %779 = vmatprep.subr.mxu0 0.0
  %780 = vmatpush2.msra.mxu0 0.0
  %781 = vmatprep.subr.mxu0 0.0
  %782 = vmatpush2.msra.mxu0 0.0
  %783 = vmatprep.subr.mxu0 0.0
  %784 = vmatpush2.msra.mxu0 0.0
  %785 = vmatprep.subr.mxu0 0.0
  %786 = vmatpush2.msra.mxu0 0.0
  %787 = vmatprep.subr.mxu0 0.0
  %788 = vmatpush2.msra.mxu0 0.0
  %789 = vmatprep.subr.mxu0 0.0
  %790 = vmatpush2.msra.mxu0 0.0
  %791 = vmatprep.subr.mxu0 0.0
  %792 = vmatpush2.msra.mxu0 0.0
  %793 = vmatprep.subr.mxu0 0.0
  %794 = vmatpush2.msra.mxu0 0.0
  %795 = vmatprep.subr.mxu0 0.0
  %796 = vmatpush2.msra.mxu0 0.0
  %797 = vmatprep.subr.mxu0 0.0
  %798 = vmatpush2.msra.mxu0 0.0
  %799 = vmatprep.subr.mxu0 0.0
  %800 = vmatpush2.msra.mxu0 0.0
  %801 = vmatprep.subr.mxu0 0.0
  %802 = vmatpush2.msra.mxu0 0.0
  %803 = vmatprep.subr.mxu0 0.0
  %804 = vmatpush2.msra.mxu0 0.0
  %805 = vmatprep.subr.mxu0 0.0
  %806 = vmatpush2.msra.mxu0 0.0
  %807 = vmatprep.subr.mxu0 0.0
  %808 = vmatpush2.msra.mxu0 0.0
  %809 = vmatprep.subr.mxu0 0.0
  %810 = vmatpush2.msra.mxu0 0.0
  %811 = vmatprep.mubr.f32.mxu0 0.0
  %812 = vmatmul.mubr.f32.gmra.mxu0 %v745
  %v813 = vpop.f32.mrf.mxu0
  %v814 = vadd.f32 0.0, %v813
  %v815 = vpop.f32.mrf.mxu0
  %816 = vdwg.mxu0
  %v817 = vadd.f32 %v393, %v814
  %v818 = vxor.u32 %v817, 2147483648
  %v819 = vmul.f32 %v818, 1.442695
  %v820 = vpow.pop %v819
  %v821 = vadd.f32 %v820, 1.0
  %v822 = vrcp.pop %v821
  %v823 = vmul.f32 1.0, %v822
  %v824 = vmul.f32 %v823, 2.0
  %v825 = vsub.f32 %v824, 1.0
  %v826 = vmul.f32 %v823, %v727
  %828 = vrot.lane.b32.xlu0 %v825, 64
  %v829 = vpop.permute.xlu0 %828
  %v831 = vmul.f32 %v823, %v829
  %833 = vrot.lane.b32.xlu0 %v831, 32
  %v834 = vpop.permute.xlu0 %833
  %v836 = vadd.f32 %v826, %v834
  %v837 = vmul.f32 %v836, 2.0
  %v838 = vxor.u32 %v837, 2147483648
  %v839 = vmul.f32 %v838, 1.442695
  %v840 = vpow.pop %v839
  %v841 = vadd.f32 %v840, 1.0
  %v842 = vrcp.pop %v841
  %v843 = vmul.f32 1.0, %v842
  %v844 = vmul.f32 %v843, 2.0
  %v845 = vsub.f32 %v844, 1.0
  %847 = vrot.lane.b32.xlu0 %v845, 64
  %v848 = vpop.permute.xlu0 %847
  %v850 = vmul.f32 %v823, %v848
  %852 = vrot.lane.b32.xlu0 %v850, 32
  %v853 = vpop.permute.xlu0 %852
  %v854 = vsel %vm416, %v853, 0
  %856 = vmatprep.subr.mxu0 0.0
  %857 = vmatpush1.msra.mxu0 0.0
  %858 = vmatprep.subr.mxu0 0.0
  %859 = vmatpush1.msra.mxu0 0.0
  %860 = vmatprep.subr.mxu0 0.0
  %861 = vmatpush1.msra.mxu0 0.0
  %862 = vmatprep.subr.mxu0 0.0
  %863 = vmatpush1.msra.mxu0 0.0
  %864 = vmatprep.subr.mxu0 0.0
  %865 = vmatpush1.msra.mxu0 0.0
  %866 = vmatprep.subr.mxu0 0.0
  %867 = vmatpush1.msra.mxu0 0.0
  %868 = vmatprep.subr.mxu0 0.0
  %869 = vmatpush1.msra.mxu0 0.0
  %870 = vmatprep.subr.mxu0 0.0
  %871 = vmatpush1.msra.mxu0 0.0
  %872 = vmatprep.subr.mxu0 0.0
  %873 = vmatpush1.msra.mxu0 0.0
  %874 = vmatprep.subr.mxu0 0.0
  %875 = vmatpush1.msra.mxu0 0.0
  %876 = vmatprep.subr.mxu0 0.0
  %877 = vmatpush1.msra.mxu0 0.0
  %878 = vmatprep.subr.mxu0 0.0
  %879 = vmatpush1.msra.mxu0 0.0
  %880 = vmatprep.subr.mxu0 0.0
  %881 = vmatpush1.msra.mxu0 %v266
  %882 = vmatprep.subr.mxu0 0.0
  %883 = vmatpush1.msra.mxu0 %v265
  %884 = vmatprep.subr.mxu0 0.0
  %885 = vmatpush1.msra.mxu0 %v264
  %886 = vmatprep.subr.mxu0 0.0
  %887 = vmatpush1.msra.mxu0 %v263
  %888 = vmatprep.subr.mxu0 0.0
  %889 = vmatpush2.msra.mxu0 0.0
  %890 = vmatprep.subr.mxu0 0.0
  %891 = vmatpush2.msra.mxu0 0.0
  %892 = vmatprep.subr.mxu0 0.0
  %893 = vmatpush2.msra.mxu0 0.0
  %894 = vmatprep.subr.mxu0 0.0
  %895 = vmatpush2.msra.mxu0 0.0
  %896 = vmatprep.subr.mxu0 0.0
  %897 = vmatpush2.msra.mxu0 0.0
  %898 = vmatprep.subr.mxu0 0.0
  %899 = vmatpush2.msra.mxu0 0.0
  %900 = vmatprep.subr.mxu0 0.0
  %901 = vmatpush2.msra.mxu0 0.0
  %902 = vmatprep.subr.mxu0 0.0
  %903 = vmatpush2.msra.mxu0 0.0
  %904 = vmatprep.subr.mxu0 0.0
  %905 = vmatpush2.msra.mxu0 0.0
  %906 = vmatprep.subr.mxu0 0.0
  %907 = vmatpush2.msra.mxu0 0.0
  %908 = vmatprep.subr.mxu0 0.0
  %909 = vmatpush2.msra.mxu0 0.0
  %910 = vmatprep.subr.mxu0 0.0
  %911 = vmatpush2.msra.mxu0 0.0
  %912 = vmatprep.subr.mxu0 0.0
  %913 = vmatpush2.msra.mxu0 0.0
  %914 = vmatprep.subr.mxu0 0.0
  %915 = vmatpush2.msra.mxu0 0.0
  %916 = vmatprep.subr.mxu0 0.0
  %917 = vmatpush2.msra.mxu0 0.0
  %918 = vmatprep.subr.mxu0 0.0
  %919 = vmatpush2.msra.mxu0 0.0
  %920 = vmatprep.mubr.f32.mxu0 0.0
  %921 = vmatmul.mubr.f32.gmra.mxu0 %v854
  %v922 = vpop.f32.mrf.mxu0
  %v923 = vadd.f32 0.0, %v922
  %v924 = vpop.f32.mrf.mxu0
  %925 = vdwg.mxu0
  %v926 = vadd.f32 %v398, %v923
  %v927 = vxor.u32 %v926, 2147483648
  %v928 = vmul.f32 %v927, 1.442695
  %v929 = vpow.pop %v928
  %v930 = vadd.f32 %v929, 1.0
  %v931 = vrcp.pop %v930
  %v932 = vmul.f32 1.0, %v931
  %v933 = vmul.f32 %v932, 2.0
  %v934 = vsub.f32 %v933, 1.0
  %v935 = vmul.f32 %v932, %v836
  %937 = vrot.lane.b32.xlu0 %v934, 64
  %v938 = vpop.permute.xlu0 %937
  %v940 = vmul.f32 %v932, %v938
  %942 = vrot.lane.b32.xlu0 %v940, 32
  %v943 = vpop.permute.xlu0 %942
  %v945 = vadd.f32 %v935, %v943
  %v946 = vmul.f32 %v945, 2.0
  %v947 = vxor.u32 %v946, 2147483648
  %v948 = vmul.f32 %v947, 1.442695
  %v949 = vpow.pop %v948
  %v950 = vadd.f32 %v949, 1.0
  %v951 = vrcp.pop %v950
  %v952 = vmul.f32 1.0, %v951
  %v953 = vmul.f32 %v952, 2.0
  %v954 = vsub.f32 %v953, 1.0
  %956 = vrot.lane.b32.xlu0 %v954, 64
  %v957 = vpop.permute.xlu0 %956
  %v959 = vmul.f32 %v932, %v957
  %961 = vrot.lane.b32.xlu0 %v959, 32
  %v962 = vpop.permute.xlu0 %961
  %v963 = vsel %vm416, %v962, 0
  %965 = vmatprep.subr.mxu0 0.0
  %966 = vmatpush1.msra.mxu0 0.0
  %967 = vmatprep.subr.mxu0 0.0
  %968 = vmatpush1.msra.mxu0 0.0
  %969 = vmatprep.subr.mxu0 0.0
  %970 = vmatpush1.msra.mxu0 0.0
  %971 = vmatprep.subr.mxu0 0.0
  %972 = vmatpush1.msra.mxu0 0.0
  %973 = vmatprep.subr.mxu0 0.0
  %974 = vmatpush1.msra.mxu0 0.0
  %975 = vmatprep.subr.mxu0 0.0
  %976 = vmatpush1.msra.mxu0 0.0
  %977 = vmatprep.subr.mxu0 0.0
  %978 = vmatpush1.msra.mxu0 0.0
  %979 = vmatprep.subr.mxu0 0.0
  %980 = vmatpush1.msra.mxu0 0.0
  %981 = vmatprep.subr.mxu0 0.0
  %982 = vmatpush1.msra.mxu0 0.0
  %983 = vmatprep.subr.mxu0 0.0
  %984 = vmatpush1.msra.mxu0 0.0
  %985 = vmatprep.subr.mxu0 0.0
  %986 = vmatpush1.msra.mxu0 0.0
  %987 = vmatprep.subr.mxu0 0.0
  %988 = vmatpush1.msra.mxu0 0.0
  %989 = vmatprep.subr.mxu0 0.0
  %990 = vmatpush1.msra.mxu0 %v266
  %991 = vmatprep.subr.mxu0 0.0
  %992 = vmatpush1.msra.mxu0 %v265
  %993 = vmatprep.subr.mxu0 0.0
  %994 = vmatpush1.msra.mxu0 %v264
  %995 = vmatprep.subr.mxu0 0.0
  %996 = vmatpush1.msra.mxu0 %v263
  %997 = vmatprep.subr.mxu0 0.0
  %998 = vmatpush2.msra.mxu0 0.0
  %999 = vmatprep.subr.mxu0 0.0
  %1000 = vmatpush2.msra.mxu0 0.0
  %1001 = vmatprep.subr.mxu0 0.0
  %1002 = vmatpush2.msra.mxu0 0.0
  %1003 = vmatprep.subr.mxu0 0.0
  %1004 = vmatpush2.msra.mxu0 0.0
  %1005 = vmatprep.subr.mxu0 0.0
  %1006 = vmatpush2.msra.mxu0 0.0
  %1007 = vmatprep.subr.mxu0 0.0
  %1008 = vmatpush2.msra.mxu0 0.0
  %1009 = vmatprep.subr.mxu0 0.0
  %1010 = vmatpush2.msra.mxu0 0.0
  %1011 = vmatprep.subr.mxu0 0.0
  %1012 = vmatpush2.msra.mxu0 0.0
  %1013 = vmatprep.subr.mxu0 0.0
  %1014 = vmatpush2.msra.mxu0 0.0
  %1015 = vmatprep.subr.mxu0 0.0
  %1016 = vmatpush2.msra.mxu0 0.0
  %1017 = vmatprep.subr.mxu0 0.0
  %1018 = vmatpush2.msra.mxu0 0.0
  %1019 = vmatprep.subr.mxu0 0.0
  %1020 = vmatpush2.msra.mxu0 0.0
  %1021 = vmatprep.subr.mxu0 0.0
  %1022 = vmatpush2.msra.mxu0 0.0
  %1023 = vmatprep.subr.mxu0 0.0
  %1024 = vmatpush2.msra.mxu0 0.0
  %1025 = vmatprep.subr.mxu0 0.0
  %1026 = vmatpush2.msra.mxu0 0.0
  %1027 = vmatprep.subr.mxu0 0.0
  %1028 = vmatpush2.msra.mxu0 0.0
  %1029 = vmatprep.mubr.f32.mxu0 0.0
  %1030 = vmatmul.mubr.f32.gmra.mxu0 %v963
  %v1031 = vpop.f32.mrf.mxu0
  %v1032 = vadd.f32 0.0, %v1031
  %v1033 = vpop.f32.mrf.mxu0
  %1034 = vdwg.mxu0
  %v1035 = vadd.f32 %v403, %v1032
  %v1036 = vxor.u32 %v1035, 2147483648
  %v1037 = vmul.f32 %v1036, 1.442695
  %v1038 = vpow.pop %v1037
  %v1039 = vadd.f32 %v1038, 1.0
  %v1040 = vrcp.pop %v1039
  %v1041 = vmul.f32 1.0, %v1040
  %v1042 = vmul.f32 %v1041, 2.0
  %v1043 = vsub.f32 %v1042, 1.0
  %v1044 = vmul.f32 %v1041, %v945
  %1046 = vrot.lane.b32.xlu0 %v1043, 64
  %v1047 = vpop.permute.xlu0 %1046
  %v1049 = vmul.f32 %v1041, %v1047
  %1051 = vrot.lane.b32.xlu0 %v1049, 32
  %v1052 = vpop.permute.xlu0 %1051
  %v1054 = vadd.f32 %v1044, %v1052
  %v1055 = vmul.f32 %v1054, 2.0
  %v1056 = vxor.u32 %v1055, 2147483648
  %v1057 = vmul.f32 %v1056, 1.442695
  %v1058 = vpow.pop %v1057
  %v1059 = vadd.f32 %v1058, 1.0
  %v1060 = vrcp.pop %v1059
  %v1061 = vmul.f32 1.0, %v1060
  %v1062 = vmul.f32 %v1061, 2.0
  %v1063 = vsub.f32 %v1062, 1.0
  %1065 = vrot.lane.b32.xlu0 %v1063, 64
  %v1066 = vpop.permute.xlu0 %1065
  %v1068 = vmul.f32 %v1041, %v1066
  %1070 = vrot.lane.b32.xlu0 %v1068, 32
  %v1071 = vpop.permute.xlu0 %1070
  %v1072 = vsel %vm416, %v1071, 0
  %1074 = vmatprep.subr.mxu0 0.0
  %1075 = vmatpush1.msra.mxu0 0.0
  %1076 = vmatprep.subr.mxu0 0.0
  %1077 = vmatpush1.msra.mxu0 0.0
  %1078 = vmatprep.subr.mxu0 0.0
  %1079 = vmatpush1.msra.mxu0 0.0
  %1080 = vmatprep.subr.mxu0 0.0
  %1081 = vmatpush1.msra.mxu0 0.0
  %1082 = vmatprep.subr.mxu0 0.0
  %1083 = vmatpush1.msra.mxu0 0.0
  %1084 = vmatprep.subr.mxu0 0.0
  %1085 = vmatpush1.msra.mxu0 0.0
  %1086 = vmatprep.subr.mxu0 0.0
  %1087 = vmatpush1.msra.mxu0 0.0
  %1088 = vmatprep.subr.mxu0 0.0
  %1089 = vmatpush1.msra.mxu0 0.0
  %1090 = vmatprep.subr.mxu0 0.0
  %1091 = vmatpush1.msra.mxu0 0.0
  %1092 = vmatprep.subr.mxu0 0.0
  %1093 = vmatpush1.msra.mxu0 0.0
  %1094 = vmatprep.subr.mxu0 0.0
  %1095 = vmatpush1.msra.mxu0 0.0
  %1096 = vmatprep.subr.mxu0 0.0
  %1097 = vmatpush1.msra.mxu0 0.0
  %1098 = vmatprep.subr.mxu0 0.0
  %1099 = vmatpush1.msra.mxu0 %v266
  %1100 = vmatprep.subr.mxu0 0.0
  %1101 = vmatpush1.msra.mxu0 %v265
  %1102 = vmatprep.subr.mxu0 0.0
  %1103 = vmatpush1.msra.mxu0 %v264
  %1104 = vmatprep.subr.mxu0 0.0
  %1105 = vmatpush1.msra.mxu0 %v263
  %1106 = vmatprep.subr.mxu0 0.0
  %1107 = vmatpush2.msra.mxu0 0.0
  %1108 = vmatprep.subr.mxu0 0.0
  %1109 = vmatpush2.msra.mxu0 0.0
  %1110 = vmatprep.subr.mxu0 0.0
  %1111 = vmatpush2.msra.mxu0 0.0
  %1112 = vmatprep.subr.mxu0 0.0
  %1113 = vmatpush2.msra.mxu0 0.0
  %1114 = vmatprep.subr.mxu0 0.0
  %1115 = vmatpush2.msra.mxu0 0.0
  %1116 = vmatprep.subr.mxu0 0.0
  %1117 = vmatpush2.msra.mxu0 0.0
  %1118 = vmatprep.subr.mxu0 0.0
  %1119 = vmatpush2.msra.mxu0 0.0
  %1120 = vmatprep.subr.mxu0 0.0
  %1121 = vmatpush2.msra.mxu0 0.0
  %1122 = vmatprep.subr.mxu0 0.0
  %1123 = vmatpush2.msra.mxu0 0.0
  %1124 = vmatprep.subr.mxu0 0.0
  %1125 = vmatpush2.msra.mxu0 0.0
  %1126 = vmatprep.subr.mxu0 0.0
  %1127 = vmatpush2.msra.mxu0 0.0
  %1128 = vmatprep.subr.mxu0 0.0
  %1129 = vmatpush2.msra.mxu0 0.0
  %1130 = vmatprep.subr.mxu0 0.0
  %1131 = vmatpush2.msra.mxu0 0.0
  %1132 = vmatprep.subr.mxu0 0.0
  %1133 = vmatpush2.msra.mxu0 0.0
  %1134 = vmatprep.subr.mxu0 0.0
  %1135 = vmatpush2.msra.mxu0 0.0
  %1136 = vmatprep.subr.mxu0 0.0
  %1137 = vmatpush2.msra.mxu0 0.0
  %1138 = vmatprep.mubr.f32.mxu0 0.0
  %1139 = vmatmul.mubr.f32.gmra.mxu0 %v1072
  %v1140 = vpop.f32.mrf.mxu0
  %v1141 = vadd.f32 0.0, %v1140
  %v1142 = vpop.f32.mrf.mxu0
  %1143 = vdwg.mxu0
  %v1144 = vadd.f32 %v408, %v1141
  %v1145 = vxor.u32 %v1144, 2147483648
  %v1146 = vmul.f32 %v1145, 1.442695
  %v1147 = vpow.pop %v1146
  %v1148 = vadd.f32 %v1147, 1.0
  %v1149 = vrcp.pop %v1148
  %v1150 = vmul.f32 1.0, %v1149
  %v1151 = vmul.f32 %v1150, 2.0
  %v1152 = vsub.f32 %v1151, 1.0
  %v1153 = vmul.f32 %v1150, %v1054
  %1155 = vrot.lane.b32.xlu0 %v1152, 64
  %v1156 = vpop.permute.xlu0 %1155
  %v1158 = vmul.f32 %v1150, %v1156
  %1160 = vrot.lane.b32.xlu0 %v1158, 32
  %v1161 = vpop.permute.xlu0 %1160
  %v1163 = vadd.f32 %v1153, %v1161
  %v1164 = vmul.f32 %v1163, 2.0
  %v1165 = vxor.u32 %v1164, 2147483648
  %v1166 = vmul.f32 %v1165, 1.442695
  %v1167 = vpow.pop %v1166
  %v1168 = vadd.f32 %v1167, 1.0
  %v1169 = vrcp.pop %v1168
  %v1170 = vmul.f32 1.0, %v1169
  %v1171 = vmul.f32 %v1170, 2.0
  %v1172 = vsub.f32 %v1171, 1.0
  %1174 = vrot.lane.b32.xlu0 %v1172, 64
  %v1175 = vpop.permute.xlu0 %1174
  %v1177 = vmul.f32 %v1150, %v1175
  %1179 = vrot.lane.b32.xlu0 %v1177, 32
  %v1180 = vpop.permute.xlu0 %1179
  %v1181 = vsel %vm416, %v1180, 0
  %1183 = vmatprep.subr.mxu0 0.0
  %1184 = vmatpush1.msra.mxu0 0.0
  %1185 = vmatprep.subr.mxu0 0.0
  %1186 = vmatpush1.msra.mxu0 0.0
  %1187 = vmatprep.subr.mxu0 0.0
  %1188 = vmatpush1.msra.mxu0 0.0
  %1189 = vmatprep.subr.mxu0 0.0
  %1190 = vmatpush1.msra.mxu0 0.0
  %1191 = vmatprep.subr.mxu0 0.0
  %1192 = vmatpush1.msra.mxu0 0.0
  %1193 = vmatprep.subr.mxu0 0.0
  %1194 = vmatpush1.msra.mxu0 0.0
  %1195 = vmatprep.subr.mxu0 0.0
  %1196 = vmatpush1.msra.mxu0 0.0
  %1197 = vmatprep.subr.mxu0 0.0
  %1198 = vmatpush1.msra.mxu0 0.0
  %1199 = vmatprep.subr.mxu0 0.0
  %1200 = vmatpush1.msra.mxu0 0.0
  %1201 = vmatprep.subr.mxu0 0.0
  %1202 = vmatpush1.msra.mxu0 0.0
  %1203 = vmatprep.subr.mxu0 0.0
  %1204 = vmatpush1.msra.mxu0 0.0
  %1205 = vmatprep.subr.mxu0 0.0
  %1206 = vmatpush1.msra.mxu0 0.0
  %1207 = vmatprep.subr.mxu0 0.0
  %1208 = vmatpush1.msra.mxu0 %v266
  %1209 = vmatprep.subr.mxu0 0.0
  %1210 = vmatpush1.msra.mxu0 %v265
  %1211 = vmatprep.subr.mxu0 0.0
  %1212 = vmatpush1.msra.mxu0 %v264
  %1213 = vmatprep.subr.mxu0 0.0
  %1214 = vmatpush1.msra.mxu0 %v263
  %1215 = vmatprep.subr.mxu0 0.0
  %1216 = vmatpush2.msra.mxu0 0.0
  %1217 = vmatprep.subr.mxu0 0.0
  %1218 = vmatpush2.msra.mxu0 0.0
  %1219 = vmatprep.subr.mxu0 0.0
  %1220 = vmatpush2.msra.mxu0 0.0
  %1221 = vmatprep.subr.mxu0 0.0
  %1222 = vmatpush2.msra.mxu0 0.0
  %1223 = vmatprep.subr.mxu0 0.0
  %1224 = vmatpush2.msra.mxu0 0.0
  %1225 = vmatprep.subr.mxu0 0.0
  %1226 = vmatpush2.msra.mxu0 0.0
  %1227 = vmatprep.subr.mxu0 0.0
  %1228 = vmatpush2.msra.mxu0 0.0
  %1229 = vmatprep.subr.mxu0 0.0
  %1230 = vmatpush2.msra.mxu0 0.0
  %1231 = vmatprep.subr.mxu0 0.0
  %1232 = vmatpush2.msra.mxu0 0.0
  %1233 = vmatprep.subr.mxu0 0.0
  %1234 = vmatpush2.msra.mxu0 0.0
  %1235 = vmatprep.subr.mxu0 0.0
  %1236 = vmatpush2.msra.mxu0 0.0
  %1237 = vmatprep.subr.mxu0 0.0
  %1238 = vmatpush2.msra.mxu0 0.0
  %1239 = vmatprep.subr.mxu0 0.0
  %1240 = vmatpush2.msra.mxu0 0.0
  %1241 = vmatprep.subr.mxu0 0.0
  %1242 = vmatpush2.msra.mxu0 0.0
  %1243 = vmatprep.subr.mxu0 0.0
  %1244 = vmatpush2.msra.mxu0 0.0
  %1245 = vmatprep.subr.mxu0 0.0
  %1246 = vmatpush2.msra.mxu0 0.0
  %1247 = vmatprep.mubr.f32.mxu0 0.0
  %1248 = vmatmul.mubr.f32.gmra.mxu0 %v1181
  %v1249 = vpop.f32.mrf.mxu0
  %v1250 = vadd.f32 0.0, %v1249
  %v1251 = vpop.f32.mrf.mxu0
  %1252 = vdwg.mxu0
  %v1253 = vadd.f32 %v413, %v1250
  %v1254 = vxor.u32 %v1253, 2147483648
  %v1255 = vmul.f32 %v1254, 1.442695
  %v1256 = vpow.pop %v1255
  %v1257 = vadd.f32 %v1256, 1.0
  %v1258 = vrcp.pop %v1257
  %v1259 = vmul.f32 1.0, %v1258
  %v1260 = vmul.f32 %v1259, 2.0
  %v1261 = vsub.f32 %v1260, 1.0
  %v1262 = vmul.f32 %v1259, %v1163
  %1264 = vrot.lane.b32.xlu0 %v1261, 64
  %v1265 = vpop.permute.xlu0 %1264
  %v1267 = vmul.f32 %v1259, %v1265
  %1269 = vrot.lane.b32.xlu0 %v1267, 32
  %v1270 = vpop.permute.xlu0 %1269
  %v1272 = vadd.f32 %v1262, %v1270
  %v1273 = vmul.f32 %v1272, 2.0
  %v1274 = vxor.u32 %v1273, 2147483648
  %v1275 = vmul.f32 %v1274, 1.442695
  %v1276 = vpow.pop %v1275
  %v1277 = vadd.f32 %v1276, 1.0
  %v1278 = vrcp.pop %v1277
  %v1279 = vmul.f32 1.0, %v1278
  %v1280 = vmul.f32 %v1279, 2.0
  %v1281 = vsub.f32 %v1280, 1.0
  %1283 = vrot.lane.b32.xlu0 %v1281, 64
  %v1284 = vpop.permute.xlu0 %1283
  %v1286 = vmul.f32 %v1259, %v1284
  %v1287 = vlaneseq
  %v1288 = vshrl.u32 %v1287, 7
  %v1289 = vsub.s32 0, %v1288
  %v1290 = vrot.slane %v276, %v1289
  %1292 = vrot.lane.b32.xlu0 %v1286, 32
  %v1293 = vpop.permute.xlu0 %1292
  %v1294 = vsel %vm416, %v1293, 0
  %1296 = vmatprep.subr.mxu0 0.0
  %1297 = vmatpush1.msra.mxu0 0.0
  %1298 = vmatprep.subr.mxu0 0.0
  %1299 = vmatpush1.msra.mxu0 0.0
  %1300 = vmatprep.subr.mxu0 0.0
  %1301 = vmatpush1.msra.mxu0 0.0
  %1302 = vmatprep.subr.mxu0 0.0
  %1303 = vmatpush1.msra.mxu0 0.0
  %1304 = vmatprep.subr.mxu0 0.0
  %1305 = vmatpush1.msra.mxu0 0.0
  %1306 = vmatprep.subr.mxu0 0.0
  %1307 = vmatpush1.msra.mxu0 0.0
  %1308 = vmatprep.subr.mxu0 0.0
  %1309 = vmatpush1.msra.mxu0 0.0
  %1310 = vmatprep.subr.mxu0 0.0
  %1311 = vmatpush1.msra.mxu0 0.0
  %1312 = vmatprep.subr.mxu0 0.0
  %1313 = vmatpush1.msra.mxu0 0.0
  %1314 = vmatprep.subr.mxu0 0.0
  %1315 = vmatpush1.msra.mxu0 0.0
  %1316 = vmatprep.subr.mxu0 0.0
  %1317 = vmatpush1.msra.mxu0 0.0
  %1318 = vmatprep.subr.mxu0 0.0
  %1319 = vmatpush1.msra.mxu0 0.0
  %1320 = vmatprep.subr.mxu0 0.0
  %1321 = vmatpush1.msra.mxu0 %v270
  %1322 = vmatprep.subr.mxu0 0.0
  %1323 = vmatpush1.msra.mxu0 %v269
  %1324 = vmatprep.subr.mxu0 0.0
  %1325 = vmatpush1.msra.mxu0 %v268
  %1326 = vmatprep.subr.mxu0 0.0
  %1327 = vmatpush1.msra.mxu0 %v267
  %1328 = vmatprep.subr.mxu0 0.0
  %1329 = vmatpush2.msra.mxu0 0.0
  %1330 = vmatprep.subr.mxu0 0.0
  %1331 = vmatpush2.msra.mxu0 0.0
  %1332 = vmatprep.subr.mxu0 0.0
  %1333 = vmatpush2.msra.mxu0 0.0
  %1334 = vmatprep.subr.mxu0 0.0
  %1335 = vmatpush2.msra.mxu0 0.0
  %1336 = vmatprep.subr.mxu0 0.0
  %1337 = vmatpush2.msra.mxu0 0.0
  %1338 = vmatprep.subr.mxu0 0.0
  %1339 = vmatpush2.msra.mxu0 0.0
  %1340 = vmatprep.subr.mxu0 0.0
  %1341 = vmatpush2.msra.mxu0 0.0
  %1342 = vmatprep.subr.mxu0 0.0
  %1343 = vmatpush2.msra.mxu0 0.0
  %1344 = vmatprep.subr.mxu0 0.0
  %1345 = vmatpush2.msra.mxu0 0.0
  %1346 = vmatprep.subr.mxu0 0.0
  %1347 = vmatpush2.msra.mxu0 0.0
  %1348 = vmatprep.subr.mxu0 0.0
  %1349 = vmatpush2.msra.mxu0 0.0
  %1350 = vmatprep.subr.mxu0 0.0
  %1351 = vmatpush2.msra.mxu0 0.0
  %1352 = vmatprep.subr.mxu0 0.0
  %1353 = vmatpush2.msra.mxu0 0.0
  %1354 = vmatprep.subr.mxu0 0.0
  %1355 = vmatpush2.msra.mxu0 0.0
  %1356 = vmatprep.subr.mxu0 0.0
  %1357 = vmatpush2.msra.mxu0 0.0
  %1358 = vmatprep.subr.mxu0 0.0
  %1359 = vmatpush2.msra.mxu0 0.0
  %1360 = vmatprep.mubr.f32.mxu0 0.0
  %1361 = vmatmul.mubr.f32.gmra.mxu0 %v527
  %v1362 = vpop.f32.mrf.mxu0
  %v1363 = vadd.f32 %v1290, %v1362
  %v1364 = vpop.f32.mrf.mxu0
  %1365 = vmatprep.mubr.f32.mxu0 0.0
  %1366 = vmatmul.mubr.f32.gmra.mxu0 %v636
  %v1367 = vpop.f32.mrf.mxu0
  %v1368 = vadd.f32 %v1290, %v1367
  %v1369 = vpop.f32.mrf.mxu0
  %1370 = vmatprep.mubr.f32.mxu0 0.0
  %1371 = vmatmul.mubr.f32.gmra.mxu0 %v745
  %v1372 = vpop.f32.mrf.mxu0
  %v1373 = vadd.f32 %v1290, %v1372
  %v1374 = vpop.f32.mrf.mxu0
  %1375 = vmatprep.mubr.f32.mxu0 0.0
  %1376 = vmatmul.mubr.f32.gmra.mxu0 %v854
  %v1377 = vpop.f32.mrf.mxu0
  %v1378 = vadd.f32 %v1290, %v1377
  %v1379 = vpop.f32.mrf.mxu0
  %1380 = vmatprep.mubr.f32.mxu0 0.0
  %1381 = vmatmul.mubr.f32.gmra.mxu0 %v963
  %v1382 = vpop.f32.mrf.mxu0
  %v1383 = vadd.f32 %v1290, %v1382
  %v1384 = vpop.f32.mrf.mxu0
  %1385 = vmatprep.mubr.f32.mxu0 0.0
  %1386 = vmatmul.mubr.f32.gmra.mxu0 %v1072
  %v1387 = vpop.f32.mrf.mxu0
  %v1388 = vadd.f32 %v1290, %v1387
  %v1389 = vpop.f32.mrf.mxu0
  %1390 = vmatprep.mubr.f32.mxu0 0.0
  %1391 = vmatmul.mubr.f32.gmra.mxu0 %v1181
  %v1392 = vpop.f32.mrf.mxu0
  %v1393 = vadd.f32 %v1290, %v1392
  %v1394 = vpop.f32.mrf.mxu0
  %1395 = vmatprep.mubr.f32.mxu0 0.0
  %1396 = vmatmul.mubr.f32.gmra.mxu0 %v1294
  %v1397 = vpop.f32.mrf.mxu0
  %v1398 = vadd.f32 %v1290, %v1397
  %v1399 = vpop.f32.mrf.mxu0
  %1400 = vdwg.mxu0
  %1401 = vmatprep.subr.mxu0 0.0
  %1402 = vmatpush1.msra.mxu0 0.0
  %1403 = vmatprep.subr.mxu0 0.0
  %1404 = vmatpush1.msra.mxu0 0.0
  %1405 = vmatprep.subr.mxu0 0.0
  %1406 = vmatpush1.msra.mxu0 0.0
  %1407 = vmatprep.subr.mxu0 0.0
  %1408 = vmatpush1.msra.mxu0 0.0
  %1409 = vmatprep.subr.mxu0 0.0
  %1410 = vmatpush1.msra.mxu0 0.0
  %1411 = vmatprep.subr.mxu0 0.0
  %1412 = vmatpush1.msra.mxu0 0.0
  %1413 = vmatprep.subr.mxu0 0.0
  %1414 = vmatpush1.msra.mxu0 0.0
  %1415 = vmatprep.subr.mxu0 0.0
  %1416 = vmatpush1.msra.mxu0 0.0
  %1417 = vmatprep.subr.mxu0 0.0
  %1418 = vmatpush1.msra.mxu0 0.0
  %1419 = vmatprep.subr.mxu0 0.0
  %1420 = vmatpush1.msra.mxu0 0.0
  %1421 = vmatprep.subr.mxu0 0.0
  %1422 = vmatpush1.msra.mxu0 0.0
  %1423 = vmatprep.subr.mxu0 0.0
  %1424 = vmatpush1.msra.mxu0 0.0
  %1425 = vmatprep.subr.mxu0 0.0
  %1426 = vmatpush1.msra.mxu0 %v274
  %1427 = vmatprep.subr.mxu0 0.0
  %1428 = vmatpush1.msra.mxu0 %v273
  %1429 = vmatprep.subr.mxu0 0.0
  %1430 = vmatpush1.msra.mxu0 %v272
  %1431 = vmatprep.subr.mxu0 0.0
  %1432 = vmatpush1.msra.mxu0 %v271
  %1433 = vmatprep.subr.mxu0 0.0
  %1434 = vmatpush2.msra.mxu0 0.0
  %1435 = vmatprep.subr.mxu0 0.0
  %1436 = vmatpush2.msra.mxu0 0.0
  %1437 = vmatprep.subr.mxu0 0.0
  %1438 = vmatpush2.msra.mxu0 0.0
  %1439 = vmatprep.subr.mxu0 0.0
  %1440 = vmatpush2.msra.mxu0 0.0
  %1441 = vmatprep.subr.mxu0 0.0
  %1442 = vmatpush2.msra.mxu0 0.0
  %1443 = vmatprep.subr.mxu0 0.0
  %1444 = vmatpush2.msra.mxu0 0.0
  %1445 = vmatprep.subr.mxu0 0.0
  %1446 = vmatpush2.msra.mxu0 0.0
  %1447 = vmatprep.subr.mxu0 0.0
  %1448 = vmatpush2.msra.mxu0 0.0
  %1449 = vmatprep.subr.mxu0 0.0
  %1450 = vmatpush2.msra.mxu0 0.0
  %1451 = vmatprep.subr.mxu0 0.0
  %1452 = vmatpush2.msra.mxu0 0.0
  %1453 = vmatprep.subr.mxu0 0.0
  %1454 = vmatpush2.msra.mxu0 0.0
  %1455 = vmatprep.subr.mxu0 0.0
  %1456 = vmatpush2.msra.mxu0 0.0
  %1457 = vmatprep.subr.mxu0 0.0
  %1458 = vmatpush2.msra.mxu0 0.0
  %1459 = vmatprep.subr.mxu0 0.0
  %1460 = vmatpush2.msra.mxu0 0.0
  %1461 = vmatprep.subr.mxu0 0.0
  %1462 = vmatpush2.msra.mxu0 0.0
  %1463 = vmatprep.subr.mxu0 0.0
  %1464 = vmatpush2.msra.mxu0 0.0
  %1465 = vmatprep.mubr.f32.mxu0 0.0
  %1466 = vmatmul.mubr.f32.gmra.mxu0 %v418
  %v1467 = vpop.f32.mrf.mxu0
  %v1468 = vadd.f32 0.0, %v1467
  %v1469 = vpop.f32.mrf.mxu0
  %1470 = vdwg.mxu0
  %v1471 = vadd.f32 %v1363, %v1468
  %v1472 = vxor.u32 %v1471, 2147483648
  %v1473 = vmul.f32 %v1472, 1.442695
  %v1474 = vpow.pop %v1473
  %v1475 = vadd.f32 %v1474, 1.0
  %v1476 = vrcp.pop %v1475
  %v1477 = vmul.f32 1.0, %v1476
  %v1478 = vmul.f32 %v1477, 2.0
  %v1479 = vsub.f32 %v1478, 1.0
  %v1480 = vmul.f32 %v1477, 0.0
  %1482 = vrot.lane.b32.xlu0 %v1479, 64
  %v1483 = vpop.permute.xlu0 %1482
  %v1485 = vmul.f32 %v1477, %v1483
  %1487 = vrot.lane.b32.xlu0 %v1485, 32
  %v1488 = vpop.permute.xlu0 %1487
  %v1490 = vadd.f32 %v1480, %v1488
  %v1491 = vmul.f32 %v1490, 2.0
  %v1492 = vxor.u32 %v1491, 2147483648
  %v1493 = vmul.f32 %v1492, 1.442695
  %v1494 = vpow.pop %v1493
  %v1495 = vadd.f32 %v1494, 1.0
  %v1496 = vrcp.pop %v1495
  %v1497 = vmul.f32 1.0, %v1496
  %v1498 = vmul.f32 %v1497, 2.0
  %v1499 = vsub.f32 %v1498, 1.0
  %1501 = vrot.lane.b32.xlu0 %v1499, 64
  %v1502 = vpop.permute.xlu0 %1501
  %v1504 = vmul.f32 %v1477, %v1502
  %1506 = vrot.lane.b32.xlu0 %v1504, 32
  %v1507 = vpop.permute.xlu0 %1506
  %v1508 = vsel %vm416, %v1507, 0
  %1510 = vmatprep.subr.mxu0 0.0
  %1511 = vmatpush1.msra.mxu0 0.0
  %1512 = vmatprep.subr.mxu0 0.0
  %1513 = vmatpush1.msra.mxu0 0.0
  %1514 = vmatprep.subr.mxu0 0.0
  %1515 = vmatpush1.msra.mxu0 0.0
  %1516 = vmatprep.subr.mxu0 0.0
  %1517 = vmatpush1.msra.mxu0 0.0
  %1518 = vmatprep.subr.mxu0 0.0
  %1519 = vmatpush1.msra.mxu0 0.0
  %1520 = vmatprep.subr.mxu0 0.0
  %1521 = vmatpush1.msra.mxu0 0.0
  %1522 = vmatprep.subr.mxu0 0.0
  %1523 = vmatpush1.msra.mxu0 0.0
  %1524 = vmatprep.subr.mxu0 0.0
  %1525 = vmatpush1.msra.mxu0 0.0
  %1526 = vmatprep.subr.mxu0 0.0
  %1527 = vmatpush1.msra.mxu0 0.0
  %1528 = vmatprep.subr.mxu0 0.0
  %1529 = vmatpush1.msra.mxu0 0.0
  %1530 = vmatprep.subr.mxu0 0.0
  %1531 = vmatpush1.msra.mxu0 0.0
  %1532 = vmatprep.subr.mxu0 0.0
  %1533 = vmatpush1.msra.mxu0 0.0
  %1534 = vmatprep.subr.mxu0 0.0
  %1535 = vmatpush1.msra.mxu0 %v274
  %1536 = vmatprep.subr.mxu0 0.0
  %1537 = vmatpush1.msra.mxu0 %v273
  %1538 = vmatprep.subr.mxu0 0.0
  %1539 = vmatpush1.msra.mxu0 %v272
  %1540 = vmatprep.subr.mxu0 0.0
  %1541 = vmatpush1.msra.mxu0 %v271
  %1542 = vmatprep.subr.mxu0 0.0
  %1543 = vmatpush2.msra.mxu0 0.0
  %1544 = vmatprep.subr.mxu0 0.0
  %1545 = vmatpush2.msra.mxu0 0.0
  %1546 = vmatprep.subr.mxu0 0.0
  %1547 = vmatpush2.msra.mxu0 0.0
  %1548 = vmatprep.subr.mxu0 0.0
  %1549 = vmatpush2.msra.mxu0 0.0
  %1550 = vmatprep.subr.mxu0 0.0
  %1551 = vmatpush2.msra.mxu0 0.0
  %1552 = vmatprep.subr.mxu0 0.0
  %1553 = vmatpush2.msra.mxu0 0.0
  %1554 = vmatprep.subr.mxu0 0.0
  %1555 = vmatpush2.msra.mxu0 0.0
  %1556 = vmatprep.subr.mxu0 0.0
  %1557 = vmatpush2.msra.mxu0 0.0
  %1558 = vmatprep.subr.mxu0 0.0
  %1559 = vmatpush2.msra.mxu0 0.0
  %1560 = vmatprep.subr.mxu0 0.0
  %1561 = vmatpush2.msra.mxu0 0.0
  %1562 = vmatprep.subr.mxu0 0.0
  %1563 = vmatpush2.msra.mxu0 0.0
  %1564 = vmatprep.subr.mxu0 0.0
  %1565 = vmatpush2.msra.mxu0 0.0
  %1566 = vmatprep.subr.mxu0 0.0
  %1567 = vmatpush2.msra.mxu0 0.0
  %1568 = vmatprep.subr.mxu0 0.0
  %1569 = vmatpush2.msra.mxu0 0.0
  %1570 = vmatprep.subr.mxu0 0.0
  %1571 = vmatpush2.msra.mxu0 0.0
  %1572 = vmatprep.subr.mxu0 0.0
  %1573 = vmatpush2.msra.mxu0 0.0
  %1574 = vmatprep.mubr.f32.mxu0 0.0
  %1575 = vmatmul.mubr.f32.gmra.mxu0 %v1508
  %v1576 = vpop.f32.mrf.mxu0
  %v1577 = vadd.f32 0.0, %v1576
  %v1578 = vpop.f32.mrf.mxu0
  %1579 = vdwg.mxu0
  %v1580 = vadd.f32 %v1368, %v1577
  %v1581 = vxor.u32 %v1580, 2147483648
  %v1582 = vmul.f32 %v1581, 1.442695
  %v1583 = vpow.pop %v1582
  %v1584 = vadd.f32 %v1583, 1.0
  %v1585 = vrcp.pop %v1584
  %v1586 = vmul.f32 1.0, %v1585
  %v1587 = vmul.f32 %v1586, 2.0
  %v1588 = vsub.f32 %v1587, 1.0
  %v1589 = vmul.f32 %v1586, %v1490
  %1591 = vrot.lane.b32.xlu0 %v1588, 64
  %v1592 = vpop.permute.xlu0 %1591
  %v1594 = vmul.f32 %v1586, %v1592
  %1596 = vrot.lane.b32.xlu0 %v1594, 32
  %v1597 = vpop.permute.xlu0 %1596
  %v1599 = vadd.f32 %v1589, %v1597
  %v1600 = vmul.f32 %v1599, 2.0
  %v1601 = vxor.u32 %v1600, 2147483648
  %v1602 = vmul.f32 %v1601, 1.442695
  %v1603 = vpow.pop %v1602
  %v1604 = vadd.f32 %v1603, 1.0
  %v1605 = vrcp.pop %v1604
  %v1606 = vmul.f32 1.0, %v1605
  %v1607 = vmul.f32 %v1606, 2.0
  %v1608 = vsub.f32 %v1607, 1.0
  %1610 = vrot.lane.b32.xlu0 %v1608, 64
  %v1611 = vpop.permute.xlu0 %1610
  %v1613 = vmul.f32 %v1586, %v1611
  %1615 = vrot.lane.b32.xlu0 %v1613, 32
  %v1616 = vpop.permute.xlu0 %1615
  %v1617 = vsel %vm416, %v1616, 0
  %1619 = vmatprep.subr.mxu0 0.0
  %1620 = vmatpush1.msra.mxu0 0.0
  %1621 = vmatprep.subr.mxu0 0.0
  %1622 = vmatpush1.msra.mxu0 0.0
  %1623 = vmatprep.subr.mxu0 0.0
  %1624 = vmatpush1.msra.mxu0 0.0
  %1625 = vmatprep.subr.mxu0 0.0
  %1626 = vmatpush1.msra.mxu0 0.0
  %1627 = vmatprep.subr.mxu0 0.0
  %1628 = vmatpush1.msra.mxu0 0.0
  %1629 = vmatprep.subr.mxu0 0.0
  %1630 = vmatpush1.msra.mxu0 0.0
  %1631 = vmatprep.subr.mxu0 0.0
  %1632 = vmatpush1.msra.mxu0 0.0
  %1633 = vmatprep.subr.mxu0 0.0
  %1634 = vmatpush1.msra.mxu0 0.0
  %1635 = vmatprep.subr.mxu0 0.0
  %1636 = vmatpush1.msra.mxu0 0.0
  %1637 = vmatprep.subr.mxu0 0.0
  %1638 = vmatpush1.msra.mxu0 0.0
  %1639 = vmatprep.subr.mxu0 0.0
  %1640 = vmatpush1.msra.mxu0 0.0
  %1641 = vmatprep.subr.mxu0 0.0
  %1642 = vmatpush1.msra.mxu0 0.0
  %1643 = vmatprep.subr.mxu0 0.0
  %1644 = vmatpush1.msra.mxu0 %v274
  %1645 = vmatprep.subr.mxu0 0.0
  %1646 = vmatpush1.msra.mxu0 %v273
  %1647 = vmatprep.subr.mxu0 0.0
  %1648 = vmatpush1.msra.mxu0 %v272
  %1649 = vmatprep.subr.mxu0 0.0
  %1650 = vmatpush1.msra.mxu0 %v271
  %1651 = vmatprep.subr.mxu0 0.0
  %1652 = vmatpush2.msra.mxu0 0.0
  %1653 = vmatprep.subr.mxu0 0.0
  %1654 = vmatpush2.msra.mxu0 0.0
  %1655 = vmatprep.subr.mxu0 0.0
  %1656 = vmatpush2.msra.mxu0 0.0
  %1657 = vmatprep.subr.mxu0 0.0
  %1658 = vmatpush2.msra.mxu0 0.0
  %1659 = vmatprep.subr.mxu0 0.0
  %1660 = vmatpush2.msra.mxu0 0.0
  %1661 = vmatprep.subr.mxu0 0.0
  %1662 = vmatpush2.msra.mxu0 0.0
  %1663 = vmatprep.subr.mxu0 0.0
  %1664 = vmatpush2.msra.mxu0 0.0
  %1665 = vmatprep.subr.mxu0 0.0
  %1666 = vmatpush2.msra.mxu0 0.0
  %1667 = vmatprep.subr.mxu0 0.0
  %1668 = vmatpush2.msra.mxu0 0.0
  %1669 = vmatprep.subr.mxu0 0.0
  %1670 = vmatpush2.msra.mxu0 0.0
  %1671 = vmatprep.subr.mxu0 0.0
  %1672 = vmatpush2.msra.mxu0 0.0
  %1673 = vmatprep.subr.mxu0 0.0
  %1674 = vmatpush2.msra.mxu0 0.0
  %1675 = vmatprep.subr.mxu0 0.0
  %1676 = vmatpush2.msra.mxu0 0.0
  %1677 = vmatprep.subr.mxu0 0.0
  %1678 = vmatpush2.msra.mxu0 0.0
  %1679 = vmatprep.subr.mxu0 0.0
  %1680 = vmatpush2.msra.mxu0 0.0
  %1681 = vmatprep.subr.mxu0 0.0
  %1682 = vmatpush2.msra.mxu0 0.0
  %1683 = vmatprep.mubr.f32.mxu0 0.0
  %1684 = vmatmul.mubr.f32.gmra.mxu0 %v1617
  %v1685 = vpop.f32.mrf.mxu0
  %v1686 = vadd.f32 0.0, %v1685
  %v1687 = vpop.f32.mrf.mxu0
  %1688 = vdwg.mxu0
  %v1689 = vadd.f32 %v1373, %v1686
  %v1690 = vxor.u32 %v1689, 2147483648
  %v1691 = vmul.f32 %v1690, 1.442695
  %v1692 = vpow.pop %v1691
  %v1693 = vadd.f32 %v1692, 1.0
  %v1694 = vrcp.pop %v1693
  %v1695 = vmul.f32 1.0, %v1694
  %v1696 = vmul.f32 %v1695, 2.0
  %v1697 = vsub.f32 %v1696, 1.0
  %v1698 = vmul.f32 %v1695, %v1599
  %1700 = vrot.lane.b32.xlu0 %v1697, 64
  %v1701 = vpop.permute.xlu0 %1700
  %v1703 = vmul.f32 %v1695, %v1701
  %1705 = vrot.lane.b32.xlu0 %v1703, 32
  %v1706 = vpop.permute.xlu0 %1705
  %v1708 = vadd.f32 %v1698, %v1706
  %v1709 = vmul.f32 %v1708, 2.0
  %v1710 = vxor.u32 %v1709, 2147483648
  %v1711 = vmul.f32 %v1710, 1.442695
  %v1712 = vpow.pop %v1711
  %v1713 = vadd.f32 %v1712, 1.0
  %v1714 = vrcp.pop %v1713
  %v1715 = vmul.f32 1.0, %v1714
  %v1716 = vmul.f32 %v1715, 2.0
  %v1717 = vsub.f32 %v1716, 1.0
  %1719 = vrot.lane.b32.xlu0 %v1717, 64
  %v1720 = vpop.permute.xlu0 %1719
  %v1722 = vmul.f32 %v1695, %v1720
  %1724 = vrot.lane.b32.xlu0 %v1722, 32
  %v1725 = vpop.permute.xlu0 %1724
  %v1726 = vsel %vm416, %v1725, 0
  %1728 = vmatprep.subr.mxu0 0.0
  %1729 = vmatpush1.msra.mxu0 0.0
  %1730 = vmatprep.subr.mxu0 0.0
  %1731 = vmatpush1.msra.mxu0 0.0
  %1732 = vmatprep.subr.mxu0 0.0
  %1733 = vmatpush1.msra.mxu0 0.0
  %1734 = vmatprep.subr.mxu0 0.0
  %1735 = vmatpush1.msra.mxu0 0.0
  %1736 = vmatprep.subr.mxu0 0.0
  %1737 = vmatpush1.msra.mxu0 0.0
  %1738 = vmatprep.subr.mxu0 0.0
  %1739 = vmatpush1.msra.mxu0 0.0
  %1740 = vmatprep.subr.mxu0 0.0
  %1741 = vmatpush1.msra.mxu0 0.0
  %1742 = vmatprep.subr.mxu0 0.0
  %1743 = vmatpush1.msra.mxu0 0.0
  %1744 = vmatprep.subr.mxu0 0.0
  %1745 = vmatpush1.msra.mxu0 0.0
  %1746 = vmatprep.subr.mxu0 0.0
  %1747 = vmatpush1.msra.mxu0 0.0
  %1748 = vmatprep.subr.mxu0 0.0
  %1749 = vmatpush1.msra.mxu0 0.0
  %1750 = vmatprep.subr.mxu0 0.0
  %1751 = vmatpush1.msra.mxu0 0.0
  %1752 = vmatprep.subr.mxu0 0.0
  %1753 = vmatpush1.msra.mxu0 %v274
  %1754 = vmatprep.subr.mxu0 0.0
  %1755 = vmatpush1.msra.mxu0 %v273
  %1756 = vmatprep.subr.mxu0 0.0
  %1757 = vmatpush1.msra.mxu0 %v272
  %1758 = vmatprep.subr.mxu0 0.0
  %1759 = vmatpush1.msra.mxu0 %v271
  %1760 = vmatprep.subr.mxu0 0.0
  %1761 = vmatpush2.msra.mxu0 0.0
  %1762 = vmatprep.subr.mxu0 0.0
  %1763 = vmatpush2.msra.mxu0 0.0
  %1764 = vmatprep.subr.mxu0 0.0
  %1765 = vmatpush2.msra.mxu0 0.0
  %1766 = vmatprep.subr.mxu0 0.0
  %1767 = vmatpush2.msra.mxu0 0.0
  %1768 = vmatprep.subr.mxu0 0.0
  %1769 = vmatpush2.msra.mxu0 0.0
  %1770 = vmatprep.subr.mxu0 0.0
  %1771 = vmatpush2.msra.mxu0 0.0
  %1772 = vmatprep.subr.mxu0 0.0
  %1773 = vmatpush2.msra.mxu0 0.0
  %1774 = vmatprep.subr.mxu0 0.0
  %1775 = vmatpush2.msra.mxu0 0.0
  %1776 = vmatprep.subr.mxu0 0.0
  %1777 = vmatpush2.msra.mxu0 0.0
  %1778 = vmatprep.subr.mxu0 0.0
  %1779 = vmatpush2.msra.mxu0 0.0
  %1780 = vmatprep.subr.mxu0 0.0
  %1781 = vmatpush2.msra.mxu0 0.0
  %1782 = vmatprep.subr.mxu0 0.0
  %1783 = vmatpush2.msra.mxu0 0.0
  %1784 = vmatprep.subr.mxu0 0.0
  %1785 = vmatpush2.msra.mxu0 0.0
  %1786 = vmatprep.subr.mxu0 0.0
  %1787 = vmatpush2.msra.mxu0 0.0
  %1788 = vmatprep.subr.mxu0 0.0
  %1789 = vmatpush2.msra.mxu0 0.0
  %1790 = vmatprep.subr.mxu0 0.0
  %1791 = vmatpush2.msra.mxu0 0.0
  %1792 = vmatprep.mubr.f32.mxu0 0.0
  %1793 = vmatmul.mubr.f32.gmra.mxu0 %v1726
  %v1794 = vpop.f32.mrf.mxu0
  %v1795 = vadd.f32 0.0, %v1794
  %v1796 = vpop.f32.mrf.mxu0
  %1797 = vdwg.mxu0
  %v1798 = vadd.f32 %v1378, %v1795
  %v1799 = vxor.u32 %v1798, 2147483648
  %v1800 = vmul.f32 %v1799, 1.442695
  %v1801 = vpow.pop %v1800
  %v1802 = vadd.f32 %v1801, 1.0
  %v1803 = vrcp.pop %v1802
  %v1804 = vmul.f32 1.0, %v1803
  %v1805 = vmul.f32 %v1804, 2.0
  %v1806 = vsub.f32 %v1805, 1.0
  %v1807 = vmul.f32 %v1804, %v1708
  %1809 = vrot.lane.b32.xlu0 %v1806, 64
  %v1810 = vpop.permute.xlu0 %1809
  %v1812 = vmul.f32 %v1804, %v1810
  %1814 = vrot.lane.b32.xlu0 %v1812, 32
  %v1815 = vpop.permute.xlu0 %1814
  %v1817 = vadd.f32 %v1807, %v1815
  %v1818 = vmul.f32 %v1817, 2.0
  %v1819 = vxor.u32 %v1818, 2147483648
  %v1820 = vmul.f32 %v1819, 1.442695
  %v1821 = vpow.pop %v1820
  %v1822 = vadd.f32 %v1821, 1.0
  %v1823 = vrcp.pop %v1822
  %v1824 = vmul.f32 1.0, %v1823
  %v1825 = vmul.f32 %v1824, 2.0
  %v1826 = vsub.f32 %v1825, 1.0
  %1828 = vrot.lane.b32.xlu0 %v1826, 64
  %v1829 = vpop.permute.xlu0 %1828
  %v1831 = vmul.f32 %v1804, %v1829
  %1833 = vrot.lane.b32.xlu0 %v1831, 32
  %v1834 = vpop.permute.xlu0 %1833
  %v1835 = vsel %vm416, %v1834, 0
  %1837 = vmatprep.subr.mxu0 0.0
  %1838 = vmatpush1.msra.mxu0 0.0
  %1839 = vmatprep.subr.mxu0 0.0
  %1840 = vmatpush1.msra.mxu0 0.0
  %1841 = vmatprep.subr.mxu0 0.0
  %1842 = vmatpush1.msra.mxu0 0.0
  %1843 = vmatprep.subr.mxu0 0.0
  %1844 = vmatpush1.msra.mxu0 0.0
  %1845 = vmatprep.subr.mxu0 0.0
  %1846 = vmatpush1.msra.mxu0 0.0
  %1847 = vmatprep.subr.mxu0 0.0
  %1848 = vmatpush1.msra.mxu0 0.0
  %1849 = vmatprep.subr.mxu0 0.0
  %1850 = vmatpush1.msra.mxu0 0.0
  %1851 = vmatprep.subr.mxu0 0.0
  %1852 = vmatpush1.msra.mxu0 0.0
  %1853 = vmatprep.subr.mxu0 0.0
  %1854 = vmatpush1.msra.mxu0 0.0
  %1855 = vmatprep.subr.mxu0 0.0
  %1856 = vmatpush1.msra.mxu0 0.0
  %1857 = vmatprep.subr.mxu0 0.0
  %1858 = vmatpush1.msra.mxu0 0.0
  %1859 = vmatprep.subr.mxu0 0.0
  %1860 = vmatpush1.msra.mxu0 0.0
  %1861 = vmatprep.subr.mxu0 0.0
  %1862 = vmatpush1.msra.mxu0 %v274
  %1863 = vmatprep.subr.mxu0 0.0
  %1864 = vmatpush1.msra.mxu0 %v273
  %1865 = vmatprep.subr.mxu0 0.0
  %1866 = vmatpush1.msra.mxu0 %v272
  %1867 = vmatprep.subr.mxu0 0.0
  %1868 = vmatpush1.msra.mxu0 %v271
  %1869 = vmatprep.subr.mxu0 0.0
  %1870 = vmatpush2.msra.mxu0 0.0
  %1871 = vmatprep.subr.mxu0 0.0
  %1872 = vmatpush2.msra.mxu0 0.0
  %1873 = vmatprep.subr.mxu0 0.0
  %1874 = vmatpush2.msra.mxu0 0.0
  %1875 = vmatprep.subr.mxu0 0.0
  %1876 = vmatpush2.msra.mxu0 0.0
  %1877 = vmatprep.subr.mxu0 0.0
  %1878 = vmatpush2.msra.mxu0 0.0
  %1879 = vmatprep.subr.mxu0 0.0
  %1880 = vmatpush2.msra.mxu0 0.0
  %1881 = vmatprep.subr.mxu0 0.0
  %1882 = vmatpush2.msra.mxu0 0.0
  %1883 = vmatprep.subr.mxu0 0.0
  %1884 = vmatpush2.msra.mxu0 0.0
  %1885 = vmatprep.subr.mxu0 0.0
  %1886 = vmatpush2.msra.mxu0 0.0
  %1887 = vmatprep.subr.mxu0 0.0
  %1888 = vmatpush2.msra.mxu0 0.0
  %1889 = vmatprep.subr.mxu0 0.0
  %1890 = vmatpush2.msra.mxu0 0.0
  %1891 = vmatprep.subr.mxu0 0.0
  %1892 = vmatpush2.msra.mxu0 0.0
  %1893 = vmatprep.subr.mxu0 0.0
  %1894 = vmatpush2.msra.mxu0 0.0
  %1895 = vmatprep.subr.mxu0 0.0
  %1896 = vmatpush2.msra.mxu0 0.0
  %1897 = vmatprep.subr.mxu0 0.0
  %1898 = vmatpush2.msra.mxu0 0.0
  %1899 = vmatprep.subr.mxu0 0.0
  %1900 = vmatpush2.msra.mxu0 0.0
  %1901 = vmatprep.mubr.f32.mxu0 0.0
  %1902 = vmatmul.mubr.f32.gmra.mxu0 %v1835
  %v1903 = vpop.f32.mrf.mxu0
  %v1904 = vadd.f32 0.0, %v1903
  %v1905 = vpop.f32.mrf.mxu0
  %1906 = vdwg.mxu0
  %v1907 = vadd.f32 %v1383, %v1904
  %v1908 = vxor.u32 %v1907, 2147483648
  %v1909 = vmul.f32 %v1908, 1.442695
  %v1910 = vpow.pop %v1909
  %v1911 = vadd.f32 %v1910, 1.0
  %v1912 = vrcp.pop %v1911
  %v1913 = vmul.f32 1.0, %v1912
  %v1914 = vmul.f32 %v1913, 2.0
  %v1915 = vsub.f32 %v1914, 1.0
  %v1916 = vmul.f32 %v1913, %v1817
  %1918 = vrot.lane.b32.xlu0 %v1915, 64
  %v1919 = vpop.permute.xlu0 %1918
  %v1921 = vmul.f32 %v1913, %v1919
  %1923 = vrot.lane.b32.xlu0 %v1921, 32
  %v1924 = vpop.permute.xlu0 %1923
  %v1926 = vadd.f32 %v1916, %v1924
  %v1927 = vmul.f32 %v1926, 2.0
  %v1928 = vxor.u32 %v1927, 2147483648
  %v1929 = vmul.f32 %v1928, 1.442695
  %v1930 = vpow.pop %v1929
  %v1931 = vadd.f32 %v1930, 1.0
  %v1932 = vrcp.pop %v1931
  %v1933 = vmul.f32 1.0, %v1932
  %v1934 = vmul.f32 %v1933, 2.0
  %v1935 = vsub.f32 %v1934, 1.0
  %1937 = vrot.lane.b32.xlu0 %v1935, 64
  %v1938 = vpop.permute.xlu0 %1937
  %v1940 = vmul.f32 %v1913, %v1938
  %1942 = vrot.lane.b32.xlu0 %v1940, 32
  %v1943 = vpop.permute.xlu0 %1942
  %v1944 = vsel %vm416, %v1943, 0
  %1946 = vmatprep.subr.mxu0 0.0
  %1947 = vmatpush1.msra.mxu0 0.0
  %1948 = vmatprep.subr.mxu0 0.0
  %1949 = vmatpush1.msra.mxu0 0.0
  %1950 = vmatprep.subr.mxu0 0.0
  %1951 = vmatpush1.msra.mxu0 0.0
  %1952 = vmatprep.subr.mxu0 0.0
  %1953 = vmatpush1.msra.mxu0 0.0
  %1954 = vmatprep.subr.mxu0 0.0
  %1955 = vmatpush1.msra.mxu0 0.0
  %1956 = vmatprep.subr.mxu0 0.0
  %1957 = vmatpush1.msra.mxu0 0.0
  %1958 = vmatprep.subr.mxu0 0.0
  %1959 = vmatpush1.msra.mxu0 0.0
  %1960 = vmatprep.subr.mxu0 0.0
  %1961 = vmatpush1.msra.mxu0 0.0
  %1962 = vmatprep.subr.mxu0 0.0
  %1963 = vmatpush1.msra.mxu0 0.0
  %1964 = vmatprep.subr.mxu0 0.0
  %1965 = vmatpush1.msra.mxu0 0.0
  %1966 = vmatprep.subr.mxu0 0.0
  %1967 = vmatpush1.msra.mxu0 0.0
  %1968 = vmatprep.subr.mxu0 0.0
  %1969 = vmatpush1.msra.mxu0 0.0
  %1970 = vmatprep.subr.mxu0 0.0
  %1971 = vmatpush1.msra.mxu0 %v274
  %1972 = vmatprep.subr.mxu0 0.0
  %1973 = vmatpush1.msra.mxu0 %v273
  %1974 = vmatprep.subr.mxu0 0.0
  %1975 = vmatpush1.msra.mxu0 %v272
  %1976 = vmatprep.subr.mxu0 0.0
  %1977 = vmatpush1.msra.mxu0 %v271
  %1978 = vmatprep.subr.mxu0 0.0
  %1979 = vmatpush2.msra.mxu0 0.0
  %1980 = vmatprep.subr.mxu0 0.0
  %1981 = vmatpush2.msra.mxu0 0.0
  %1982 = vmatprep.subr.mxu0 0.0
  %1983 = vmatpush2.msra.mxu0 0.0
  %1984 = vmatprep.subr.mxu0 0.0
  %1985 = vmatpush2.msra.mxu0 0.0
  %1986 = vmatprep.subr.mxu0 0.0
  %1987 = vmatpush2.msra.mxu0 0.0
  %1988 = vmatprep.subr.mxu0 0.0
  %1989 = vmatpush2.msra.mxu0 0.0
  %1990 = vmatprep.subr.mxu0 0.0
  %1991 = vmatpush2.msra.mxu0 0.0
  %1992 = vmatprep.subr.mxu0 0.0
  %1993 = vmatpush2.msra.mxu0 0.0
  %1994 = vmatprep.subr.mxu0 0.0
  %1995 = vmatpush2.msra.mxu0 0.0
  %1996 = vmatprep.subr.mxu0 0.0
  %1997 = vmatpush2.msra.mxu0 0.0
  %1998 = vmatprep.subr.mxu0 0.0
  %1999 = vmatpush2.msra.mxu0 0.0
  %2000 = vmatprep.subr.mxu0 0.0
  %2001 = vmatpush2.msra.mxu0 0.0
  %2002 = vmatprep.subr.mxu0 0.0
  %2003 = vmatpush2.msra.mxu0 0.0
  %2004 = vmatprep.subr.mxu0 0.0
  %2005 = vmatpush2.msra.mxu0 0.0
  %2006 = vmatprep.subr.mxu0 0.0
  %2007 = vmatpush2.msra.mxu0 0.0
  %2008 = vmatprep.subr.mxu0 0.0
  %2009 = vmatpush2.msra.mxu0 0.0
  %2010 = vmatprep.mubr.f32.mxu0 0.0
  %2011 = vmatmul.mubr.f32.gmra.mxu0 %v1944
  %v2012 = vpop.f32.mrf.mxu0
  %v2013 = vadd.f32 0.0, %v2012
  %v2014 = vpop.f32.mrf.mxu0
  %2015 = vdwg.mxu0
  %v2016 = vadd.f32 %v1388, %v2013
  %v2017 = vxor.u32 %v2016, 2147483648
  %v2018 = vmul.f32 %v2017, 1.442695
  %v2019 = vpow.pop %v2018
  %v2020 = vadd.f32 %v2019, 1.0
  %v2021 = vrcp.pop %v2020
  %v2022 = vmul.f32 1.0, %v2021
  %v2023 = vmul.f32 %v2022, 2.0
  %v2024 = vsub.f32 %v2023, 1.0
  %v2025 = vmul.f32 %v2022, %v1926
  %2027 = vrot.lane.b32.xlu0 %v2024, 64
  %v2028 = vpop.permute.xlu0 %2027
  %v2030 = vmul.f32 %v2022, %v2028
  %2032 = vrot.lane.b32.xlu0 %v2030, 32
  %v2033 = vpop.permute.xlu0 %2032
  %v2035 = vadd.f32 %v2025, %v2033
  %v2036 = vmul.f32 %v2035, 2.0
  %v2037 = vxor.u32 %v2036, 2147483648
  %v2038 = vmul.f32 %v2037, 1.442695
  %v2039 = vpow.pop %v2038
  %v2040 = vadd.f32 %v2039, 1.0
  %v2041 = vrcp.pop %v2040
  %v2042 = vmul.f32 1.0, %v2041
  %v2043 = vmul.f32 %v2042, 2.0
  %v2044 = vsub.f32 %v2043, 1.0
  %2046 = vrot.lane.b32.xlu0 %v2044, 64
  %v2047 = vpop.permute.xlu0 %2046
  %v2049 = vmul.f32 %v2022, %v2047
  %2051 = vrot.lane.b32.xlu0 %v2049, 32
  %v2052 = vpop.permute.xlu0 %2051
  %v2053 = vsel %vm416, %v2052, 0
  %2055 = vmatprep.subr.mxu0 0.0
  %2056 = vmatpush1.msra.mxu0 0.0
  %2057 = vmatprep.subr.mxu0 0.0
  %2058 = vmatpush1.msra.mxu0 0.0
  %2059 = vmatprep.subr.mxu0 0.0
  %2060 = vmatpush1.msra.mxu0 0.0
  %2061 = vmatprep.subr.mxu0 0.0
  %2062 = vmatpush1.msra.mxu0 0.0
  %2063 = vmatprep.subr.mxu0 0.0
  %2064 = vmatpush1.msra.mxu0 0.0
  %2065 = vmatprep.subr.mxu0 0.0
  %2066 = vmatpush1.msra.mxu0 0.0
  %2067 = vmatprep.subr.mxu0 0.0
  %2068 = vmatpush1.msra.mxu0 0.0
  %2069 = vmatprep.subr.mxu0 0.0
  %2070 = vmatpush1.msra.mxu0 0.0
  %2071 = vmatprep.subr.mxu0 0.0
  %2072 = vmatpush1.msra.mxu0 0.0
  %2073 = vmatprep.subr.mxu0 0.0
  %2074 = vmatpush1.msra.mxu0 0.0
  %2075 = vmatprep.subr.mxu0 0.0
  %2076 = vmatpush1.msra.mxu0 0.0
  %2077 = vmatprep.subr.mxu0 0.0
  %2078 = vmatpush1.msra.mxu0 0.0
  %2079 = vmatprep.subr.mxu0 0.0
  %2080 = vmatpush1.msra.mxu0 %v274
  %2081 = vmatprep.subr.mxu0 0.0
  %2082 = vmatpush1.msra.mxu0 %v273
  %2083 = vmatprep.subr.mxu0 0.0
  %2084 = vmatpush1.msra.mxu0 %v272
  %2085 = vmatprep.subr.mxu0 0.0
  %2086 = vmatpush1.msra.mxu0 %v271
  %2087 = vmatprep.subr.mxu0 0.0
  %2088 = vmatpush2.msra.mxu0 0.0
  %2089 = vmatprep.subr.mxu0 0.0
  %2090 = vmatpush2.msra.mxu0 0.0
  %2091 = vmatprep.subr.mxu0 0.0
  %2092 = vmatpush2.msra.mxu0 0.0
  %2093 = vmatprep.subr.mxu0 0.0
  %2094 = vmatpush2.msra.mxu0 0.0
  %2095 = vmatprep.subr.mxu0 0.0
  %2096 = vmatpush2.msra.mxu0 0.0
  %2097 = vmatprep.subr.mxu0 0.0
  %2098 = vmatpush2.msra.mxu0 0.0
  %2099 = vmatprep.subr.mxu0 0.0
  %2100 = vmatpush2.msra.mxu0 0.0
  %2101 = vmatprep.subr.mxu0 0.0
  %2102 = vmatpush2.msra.mxu0 0.0
  %2103 = vmatprep.subr.mxu0 0.0
  %2104 = vmatpush2.msra.mxu0 0.0
  %2105 = vmatprep.subr.mxu0 0.0
  %2106 = vmatpush2.msra.mxu0 0.0
  %2107 = vmatprep.subr.mxu0 0.0
  %2108 = vmatpush2.msra.mxu0 0.0
  %2109 = vmatprep.subr.mxu0 0.0
  %2110 = vmatpush2.msra.mxu0 0.0
  %2111 = vmatprep.subr.mxu0 0.0
  %2112 = vmatpush2.msra.mxu0 0.0
  %2113 = vmatprep.subr.mxu0 0.0
  %2114 = vmatpush2.msra.mxu0 0.0
  %2115 = vmatprep.subr.mxu0 0.0
  %2116 = vmatpush2.msra.mxu0 0.0
  %2117 = vmatprep.subr.mxu0 0.0
  %2118 = vmatpush2.msra.mxu0 0.0
  %2119 = vmatprep.mubr.f32.mxu0 0.0
  %2120 = vmatmul.mubr.f32.gmra.mxu0 %v2053
  %v2121 = vpop.f32.mrf.mxu0
  %v2122 = vadd.f32 0.0, %v2121
  %v2123 = vpop.f32.mrf.mxu0
  %2124 = vdwg.mxu0
  %v2125 = vadd.f32 %v1393, %v2122
  %v2126 = vxor.u32 %v2125, 2147483648
  %v2127 = vmul.f32 %v2126, 1.442695
  %v2128 = vpow.pop %v2127
  %v2129 = vadd.f32 %v2128, 1.0
  %v2130 = vrcp.pop %v2129
  %v2131 = vmul.f32 1.0, %v2130
  %v2132 = vmul.f32 %v2131, 2.0
  %v2133 = vsub.f32 %v2132, 1.0
  %v2134 = vmul.f32 %v2131, %v2035
  %2136 = vrot.lane.b32.xlu0 %v2133, 64
  %v2137 = vpop.permute.xlu0 %2136
  %v2139 = vmul.f32 %v2131, %v2137
  %2141 = vrot.lane.b32.xlu0 %v2139, 32
  %v2142 = vpop.permute.xlu0 %2141
  %v2144 = vadd.f32 %v2134, %v2142
  %v2145 = vmul.f32 %v2144, 2.0
  %v2146 = vxor.u32 %v2145, 2147483648
  %v2147 = vmul.f32 %v2146, 1.442695
  %v2148 = vpow.pop %v2147
  %v2149 = vadd.f32 %v2148, 1.0
  %v2150 = vrcp.pop %v2149
  %v2151 = vmul.f32 1.0, %v2150
  %v2152 = vmul.f32 %v2151, 2.0
  %v2153 = vsub.f32 %v2152, 1.0
  %2155 = vrot.lane.b32.xlu0 %v2153, 64
  %v2156 = vpop.permute.xlu0 %2155
  %v2158 = vmul.f32 %v2131, %v2156
  %2160 = vrot.lane.b32.xlu0 %v2158, 32
  %v2161 = vpop.permute.xlu0 %2160
  %v2162 = vsel %vm416, %v2161, 0
  %2164 = vmatprep.subr.mxu0 0.0
  %2165 = vmatpush1.msra.mxu0 0.0
  %2166 = vmatprep.subr.mxu0 0.0
  %2167 = vmatpush1.msra.mxu0 0.0
  %2168 = vmatprep.subr.mxu0 0.0
  %2169 = vmatpush1.msra.mxu0 0.0
  %2170 = vmatprep.subr.mxu0 0.0
  %2171 = vmatpush1.msra.mxu0 0.0
  %2172 = vmatprep.subr.mxu0 0.0
  %2173 = vmatpush1.msra.mxu0 0.0
  %2174 = vmatprep.subr.mxu0 0.0
  %2175 = vmatpush1.msra.mxu0 0.0
  %2176 = vmatprep.subr.mxu0 0.0
  %2177 = vmatpush1.msra.mxu0 0.0
  %2178 = vmatprep.subr.mxu0 0.0
  %2179 = vmatpush1.msra.mxu0 0.0
  %2180 = vmatprep.subr.mxu0 0.0
  %2181 = vmatpush1.msra.mxu0 0.0
  %2182 = vmatprep.subr.mxu0 0.0
  %2183 = vmatpush1.msra.mxu0 0.0
  %2184 = vmatprep.subr.mxu0 0.0
  %2185 = vmatpush1.msra.mxu0 0.0
  %2186 = vmatprep.subr.mxu0 0.0
  %2187 = vmatpush1.msra.mxu0 0.0
  %2188 = vmatprep.subr.mxu0 0.0
  %2189 = vmatpush1.msra.mxu0 %v274
  %2190 = vmatprep.subr.mxu0 0.0
  %2191 = vmatpush1.msra.mxu0 %v273
  %2192 = vmatprep.subr.mxu0 0.0
  %2193 = vmatpush1.msra.mxu0 %v272
  %2194 = vmatprep.subr.mxu0 0.0
  %2195 = vmatpush1.msra.mxu0 %v271
  %2196 = vmatprep.subr.mxu0 0.0
  %2197 = vmatpush2.msra.mxu0 0.0
  %2198 = vmatprep.subr.mxu0 0.0
  %2199 = vmatpush2.msra.mxu0 0.0
  %2200 = vmatprep.subr.mxu0 0.0
  %2201 = vmatpush2.msra.mxu0 0.0
  %2202 = vmatprep.subr.mxu0 0.0
  %2203 = vmatpush2.msra.mxu0 0.0
  %2204 = vmatprep.subr.mxu0 0.0
  %2205 = vmatpush2.msra.mxu0 0.0
  %2206 = vmatprep.subr.mxu0 0.0
  %2207 = vmatpush2.msra.mxu0 0.0
  %2208 = vmatprep.subr.mxu0 0.0
  %2209 = vmatpush2.msra.mxu0 0.0
  %2210 = vmatprep.subr.mxu0 0.0
  %2211 = vmatpush2.msra.mxu0 0.0
  %2212 = vmatprep.subr.mxu0 0.0
  %2213 = vmatpush2.msra.mxu0 0.0
  %2214 = vmatprep.subr.mxu0 0.0
  %2215 = vmatpush2.msra.mxu0 0.0
  %2216 = vmatprep.subr.mxu0 0.0
  %2217 = vmatpush2.msra.mxu0 0.0
  %2218 = vmatprep.subr.mxu0 0.0
  %2219 = vmatpush2.msra.mxu0 0.0
  %2220 = vmatprep.subr.mxu0 0.0
  %2221 = vmatpush2.msra.mxu0 0.0
  %2222 = vmatprep.subr.mxu0 0.0
  %2223 = vmatpush2.msra.mxu0 0.0
  %2224 = vmatprep.subr.mxu0 0.0
  %2225 = vmatpush2.msra.mxu0 0.0
  %2226 = vmatprep.subr.mxu0 0.0
  %2227 = vmatpush2.msra.mxu0 0.0
  %2228 = vmatprep.mubr.f32.mxu0 0.0
  %2229 = vmatmul.mubr.f32.gmra.mxu0 %v2162
  %v2230 = vpop.f32.mrf.mxu0
  %v2231 = vadd.f32 0.0, %v2230
  %v2232 = vpop.f32.mrf.mxu0
  %2233 = vdwg.mxu0
  %v2234 = vadd.f32 %v1398, %v2231
  %v2235 = vxor.u32 %v2234, 2147483648
  %v2236 = vmul.f32 %v2235, 1.442695
  %v2237 = vpow.pop %v2236
  %v2238 = vadd.f32 %v2237, 1.0
  %v2239 = vrcp.pop %v2238
  %v2240 = vmul.f32 1.0, %v2239
  %v2241 = vmul.f32 %v2240, 2.0
  %v2242 = vsub.f32 %v2241, 1.0
  %v2243 = vmul.f32 %v2240, %v2144
  %2245 = vrot.lane.b32.xlu0 %v2242, 64
  %v2246 = vpop.permute.xlu0 %2245
  %v2248 = vmul.f32 %v2240, %v2246
  %2250 = vrot.lane.b32.xlu0 %v2248, 32
  %v2251 = vpop.permute.xlu0 %2250
  %v2253 = vadd.f32 %v2243, %v2251
  %v2254 = vmul.f32 %v2253, 2.0
  %v2255 = vxor.u32 %v2254, 2147483648
  %v2256 = vmul.f32 %v2255, 1.442695
  %v2257 = vpow.pop %v2256
  %v2258 = vadd.f32 %v2257, 1.0
  %v2259 = vrcp.pop %v2258
  %v2260 = vmul.f32 1.0, %v2259
  %v2261 = vmul.f32 %v2260, 2.0
  %v2262 = vsub.f32 %v2261, 1.0
  %2264 = vrot.lane.b32.xlu0 %v2262, 64
  %v2265 = vpop.permute.xlu0 %2264
  %v2267 = vmul.f32 %v2240, %v2265
  %v2268 = vlaneseq
  %v2269 = vshrl.u32 %v2268, 7
  %v2270 = vsub.s32 0, %v2269
  %v2271 = vrot.slane %v281, %v2270
  %2273 = vrot.lane.b32.xlu0 %v2267, 32
  %v2274 = vpop.permute.xlu0 %2273
  %v2275 = vsel %vm416, %v2274, 0
  %2277 = vmatprep.subr.mxu0 0.0
  %2278 = vmatpush1.msra.mxu0 0.0
  %2279 = vmatprep.subr.mxu0 0.0
  %2280 = vmatpush1.msra.mxu0 0.0
  %2281 = vmatprep.subr.mxu0 0.0
  %2282 = vmatpush1.msra.mxu0 0.0
  %2283 = vmatprep.subr.mxu0 0.0
  %2284 = vmatpush1.msra.mxu0 0.0
  %2285 = vmatprep.subr.mxu0 0.0
  %2286 = vmatpush1.msra.mxu0 0.0
  %2287 = vmatprep.subr.mxu0 0.0
  %2288 = vmatpush1.msra.mxu0 0.0
  %2289 = vmatprep.subr.mxu0 0.0
  %2290 = vmatpush1.msra.mxu0 0.0
  %2291 = vmatprep.subr.mxu0 0.0
  %2292 = vmatpush1.msra.mxu0 0.0
  %2293 = vmatprep.subr.mxu0 0.0
  %2294 = vmatpush1.msra.mxu0 0.0
  %2295 = vmatprep.subr.mxu0 0.0
  %2296 = vmatpush1.msra.mxu0 0.0
  %2297 = vmatprep.subr.mxu0 0.0
  %2298 = vmatpush1.msra.mxu0 0.0
  %2299 = vmatprep.subr.mxu0 0.0
  %2300 = vmatpush1.msra.mxu0 0.0
  %2301 = vmatprep.subr.mxu0 0.0
  %2302 = vmatpush1.msra.mxu0 %v280
  %2303 = vmatprep.subr.mxu0 0.0
  %2304 = vmatpush1.msra.mxu0 %v279
  %2305 = vmatprep.subr.mxu0 0.0
  %2306 = vmatpush1.msra.mxu0 %v278
  %2307 = vmatprep.subr.mxu0 0.0
  %2308 = vmatpush1.msra.mxu0 %v277
  %2309 = vmatprep.subr.mxu0 0.0
  %2310 = vmatpush2.msra.mxu0 0.0
  %2311 = vmatprep.subr.mxu0 0.0
  %2312 = vmatpush2.msra.mxu0 0.0
  %2313 = vmatprep.subr.mxu0 0.0
  %2314 = vmatpush2.msra.mxu0 0.0
  %2315 = vmatprep.subr.mxu0 0.0
  %2316 = vmatpush2.msra.mxu0 0.0
  %2317 = vmatprep.subr.mxu0 0.0
  %2318 = vmatpush2.msra.mxu0 0.0
  %2319 = vmatprep.subr.mxu0 0.0
  %2320 = vmatpush2.msra.mxu0 0.0
  %2321 = vmatprep.subr.mxu0 0.0
  %2322 = vmatpush2.msra.mxu0 0.0
  %2323 = vmatprep.subr.mxu0 0.0
  %2324 = vmatpush2.msra.mxu0 0.0
  %2325 = vmatprep.subr.mxu0 0.0
  %2326 = vmatpush2.msra.mxu0 0.0
  %2327 = vmatprep.subr.mxu0 0.0
  %2328 = vmatpush2.msra.mxu0 0.0
  %2329 = vmatprep.subr.mxu0 0.0
  %2330 = vmatpush2.msra.mxu0 0.0
  %2331 = vmatprep.subr.mxu0 0.0
  %2332 = vmatpush2.msra.mxu0 0.0
  %2333 = vmatprep.subr.mxu0 0.0
  %2334 = vmatpush2.msra.mxu0 0.0
  %2335 = vmatprep.subr.mxu0 0.0
  %2336 = vmatpush2.msra.mxu0 0.0
  %2337 = vmatprep.subr.mxu0 0.0
  %2338 = vmatpush2.msra.mxu0 0.0
  %2339 = vmatprep.subr.mxu0 0.0
  %2340 = vmatpush2.msra.mxu0 0.0
  %2341 = vmatprep.mubr.f32.mxu0 0.0
  %2342 = vmatmul.mubr.f32.gmra.mxu0 %v2275
  %v2343 = vpop.f32.mrf.mxu0
  %v2344 = vadd.f32 %v2271, %v2343
  %v2345 = vpop.f32.mrf.mxu0
  %2346 = vdwg.mxu0
  %v2347 = vxor.u32 %v2344, 2147483648
  %v2348 = vmul.f32 %v2347, 1.442695
  %v2349 = vpow.pop %v2348
  %v2350 = vadd.f32 %v2349, 1.0
  %v2351 = vrcp.pop %v2350
  %v2352 = vmul.f32 1.0, %v2351
  %vm2353 = vcmask 7168
  %2354 = vst.msk [vmem:[%s4] sm:$0xff] %vm2353, %v2352
  // Predicated region
  $region18: #{cnn_lstm_sigmoid_forward.1} parent=0 // pred_check
    _
  $region19: #{cnn_lstm_sigmoid_forward.1} parent=0 // pred_check_branch
    %2356 = sbr.rel (0) target = $region21
  $region20: #{cnn_lstm_sigmoid_forward.1} parent=0 // pred_region
    _
  $region21: #{cnn_lstm_sigmoid_forward.1} parent=0 // pred_fallthru
    _
  // Predicated region
  $region22: #{cnn_lstm_sigmoid_forward.1} parent=0 // pred_check
    _
  $region23: #{cnn_lstm_sigmoid_forward.1} parent=0 // pred_check_branch
    %2358 = sbr.rel (0) target = $region25
  $region24: #{cnn_lstm_sigmoid_forward.1} parent=0 // pred_region
    _
  $region25: #{cnn_lstm_sigmoid_forward.1} parent=0 // pred_fallthru
    _

</llo_original>
